<compile_context>
chip_gen: v7x
topology: tpu7x:2x2x1
jax: 0.10.0
libtpu: 0.0.40
codegen_flags: <defaults>
</compile_context>

<pallas_src>
import jax
import jax.numpy as jnp
from jax import lax
from jax.experimental import pallas as pl
from jax.experimental.pallas import tpu as pltpu


def _lstm_attn_kernel(x_ref,                       # (S*B, D)  time-major, batch-flattened input
                      wih0_ref, whh0_ref, b0_ref,  # layer 0: (D,4H), (H,4H), (1,4H)  [gate-permuted]
                      w1_ref, b1_ref,              # layer 1 fused [wih1;whh1]: (2H,4H), (1,4H)
                      aw1_ref, ab1_ref,            # attention lin1: (H,H/2), (1,H/2)
                      aw2_ref, ab2_ref,            # attention lin2 as row vector: (1,H/2), (1,1)
                      fw_ref, fb_ref,              # fc: (H,C), (1,C)
                      temp_ref,                    # (1,) in SMEM
                      logits_ref,                  # out: (B, C)
                      attw_ref,                    # out: (B, S) lane-dense attention weights
                      xproj_ref):                  # scratch: (S*B, 4H) precomputed x@Wih0 + b0
    B, S = attw_ref.shape
    H = whh0_ref.shape[0]
    G = 4 * H
    Hh = aw1_ref.shape[1]
    f32 = jnp.float32

    # ---- hoisted weight / bias loads & broadcasts (read once, reused across the recurrence) ----
    whh0 = whh0_ref[...]                                    # (H, 4H)
    w1 = w1_ref[...]                                        # (2H, 4H)
    aw1 = aw1_ref[...]                                      # (H, H/2)
    b1b = jnp.broadcast_to(b1_ref[...], (B, G))
    ab1b = jnp.broadcast_to(ab1_ref[...], (B, Hh))
    aw2b = jnp.broadcast_to(aw2_ref[...], (B, Hh))          # row vector for VPU mul + lane reduce
    ab2b = jnp.broadcast_to(ab2_ref[...], (B, 1))
    lane_iota = lax.broadcasted_iota(jnp.int32, (B, S), 1)  # hoisted; used for score scatter

    # ---- layer-0 input projection for ALL timesteps in one batched matmul ----
    xproj_ref[...] = (jnp.dot(x_ref[...], wih0_ref[...], preferred_element_type=f32)
                      + b0_ref[...])

    def gates(g, c_prev):
        # gate columns were permuted in the wrapper to [i, f, o | g]:
        # one sigmoid over (B,3H) + one tanh over (B,H) — half the EUP work of full-4H both.
        sg = jax.nn.sigmoid(g[:, :3 * H])
        gg = jnp.tanh(g[:, 3 * H:])
        i = sg[:, 0:H]
        f = sg[:, H:2 * H]
        o = sg[:, 2 * H:3 * H]
        c_new = f * c_prev + i * gg
        h_new = o * jnp.tanh(c_new)
        return h_new, c_new

    def body(t, carry):
        h0, c0, h1, c1, m, l, acc, scores = carry
        row = pl.multiple_of(t * B, B)                       # B padded to multiple of 8 in wrapper
        # layer 0: input projection precomputed; only the recurrent matmul on the critical path
        g0 = xproj_ref[pl.ds(row, B), :] + jnp.dot(h0, whh0, preferred_element_type=f32)
        h0n, c0n = gates(g0, c0)
        # layer 1: single fused matmul on concat([h0_new, h1_prev])
        g1 = jnp.dot(jnp.concatenate([h0n, h1], axis=1), w1,
                     preferred_element_type=f32) + b1b
        h1n, c1n = gates(g1, c1)
        # attention score: small MLP; the (..,1) projection is a VPU multiply + lane reduce
        hid = jnp.tanh(jnp.dot(h1n, aw1, preferred_element_type=f32) + ab1b)
        s = jnp.sum(hid * aw2b, axis=-1, keepdims=True) + ab2b          # (B, 1)
        scores = jnp.where(lane_iota == t, s, scores)                   # lane-dense score stash (register carry)
        # streaming (flash-style) softmax accumulation of the context vector
        m_new = jnp.maximum(m, s)
        alpha = jnp.exp(m - m_new)
        p = jnp.exp(s - m_new)
        l_new = alpha * l + p
        acc_new = alpha * acc + p * h1n
        return h0n, c0n, h1n, c1n, m_new, l_new, acc_new, scores

    zero_bh = jnp.zeros((B, H), f32)
    init = (zero_bh, zero_bh, zero_bh, zero_bh,              # h0, c0, h1, c1 (PyTorch zero init)
            jnp.full((B, 1), -1e30, f32),                    # running max
            jnp.zeros((B, 1), f32),                          # running denominator
            jnp.zeros((B, H), f32),                          # running weighted context
            jnp.zeros((B, S), f32))                          # raw scores, S on the lane axis
    carry = lax.fori_loop(0, S, body, init, unroll=min(S, 8))
    _, _, _, _, _m, l, acc, scores = carry

    # normalized attention weights: one lane-axis reduce + one dense (B, S) store
    mx = jnp.max(scores, axis=-1, keepdims=True)
    e = jnp.exp(scores - mx)
    attw_ref[...] = e / jnp.sum(e, axis=-1, keepdims=True)

    # context from the streaming accumulators; fc + temperature scaling (post-loop, off critical path)
    context = acc / l                                        # (B, H)
    logits = jnp.dot(context, fw_ref[...], preferred_element_type=f32) + fb_ref[...]
    inv_t = 1.0 / jnp.maximum(temp_ref[0], 1e-6)
    logits_ref[...] = logits * inv_t


def _permute_gate_cols(w, H):
    """Reorder the 4H gate columns from PyTorch's [i, f, g, o] to [i, f, o, g]."""
    return jnp.concatenate([w[..., 0:2 * H], w[..., 3 * H:4 * H], w[..., 2 * H:3 * H]], axis=-1)


def _padded_bytes_2d(rows, cols, itemsize=4):
    """(8,128)-padded VMEM footprint of a 2-D f32 buffer."""
    return (-(-rows // 8) * 8) * (-(-cols // 128) * 128) * itemsize


def _vmem_capacity_bytes():
    try:
        info = pltpu.get_tpu_info()
        cap = getattr(info, "vmem_capacity_bytes", None)
        if cap:
            return int(cap)
    except Exception:
        pass
    return 64 * 2 ** 20      # conservative fallback (v7x has 64 MiB per TC)


_VMEM_CAP = _vmem_capacity_bytes()


@jax.jit
def multilayer_lstm_attention(x, params):
    """x: (B, S, D) float32, batch-first (like PyTorch). Returns (logits (B,C), attn_w (B,S,1))."""
    B, S, D = x.shape
    H = params["whh0"].shape[0]
    C = params["fw"].shape[1]
    Bp = max(8, -(-B // 8) * 8)                              # pad batch to full sublanes

    x_p = jnp.pad(x, ((0, Bp - B), (0, 0), (0, 0)))
    x_tm = jnp.transpose(x_p, (1, 0, 2)).reshape(S * Bp, D)  # time-major, row-flattened (no in-kernel reshape)

    # gate-column permutation (sigmoid gates contiguous, tanh gate last) + fused layer-1 weight
    wih0 = _permute_gate_cols(params["wih0"], H)
    whh0 = _permute_gate_cols(params["whh0"], H)
    b0 = _permute_gate_cols(params["b0"], H)
    w1 = jnp.concatenate([_permute_gate_cols(params["wih1"], H),
                          _permute_gate_cols(params["whh1"], H)], axis=0)   # (2H, 4H)
    b1 = _permute_gate_cols(params["b1"], H)
    aw2_row = params["aw2"].reshape(1, H // 2)               # row vector for the VPU mul + reduce

    vmem = pl.BlockSpec(memory_space=pltpu.MemorySpace.VMEM)
    smem = pl.BlockSpec(memory_space=pltpu.MemorySpace.SMEM)

    # (8,128)-padded VMEM budget for every resident buffer, capped below physical VMEM
    shapes = [(S * Bp, D), (D, 4 * H), (H, 4 * H), (1, 4 * H), (2 * H, 4 * H), (1, 4 * H),
              (H, H // 2), (1, H // 2), (1, H // 2), (1, 1), (H, C), (1, C),
              (Bp, C), (Bp, S), (S * Bp, 4 * H)]
    need = sum(_padded_bytes_2d(r, c) for r, c in shapes)
    vmem_limit = int(min(_VMEM_CAP * 3 // 4, max(16 * 2 ** 20, 4 * need)))

    logits_p, attw_p = pl.pallas_call(
        _lstm_attn_kernel,
        out_shape=(
            jax.ShapeDtypeStruct((Bp, C), jnp.float32),
            jax.ShapeDtypeStruct((Bp, S), jnp.float32),      # lane-dense attention weights
        ),
        in_specs=[vmem] * 12 + [smem],
        out_specs=(vmem, vmem),
        scratch_shapes=[
            pltpu.VMEM((S * Bp, 4 * H), jnp.float32),        # precomputed layer-0 input projection
        ],
        compiler_params=pltpu.CompilerParams(vmem_limit_bytes=vmem_limit),
    )(x_tm, wih0, whh0, b0, w1, b1,
      params["aw1"], params["ab1"], aw2_row, params["ab2"],
      params["fw"], params["fb"], params["temp"])

    logits = logits_p[:B]                                    # drop batch padding
    attw = attw_p[:B, :, None]                               # back to (B, S, 1)
    return logits, attw


def make_params(key, input_dim, hidden_dim, num_classes):
    """Deterministic synthetic parameters, PyTorch shapes pre-transposed for x @ W (original gate order)."""
    ks = jax.random.split(key, 12)
    H, D, C = hidden_dim, input_dim, num_classes
    s = 0.1

    def rnd(k, shape):
        return jax.random.normal(k, shape, dtype=jnp.float32) * s

    # LSTM layer 0: weight_ih [4H, D], weight_hh [4H, H], biases [4H] (ih + hh merged)
    wih0 = rnd(ks[0], (4 * H, D)).T
    whh0 = rnd(ks[1], (4 * H, H)).T
    b0 = (rnd(ks[2], (4 * H,)) + rnd(ks[3], (4 * H,))).reshape(1, 4 * H)
    # LSTM layer 1: weight_ih [4H, H]
    wih1 = rnd(ks[4], (4 * H, H)).T
    whh1 = rnd(ks[5], (4 * H, H)).T
    b1 = (rnd(ks[6], (4 * H,)) + rnd(ks[7], (4 * H,))).reshape(1, 4 * H)
    # attention: Linear(H, H//2), Linear(H//2, 1)
    aw1 = rnd(ks[8], (H // 2, H)).T
    ab1 = rnd(ks[9], (H // 2,)).reshape(1, H // 2)
    aw2 = rnd(ks[10], (1, H // 2)).T
    ab2 = jnp.zeros((1, 1), jnp.float32)
    # fc: Linear(H, C)
    fw = rnd(ks[11], (C, H)).T
    fb = jnp.zeros((1, C), jnp.float32)
    temp = jnp.ones((1,), jnp.float32)                       # nn.Parameter(torch.ones(1))
    return dict(wih0=wih0, whh0=whh0, b0=b0, wih1=wih1, whh1=whh1, b1=b1,
                aw1=aw1, ab1=ab1, aw2=aw2, ab2=ab2, fw=fw, fb=fb, temp=temp)


def reference_forward(x, params):
    """Pure-JAX reference matching the PyTorch forward semantics."""
    B, S, D = x.shape
    H = params["whh0"].shape[0]

    def lstm_layer(inp, wih, whh, b):
        def step(carry, x_t):
            h, c = carry
            g = x_t @ wih + h @ whh + b
            i = jax.nn.sigmoid(g[:, :H])
            f = jax.nn.sigmoid(g[:, H:2 * H])
            gg = jnp.tanh(g[:, 2 * H:3 * H])
            o = jax.nn.sigmoid(g[:, 3 * H:4 * H])
            c = f * c + i * gg
            h = o * jnp.tanh(c)
            return (h, c), h
        init = (jnp.zeros((B, H), jnp.float32), jnp.zeros((B, H), jnp.float32))
        _, outs = lax.scan(step, init, jnp.swapaxes(inp, 0, 1))
        return jnp.swapaxes(outs, 0, 1)

    out = lstm_layer(x, params["wih0"], params["whh0"], params["b0"])
    out = lstm_layer(out, params["wih1"], params["whh1"], params["b1"])
    scores = jnp.tanh(out @ params["aw1"] + params["ab1"]) @ params["aw2"] + params["ab2"]
    w = jax.nn.softmax(scores, axis=1)
    context = jnp.sum(out * w, axis=1)
    logits = context @ params["fw"] + params["fb"]
    logits = logits / jnp.maximum(params["temp"], 1e-6)
    return logits, w


if __name__ == "__main__":
    # small shapes consistent with the module's (batch, seq_len, input_dim) input
    B, S, D, H, C = 2, 8, 16, 32, 2

    key = jax.random.PRNGKey(0)
    kx, kp = jax.random.split(key)
    x = jax.random.normal(kx, (B, S, D), dtype=jnp.float32)
    params = make_params(kp, input_dim=D, hidden_dim=H, num_classes=C)

    logits, attw = multilayer_lstm_attention(x, params)
    logits, attw = jax.block_until_ready((logits, attw))

    ref_logits, ref_attw = reference_forward(x, params)
    assert logits.shape == (B, C) and attw.shape == (B, S, 1)
    assert jnp.allclose(logits, ref_logits, atol=1e-4, rtol=1e-4)
    assert jnp.allclose(attw, ref_attw, atol=1e-5, rtol=1e-4)

    print("KERNEL_OK")
</pallas_src>

<mosaic_0001>
module attributes {stable_mosaic.version = 11 : i64} {
  func.func @_lstm_attn_kernel(%arg0: memref<64x16xf32, #tpu.memory_space<vmem>>, %arg1: memref<16x128xf32, #tpu.memory_space<vmem>>, %arg2: memref<32x128xf32, #tpu.memory_space<vmem>>, %arg3: memref<1x128xf32, #tpu.memory_space<vmem>>, %arg4: memref<64x128xf32, #tpu.memory_space<vmem>>, %arg5: memref<1x128xf32, #tpu.memory_space<vmem>>, %arg6: memref<32x16xf32, #tpu.memory_space<vmem>>, %arg7: memref<1x16xf32, #tpu.memory_space<vmem>>, %arg8: memref<1x16xf32, #tpu.memory_space<vmem>>, %arg9: memref<1x1xf32, #tpu.memory_space<vmem>>, %arg10: memref<32x2xf32, #tpu.memory_space<vmem>>, %arg11: memref<1x2xf32, #tpu.memory_space<vmem>>, %arg12: memref<1xf32, #tpu.memory_space<smem>>, %arg13: memref<8x2xf32, #tpu.memory_space<vmem>>, %arg14: memref<8x8xf32, #tpu.memory_space<vmem>>, %arg15: memref<64x128xf32, #tpu.memory_space<vmem>>) attributes {dimension_semantics = [], scalar_prefetch = 0 : i64, scratch_operands = 1 : i64, tpu.core_type = #tpu.core_type<tc>} {
    %c0 = arith.constant 0 : index
    %c0_0 = arith.constant 0 : index
    %0 = vector.load %arg2[%c0, %c0_0] : memref<32x128xf32, #tpu.memory_space<vmem>>, vector<32x128xf32>
    %c0_1 = arith.constant 0 : index
    %c0_2 = arith.constant 0 : index
    %1 = vector.load %arg4[%c0_1, %c0_2] : memref<64x128xf32, #tpu.memory_space<vmem>>, vector<64x128xf32>
    %c0_3 = arith.constant 0 : index
    %c0_4 = arith.constant 0 : index
    %2 = vector.load %arg6[%c0_3, %c0_4] : memref<32x16xf32, #tpu.memory_space<vmem>>, vector<32x16xf32>
    %c0_5 = arith.constant 0 : index
    %c0_6 = arith.constant 0 : index
    %3 = vector.load %arg5[%c0_5, %c0_6] : memref<1x128xf32, #tpu.memory_space<vmem>>, vector<1x128xf32>
    %4 = vector.shape_cast %3 : vector<1x128xf32> to vector<1x128xf32>
    %5 = vector.broadcast %4 : vector<1x128xf32> to vector<8x128xf32>
    %c0_7 = arith.constant 0 : index
    %c0_8 = arith.constant 0 : index
    %6 = vector.load %arg7[%c0_7, %c0_8] : memref<1x16xf32, #tpu.memory_space<vmem>>, vector<1x16xf32>
    %7 = vector.shape_cast %6 : vector<1x16xf32> to vector<1x16xf32>
    %8 = vector.broadcast %7 : vector<1x16xf32> to vector<8x16xf32>
    %c0_9 = arith.constant 0 : index
    %c0_10 = arith.constant 0 : index
    %9 = vector.load %arg8[%c0_9, %c0_10] : memref<1x16xf32, #tpu.memory_space<vmem>>, vector<1x16xf32>
    %10 = vector.shape_cast %9 : vector<1x16xf32> to vector<1x16xf32>
    %11 = vector.broadcast %10 : vector<1x16xf32> to vector<8x16xf32>
    %c0_11 = arith.constant 0 : index
    %c0_12 = arith.constant 0 : index
    %12 = vector.load %arg9[%c0_11, %c0_12] : memref<1x1xf32, #tpu.memory_space<vmem>>, vector<1x1xf32>
    %13 = vector.shape_cast %12 : vector<1x1xf32> to vector<1x1xf32>
    %14 = vector.broadcast %13 : vector<1x1xf32> to vector<8x1xf32>
    %15 = tpu.iota {dimensions = array<i32: 1>} : vector<8x8xi32>
    %c0_13 = arith.constant 0 : index
    %c0_14 = arith.constant 0 : index
    %16 = vector.load %arg0[%c0_13, %c0_14] : memref<64x16xf32, #tpu.memory_space<vmem>>, vector<64x16xf32>
    %c0_15 = arith.constant 0 : index
    %c0_16 = arith.constant 0 : index
    %17 = vector.load %arg1[%c0_15, %c0_16] : memref<16x128xf32, #tpu.memory_space<vmem>>, vector<16x128xf32>
    %cst = arith.constant dense<0.000000e+00> : vector<64x128xf32>
    %18 = tpu.matmul %16, %17, %cst {dimension_numbers = #tpu.dot_dimension_numbers<[1], [0], [0], [1], [0, 0, 1, 1], [], []>} : vector<64x16xf32>, vector<16x128xf32>, vector<64x128xf32> -> vector<64x128xf32>
    %c0_17 = arith.constant 0 : index
    %c0_18 = arith.constant 0 : index
    %19 = vector.load %arg3[%c0_17, %c0_18] : memref<1x128xf32, #tpu.memory_space<vmem>>, vector<1x128xf32>
    %20 = vector.broadcast %19 : vector<1x128xf32> to vector<64x128xf32>
    %21 = arith.addf %18, %20 : vector<64x128xf32>
    %c0_19 = arith.constant 0 : index
    %c0_20 = arith.constant 0 : index
    %22 = vector.load %arg15[%c0_19, %c0_20] : memref<64x128xf32, #tpu.memory_space<vmem>>, vector<64x128xf32>
    tpu.vector_store %arg15[%c0_19, %c0_20], %21 {strides = array<i32>} : memref<64x128xf32, #tpu.memory_space<vmem>>, vector<64x128xf32>,
    %cst_21 = arith.constant 0.000000e+00 : f32
    %23 = vector.broadcast %cst_21 : f32 to vector<8x32xf32>
    %cst_22 = arith.constant -1.000000e+30 : f32
    %24 = vector.broadcast %cst_22 : f32 to vector<8x1xf32>
    %cst_23 = arith.constant 0.000000e+00 : f32
    %25 = vector.broadcast %cst_23 : f32 to vector<8x1xf32>
    %cst_24 = arith.constant 0.000000e+00 : f32
    %26 = vector.broadcast %cst_24 : f32 to vector<8x32xf32>
    %cst_25 = arith.constant 0.000000e+00 : f32
    %27 = vector.broadcast %cst_25 : f32 to vector<8x8xf32>
    %c0_i32 = arith.constant 0 : i32
    %c8_i32 = arith.constant 8 : i32
    %28 = arith.muli %c0_i32, %c8_i32 : i32
    %29 = tpu.assume_multiple %28, 8 : i32
    %30 = arith.index_cast %29 : i32 to index
    %c0_26 = arith.constant 0 : index
    %31 = vector.load %arg15[%30, %c0_26] : memref<64x128xf32, #tpu.memory_space<vmem>>, vector<8x128xf32>
    %cst_27 = arith.constant dense<0.000000e+00> : vector<8x128xf32>
    %32 = tpu.matmul %23, %0, %cst_27 {dimension_numbers = #tpu.dot_dimension_numbers<[1], [0], [0], [1], [0, 0, 1, 1], [], []>} : vector<8x32xf32>, vector<32x128xf32>, vector<8x128xf32> -> vector<8x128xf32>
    %33 = arith.addf %31, %32 : vector<8x128xf32>
    %34 = vector.extract_strided_slice %33 {offsets = [0, 0], sizes = [8, 96], strides = [1, 1]} : vector<8x128xf32> to vector<8x96xf32>
    %35 = arith.negf %34 : vector<8x96xf32>
    %36 = math.exp %35 : vector<8x96xf32>
    %cst_28 = arith.constant 1.000000e+00 : f32
    %37 = vector.broadcast %cst_28 : f32 to vector<8x96xf32>
    %38 = arith.addf %37, %36 : vector<8x96xf32>
    %39 = arith.divf %37, %38 : vector<8x96xf32>
    %40 = vector.extract_strided_slice %33 {offsets = [0, 96], sizes = [8, 32], strides = [1, 1]} : vector<8x128xf32> to vector<8x32xf32>
    %41 = math.tanh %40 : vector<8x32xf32>
    %42 = vector.extract_strided_slice %39 {offsets = [0, 0], sizes = [8, 32], strides = [1, 1]} : vector<8x96xf32> to vector<8x32xf32>
    %43 = vector.extract_strided_slice %39 {offsets = [0, 32], sizes = [8, 32], strides = [1, 1]} : vector<8x96xf32> to vector<8x32xf32>
    %44 = vector.extract_strided_slice %39 {offsets = [0, 64], sizes = [8, 32], strides = [1, 1]} : vector<8x96xf32> to vector<8x32xf32>
    %45 = arith.mulf %43, %23 : vector<8x32xf32>
    %46 = arith.mulf %42, %41 : vector<8x32xf32>
    %47 = arith.addf %45, %46 : vector<8x32xf32>
    %48 = math.tanh %47 : vector<8x32xf32>
    %49 = arith.mulf %44, %48 : vector<8x32xf32>
    %50 = tpu.concatenate %49, %23 in 1 : vector<8x32xf32>, vector<8x32xf32> -> vector<8x64xf32>
    %cst_29 = arith.constant dense<0.000000e+00> : vector<8x128xf32>
    %51 = tpu.matmul %50, %1, %cst_29 {dimension_numbers = #tpu.dot_dimension_numbers<[1], [0], [0], [1], [0, 0, 1, 1], [], []>} : vector<8x64xf32>, vector<64x128xf32>, vector<8x128xf32> -> vector<8x128xf32>
    %52 = arith.addf %51, %5 : vector<8x128xf32>
    %53 = vector.extract_strided_slice %52 {offsets = [0, 0], sizes = [8, 96], strides = [1, 1]} : vector<8x128xf32> to vector<8x96xf32>
    %54 = arith.negf %53 : vector<8x96xf32>
    %55 = math.exp %54 : vector<8x96xf32>
    %cst_30 = arith.constant 1.000000e+00 : f32
    %56 = vector.broadcast %cst_30 : f32 to vector<8x96xf32>
    %57 = arith.addf %56, %55 : vector<8x96xf32>
    %58 = arith.divf %56, %57 : vector<8x96xf32>
    %59 = vector.extract_strided_slice %52 {offsets = [0, 96], sizes = [8, 32], strides = [1, 1]} : vector<8x128xf32> to vector<8x32xf32>
    %60 = math.tanh %59 : vector<8x32xf32>
    %61 = vector.extract_strided_slice %58 {offsets = [0, 0], sizes = [8, 32], strides = [1, 1]} : vector<8x96xf32> to vector<8x32xf32>
    %62 = vector.extract_strided_slice %58 {offsets = [0, 32], sizes = [8, 32], strides = [1, 1]} : vector<8x96xf32> to vector<8x32xf32>
    %63 = vector.extract_strided_slice %58 {offsets = [0, 64], sizes = [8, 32], strides = [1, 1]} : vector<8x96xf32> to vector<8x32xf32>
    %64 = arith.mulf %62, %23 : vector<8x32xf32>
    %65 = arith.mulf %61, %60 : vector<8x32xf32>
    %66 = arith.addf %64, %65 : vector<8x32xf32>
    %67 = math.tanh %66 : vector<8x32xf32>
    %68 = arith.mulf %63, %67 : vector<8x32xf32>
    %cst_31 = arith.constant dense<0.000000e+00> : vector<8x16xf32>
    %69 = tpu.matmul %68, %2, %cst_31 {dimension_numbers = #tpu.dot_dimension_numbers<[1], [0], [0], [1], [0, 0, 1, 1], [], []>} : vector<8x32xf32>, vector<32x16xf32>, vector<8x16xf32> -> vector<8x16xf32>
    %70 = arith.addf %69, %8 : vector<8x16xf32>
    %71 = math.tanh %70 : vector<8x16xf32>
    %72 = arith.mulf %71, %11 : vector<8x16xf32>
    %cst_32 = arith.constant dense<0.000000e+00> : vector<8xf32>
    %73 = vector.multi_reduction <add>, %72, %cst_32 [1] : vector<8x16xf32> to vector<8xf32>
    %74 = vector.shape_cast %73 : vector<8xf32> to vector<8x1xf32>
    %75 = arith.addf %74, %14 : vector<8x1xf32>
    %76 = vector.broadcast %c0_i32 : i32 to vector<8x8xi32>
    %77 = arith.cmpi eq, %15, %76 : vector<8x8xi32>
    %78 = vector.shape_cast %75 : vector<8x1xf32> to vector<8x1xf32>
    %79 = vector.broadcast %78 : vector<8x1xf32> to vector<8x8xf32>
    %80 = arith.select %77, %79, %27 : vector<8x8xi1>, vector<8x8xf32>
    %81 = arith.maximumf %24, %75 : vector<8x1xf32>
    %82 = arith.subf %24, %81 : vector<8x1xf32>
    %83 = math.exp %82 : vector<8x1xf32>
    %84 = arith.subf %75, %81 : vector<8x1xf32>
    %85 = math.exp %84 : vector<8x1xf32>
    %86 = arith.mulf %83, %25 : vector<8x1xf32>
    %87 = arith.addf %86, %85 : vector<8x1xf32>
    %88 = vector.broadcast %83 : vector<8x1xf32> to vector<8x32xf32>
    %89 = arith.mulf %88, %26 : vector<8x32xf32>
    %90 = vector.broadcast %85 : vector<8x1xf32> to vector<8x32xf32>
    %91 = arith.mulf %90, %68 : vector<8x32xf32>
    %92 = arith.addf %89, %91 : vector<8x32xf32>
    %c1_i32 = arith.constant 1 : i32
    %c8_i32_33 = arith.constant 8 : i32
    %93 = arith.muli %c1_i32, %c8_i32_33 : i32
    %94 = tpu.assume_multiple %93, 8 : i32
    %95 = arith.index_cast %94 : i32 to index
    %c0_34 = arith.constant 0 : index
    %96 = vector.load %arg15[%95, %c0_34] : memref<64x128xf32, #tpu.memory_space<vmem>>, vector<8x128xf32>
    %cst_35 = arith.constant dense<0.000000e+00> : vector<8x128xf32>
    %97 = tpu.matmul %49, %0, %cst_35 {dimension_numbers = #tpu.dot_dimension_numbers<[1], [0], [0], [1], [0, 0, 1, 1], [], []>} : vector<8x32xf32>, vector<32x128xf32>, vector<8x128xf32> -> vector<8x128xf32>
    %98 = arith.addf %96, %97 : vector<8x128xf32>
    %99 = vector.extract_strided_slice %98 {offsets = [0, 0], sizes = [8, 96], strides = [1, 1]} : vector<8x128xf32> to vector<8x96xf32>
    %100 = arith.negf %99 : vector<8x96xf32>
    %101 = math.exp %100 : vector<8x96xf32>
    %cst_36 = arith.constant 1.000000e+00 : f32
    %102 = vector.broadcast %cst_36 : f32 to vector<8x96xf32>
    %103 = arith.addf %102, %101 : vector<8x96xf32>
    %104 = arith.divf %102, %103 : vector<8x96xf32>
    %105 = vector.extract_strided_slice %98 {offsets = [0, 96], sizes = [8, 32], strides = [1, 1]} : vector<8x128xf32> to vector<8x32xf32>
    %106 = math.tanh %105 : vector<8x32xf32>
    %107 = vector.extract_strided_slice %104 {offsets = [0, 0], sizes = [8, 32], strides = [1, 1]} : vector<8x96xf32> to vector<8x32xf32>
    %108 = vector.extract_strided_slice %104 {offsets = [0, 32], sizes = [8, 32], strides = [1, 1]} : vector<8x96xf32> to vector<8x32xf32>
    %109 = vector.extract_strided_slice %104 {offsets = [0, 64], sizes = [8, 32], strides = [1, 1]} : vector<8x96xf32> to vector<8x32xf32>
    %110 = arith.mulf %108, %47 : vector<8x32xf32>
    %111 = arith.mulf %107, %106 : vector<8x32xf32>
    %112 = arith.addf %110, %111 : vector<8x32xf32>
    %113 = math.tanh %112 : vector<8x32xf32>
    %114 = arith.mulf %109, %113 : vector<8x32xf32>
    %115 = tpu.concatenate %114, %68 in 1 : vector<8x32xf32>, vector<8x32xf32> -> vector<8x64xf32>
    %cst_37 = arith.constant dense<0.000000e+00> : vector<8x128xf32>
    %116 = tpu.matmul %115, %1, %cst_37 {dimension_numbers = #tpu.dot_dimension_numbers<[1], [0], [0], [1], [0, 0, 1, 1], [], []>} : vector<8x64xf32>, vector<64x128xf32>, vector<8x128xf32> -> vector<8x128xf32>
    %117 = arith.addf %116, %5 : vector<8x128xf32>
    %118 = vector.extract_strided_slice %117 {offsets = [0, 0], sizes = [8, 96], strides = [1, 1]} : vector<8x128xf32> to vector<8x96xf32>
    %119 = arith.negf %118 : vector<8x96xf32>
    %120 = math.exp %119 : vector<8x96xf32>
    %cst_38 = arith.constant 1.000000e+00 : f32
    %121 = vector.broadcast %cst_38 : f32 to vector<8x96xf32>
    %122 = arith.addf %121, %120 : vector<8x96xf32>
    %123 = arith.divf %121, %122 : vector<8x96xf32>
    %124 = vector.extract_strided_slice %117 {offsets = [0, 96], sizes = [8, 32], strides = [1, 1]} : vector<8x128xf32> to vector<8x32xf32>
    %125 = math.tanh %124 : vector<8x32xf32>
    %126 = vector.extract_strided_slice %123 {offsets = [0, 0], sizes = [8, 32], strides = [1, 1]} : vector<8x96xf32> to vector<8x32xf32>
    %127 = vector.extract_strided_slice %123 {offsets = [0, 32], sizes = [8, 32], strides = [1, 1]} : vector<8x96xf32> to vector<8x32xf32>
    %128 = vector.extract_strided_slice %123 {offsets = [0, 64], sizes = [8, 32], strides = [1, 1]} : vector<8x96xf32> to vector<8x32xf32>
    %129 = arith.mulf %127, %66 : vector<8x32xf32>
    %130 = arith.mulf %126, %125 : vector<8x32xf32>
    %131 = arith.addf %129, %130 : vector<8x32xf32>
    %132 = math.tanh %131 : vector<8x32xf32>
    %133 = arith.mulf %128, %132 : vector<8x32xf32>
    %cst_39 = arith.constant dense<0.000000e+00> : vector<8x16xf32>
    %134 = tpu.matmul %133, %2, %cst_39 {dimension_numbers = #tpu.dot_dimension_numbers<[1], [0], [0], [1], [0, 0, 1, 1], [], []>} : vector<8x32xf32>, vector<32x16xf32>, vector<8x16xf32> -> vector<8x16xf32>
    %135 = arith.addf %134, %8 : vector<8x16xf32>
    %136 = math.tanh %135 : vector<8x16xf32>
    %137 = arith.mulf %136, %11 : vector<8x16xf32>
    %cst_40 = arith.constant dense<0.000000e+00> : vector<8xf32>
    %138 = vector.multi_reduction <add>, %137, %cst_40 [1] : vector<8x16xf32> to vector<8xf32>
    %139 = vector.shape_cast %138 : vector<8xf32> to vector<8x1xf32>
    %140 = arith.addf %139, %14 : vector<8x1xf32>
    %141 = vector.broadcast %c1_i32 : i32 to vector<8x8xi32>
    %142 = arith.cmpi eq, %15, %141 : vector<8x8xi32>
    %143 = vector.shape_cast %140 : vector<8x1xf32> to vector<8x1xf32>
    %144 = vector.broadcast %143 : vector<8x1xf32> to vector<8x8xf32>
    %145 = arith.select %142, %144, %80 : vector<8x8xi1>, vector<8x8xf32>
    %146 = arith.maximumf %81, %140 : vector<8x1xf32>
    %147 = arith.subf %81, %146 : vector<8x1xf32>
    %148 = math.exp %147 : vector<8x1xf32>
    %149 = arith.subf %140, %146 : vector<8x1xf32>
    %150 = math.exp %149 : vector<8x1xf32>
    %151 = arith.mulf %148, %87 : vector<8x1xf32>
    %152 = arith.addf %151, %150 : vector<8x1xf32>
    %153 = vector.broadcast %148 : vector<8x1xf32> to vector<8x32xf32>
    %154 = arith.mulf %153, %92 : vector<8x32xf32>
    %155 = vector.broadcast %150 : vector<8x1xf32> to vector<8x32xf32>
    %156 = arith.mulf %155, %133 : vector<8x32xf32>
    %157 = arith.addf %154, %156 : vector<8x32xf32>
    %c2_i32 = arith.constant 2 : i32
    %c8_i32_41 = arith.constant 8 : i32
    %158 = arith.muli %c2_i32, %c8_i32_41 : i32
    %159 = tpu.assume_multiple %158, 8 : i32
    %160 = arith.index_cast %159 : i32 to index
    %c0_42 = arith.constant 0 : index
    %161 = vector.load %arg15[%160, %c0_42] : memref<64x128xf32, #tpu.memory_space<vmem>>, vector<8x128xf32>
    %cst_43 = arith.constant dense<0.000000e+00> : vector<8x128xf32>
    %162 = tpu.matmul %114, %0, %cst_43 {dimension_numbers = #tpu.dot_dimension_numbers<[1], [0], [0], [1], [0, 0, 1, 1], [], []>} : vector<8x32xf32>, vector<32x128xf32>, vector<8x128xf32> -> vector<8x128xf32>
    %163 = arith.addf %161, %162 : vector<8x128xf32>
    %164 = vector.extract_strided_slice %163 {offsets = [0, 0], sizes = [8, 96], strides = [1, 1]} : vector<8x128xf32> to vector<8x96xf32>
    %165 = arith.negf %164 : vector<8x96xf32>
    %166 = math.exp %165 : vector<8x96xf32>
    %cst_44 = arith.constant 1.000000e+00 : f32
    %167 = vector.broadcast %cst_44 : f32 to vector<8x96xf32>
    %168 = arith.addf %167, %166 : vector<8x96xf32>
    %169 = arith.divf %167, %168 : vector<8x96xf32>
    %170 = vector.extract_strided_slice %163 {offsets = [0, 96], sizes = [8, 32], strides = [1, 1]} : vector<8x128xf32> to vector<8x32xf32>
    %171 = math.tanh %170 : vector<8x32xf32>
    %172 = vector.extract_strided_slice %169 {offsets = [0, 0], sizes = [8, 32], strides = [1, 1]} : vector<8x96xf32> to vector<8x32xf32>
    %173 = vector.extract_strided_slice %169 {offsets = [0, 32], sizes = [8, 32], strides = [1, 1]} : vector<8x96xf32> to vector<8x32xf32>
    %174 = vector.extract_strided_slice %169 {offsets = [0, 64], sizes = [8, 32], strides = [1, 1]} : vector<8x96xf32> to vector<8x32xf32>
    %175 = arith.mulf %173, %112 : vector<8x32xf32>
    %176 = arith.mulf %172, %171 : vector<8x32xf32>
    %177 = arith.addf %175, %176 : vector<8x32xf32>
    %178 = math.tanh %177 : vector<8x32xf32>
    %179 = arith.mulf %174, %178 : vector<8x32xf32>
    %180 = tpu.concatenate %179, %133 in 1 : vector<8x32xf32>, vector<8x32xf32> -> vector<8x64xf32>
    %cst_45 = arith.constant dense<0.000000e+00> : vector<8x128xf32>
    %181 = tpu.matmul %180, %1, %cst_45 {dimension_numbers = #tpu.dot_dimension_numbers<[1], [0], [0], [1], [0, 0, 1, 1], [], []>} : vector<8x64xf32>, vector<64x128xf32>, vector<8x128xf32> -> vector<8x128xf32>
    %182 = arith.addf %181, %5 : vector<8x128xf32>
    %183 = vector.extract_strided_slice %182 {offsets = [0, 0], sizes = [8, 96], strides = [1, 1]} : vector<8x128xf32> to vector<8x96xf32>
    %184 = arith.negf %183 : vector<8x96xf32>
    %185 = math.exp %184 : vector<8x96xf32>
    %cst_46 = arith.constant 1.000000e+00 : f32
    %186 = vector.broadcast %cst_46 : f32 to vector<8x96xf32>
    %187 = arith.addf %186, %185 : vector<8x96xf32>
    %188 = arith.divf %186, %187 : vector<8x96xf32>
    %189 = vector.extract_strided_slice %182 {offsets = [0, 96], sizes = [8, 32], strides = [1, 1]} : vector<8x128xf32> to vector<8x32xf32>
    %190 = math.tanh %189 : vector<8x32xf32>
    %191 = vector.extract_strided_slice %188 {offsets = [0, 0], sizes = [8, 32], strides = [1, 1]} : vector<8x96xf32> to vector<8x32xf32>
    %192 = vector.extract_strided_slice %188 {offsets = [0, 32], sizes = [8, 32], strides = [1, 1]} : vector<8x96xf32> to vector<8x32xf32>
    %193 = vector.extract_strided_slice %188 {offsets = [0, 64], sizes = [8, 32], strides = [1, 1]} : vector<8x96xf32> to vector<8x32xf32>
    %194 = arith.mulf %192, %131 : vector<8x32xf32>
    %195 = arith.mulf %191, %190 : vector<8x32xf32>
    %196 = arith.addf %194, %195 : vector<8x32xf32>
    %197 = math.tanh %196 : vector<8x32xf32>
    %198 = arith.mulf %193, %197 : vector<8x32xf32>
    %cst_47 = arith.constant dense<0.000000e+00> : vector<8x16xf32>
    %199 = tpu.matmul %198, %2, %cst_47 {dimension_numbers = #tpu.dot_dimension_numbers<[1], [0], [0], [1], [0, 0, 1, 1], [], []>} : vector<8x32xf32>, vector<32x16xf32>, vector<8x16xf32> -> vector<8x16xf32>
    %200 = arith.addf %199, %8 : vector<8x16xf32>
    %201 = math.tanh %200 : vector<8x16xf32>
    %202 = arith.mulf %201, %11 : vector<8x16xf32>
    %cst_48 = arith.constant dense<0.000000e+00> : vector<8xf32>
    %203 = vector.multi_reduction <add>, %202, %cst_48 [1] : vector<8x16xf32> to vector<8xf32>
    %204 = vector.shape_cast %203 : vector<8xf32> to vector<8x1xf32>
    %205 = arith.addf %204, %14 : vector<8x1xf32>
    %206 = vector.broadcast %c2_i32 : i32 to vector<8x8xi32>
    %207 = arith.cmpi eq, %15, %206 : vector<8x8xi32>
    %208 = vector.shape_cast %205 : vector<8x1xf32> to vector<8x1xf32>
    %209 = vector.broadcast %208 : vector<8x1xf32> to vector<8x8xf32>
    %210 = arith.select %207, %209, %145 : vector<8x8xi1>, vector<8x8xf32>
    %211 = arith.maximumf %146, %205 : vector<8x1xf32>
    %212 = arith.subf %146, %211 : vector<8x1xf32>
    %213 = math.exp %212 : vector<8x1xf32>
    %214 = arith.subf %205, %211 : vector<8x1xf32>
    %215 = math.exp %214 : vector<8x1xf32>
    %216 = arith.mulf %213, %152 : vector<8x1xf32>
    %217 = arith.addf %216, %215 : vector<8x1xf32>
    %218 = vector.broadcast %213 : vector<8x1xf32> to vector<8x32xf32>
    %219 = arith.mulf %218, %157 : vector<8x32xf32>
    %220 = vector.broadcast %215 : vector<8x1xf32> to vector<8x32xf32>
    %221 = arith.mulf %220, %198 : vector<8x32xf32>
    %222 = arith.addf %219, %221 : vector<8x32xf32>
    %c3_i32 = arith.constant 3 : i32
    %c8_i32_49 = arith.constant 8 : i32
    %223 = arith.muli %c3_i32, %c8_i32_49 : i32
    %224 = tpu.assume_multiple %223, 8 : i32
    %225 = arith.index_cast %224 : i32 to index
    %c0_50 = arith.constant 0 : index
    %226 = vector.load %arg15[%225, %c0_50] : memref<64x128xf32, #tpu.memory_space<vmem>>, vector<8x128xf32>
    %cst_51 = arith.constant dense<0.000000e+00> : vector<8x128xf32>
    %227 = tpu.matmul %179, %0, %cst_51 {dimension_numbers = #tpu.dot_dimension_numbers<[1], [0], [0], [1], [0, 0, 1, 1], [], []>} : vector<8x32xf32>, vector<32x128xf32>, vector<8x128xf32> -> vector<8x128xf32>
    %228 = arith.addf %226, %227 : vector<8x128xf32>
    %229 = vector.extract_strided_slice %228 {offsets = [0, 0], sizes = [8, 96], strides = [1, 1]} : vector<8x128xf32> to vector<8x96xf32>
    %230 = arith.negf %229 : vector<8x96xf32>
    %231 = math.exp %230 : vector<8x96xf32>
    %cst_52 = arith.constant 1.000000e+00 : f32
    %232 = vector.broadcast %cst_52 : f32 to vector<8x96xf32>
    %233 = arith.addf %232, %231 : vector<8x96xf32>
    %234 = arith.divf %232, %233 : vector<8x96xf32>
    %235 = vector.extract_strided_slice %228 {offsets = [0, 96], sizes = [8, 32], strides = [1, 1]} : vector<8x128xf32> to vector<8x32xf32>
    %236 = math.tanh %235 : vector<8x32xf32>
    %237 = vector.extract_strided_slice %234 {offsets = [0, 0], sizes = [8, 32], strides = [1, 1]} : vector<8x96xf32> to vector<8x32xf32>
    %238 = vector.extract_strided_slice %234 {offsets = [0, 32], sizes = [8, 32], strides = [1, 1]} : vector<8x96xf32> to vector<8x32xf32>
    %239 = vector.extract_strided_slice %234 {offsets = [0, 64], sizes = [8, 32], strides = [1, 1]} : vector<8x96xf32> to vector<8x32xf32>
    %240 = arith.mulf %238, %177 : vector<8x32xf32>
    %241 = arith.mulf %237, %236 : vector<8x32xf32>
    %242 = arith.addf %240, %241 : vector<8x32xf32>
    %243 = math.tanh %242 : vector<8x32xf32>
    %244 = arith.mulf %239, %243 : vector<8x32xf32>
    %245 = tpu.concatenate %244, %198 in 1 : vector<8x32xf32>, vector<8x32xf32> -> vector<8x64xf32>
    %cst_53 = arith.constant dense<0.000000e+00> : vector<8x128xf32>
    %246 = tpu.matmul %245, %1, %cst_53 {dimension_numbers = #tpu.dot_dimension_numbers<[1], [0], [0], [1], [0, 0, 1, 1], [], []>} : vector<8x64xf32>, vector<64x128xf32>, vector<8x128xf32> -> vector<8x128xf32>
    %247 = arith.addf %246, %5 : vector<8x128xf32>
    %248 = vector.extract_strided_slice %247 {offsets = [0, 0], sizes = [8, 96], strides = [1, 1]} : vector<8x128xf32> to vector<8x96xf32>
    %249 = arith.negf %248 : vector<8x96xf32>
    %250 = math.exp %249 : vector<8x96xf32>
    %cst_54 = arith.constant 1.000000e+00 : f32
    %251 = vector.broadcast %cst_54 : f32 to vector<8x96xf32>
    %252 = arith.addf %251, %250 : vector<8x96xf32>
    %253 = arith.divf %251, %252 : vector<8x96xf32>
    %254 = vector.extract_strided_slice %247 {offsets = [0, 96], sizes = [8, 32], strides = [1, 1]} : vector<8x128xf32> to vector<8x32xf32>
    %255 = math.tanh %254 : vector<8x32xf32>
    %256 = vector.extract_strided_slice %253 {offsets = [0, 0], sizes = [8, 32], strides = [1, 1]} : vector<8x96xf32> to vector<8x32xf32>
    %257 = vector.extract_strided_slice %253 {offsets = [0, 32], sizes = [8, 32], strides = [1, 1]} : vector<8x96xf32> to vector<8x32xf32>
    %258 = vector.extract_strided_slice %253 {offsets = [0, 64], sizes = [8, 32], strides = [1, 1]} : vector<8x96xf32> to vector<8x32xf32>
    %259 = arith.mulf %257, %196 : vector<8x32xf32>
    %260 = arith.mulf %256, %255 : vector<8x32xf32>
    %261 = arith.addf %259, %260 : vector<8x32xf32>
    %262 = math.tanh %261 : vector<8x32xf32>
    %263 = arith.mulf %258, %262 : vector<8x32xf32>
    %cst_55 = arith.constant dense<0.000000e+00> : vector<8x16xf32>
    %264 = tpu.matmul %263, %2, %cst_55 {dimension_numbers = #tpu.dot_dimension_numbers<[1], [0], [0], [1], [0, 0, 1, 1], [], []>} : vector<8x32xf32>, vector<32x16xf32>, vector<8x16xf32> -> vector<8x16xf32>
    %265 = arith.addf %264, %8 : vector<8x16xf32>
    %266 = math.tanh %265 : vector<8x16xf32>
    %267 = arith.mulf %266, %11 : vector<8x16xf32>
    %cst_56 = arith.constant dense<0.000000e+00> : vector<8xf32>
    %268 = vector.multi_reduction <add>, %267, %cst_56 [1] : vector<8x16xf32> to vector<8xf32>
    %269 = vector.shape_cast %268 : vector<8xf32> to vector<8x1xf32>
    %270 = arith.addf %269, %14 : vector<8x1xf32>
    %271 = vector.broadcast %c3_i32 : i32 to vector<8x8xi32>
    %272 = arith.cmpi eq, %15, %271 : vector<8x8xi32>
    %273 = vector.shape_cast %270 : vector<8x1xf32> to vector<8x1xf32>
    %274 = vector.broadcast %273 : vector<8x1xf32> to vector<8x8xf32>
    %275 = arith.select %272, %274, %210 : vector<8x8xi1>, vector<8x8xf32>
    %276 = arith.maximumf %211, %270 : vector<8x1xf32>
    %277 = arith.subf %211, %276 : vector<8x1xf32>
    %278 = math.exp %277 : vector<8x1xf32>
    %279 = arith.subf %270, %276 : vector<8x1xf32>
    %280 = math.exp %279 : vector<8x1xf32>
    %281 = arith.mulf %278, %217 : vector<8x1xf32>
    %282 = arith.addf %281, %280 : vector<8x1xf32>
    %283 = vector.broadcast %278 : vector<8x1xf32> to vector<8x32xf32>
    %284 = arith.mulf %283, %222 : vector<8x32xf32>
    %285 = vector.broadcast %280 : vector<8x1xf32> to vector<8x32xf32>
    %286 = arith.mulf %285, %263 : vector<8x32xf32>
    %287 = arith.addf %284, %286 : vector<8x32xf32>
    %c4_i32 = arith.constant 4 : i32
    %c8_i32_57 = arith.constant 8 : i32
    %288 = arith.muli %c4_i32, %c8_i32_57 : i32
    %289 = tpu.assume_multiple %288, 8 : i32
    %290 = arith.index_cast %289 : i32 to index
    %c0_58 = arith.constant 0 : index
    %291 = vector.load %arg15[%290, %c0_58] : memref<64x128xf32, #tpu.memory_space<vmem>>, vector<8x128xf32>
    %cst_59 = arith.constant dense<0.000000e+00> : vector<8x128xf32>
    %292 = tpu.matmul %244, %0, %cst_59 {dimension_numbers = #tpu.dot_dimension_numbers<[1], [0], [0], [1], [0, 0, 1, 1], [], []>} : vector<8x32xf32>, vector<32x128xf32>, vector<8x128xf32> -> vector<8x128xf32>
    %293 = arith.addf %291, %292 : vector<8x128xf32>
    %294 = vector.extract_strided_slice %293 {offsets = [0, 0], sizes = [8, 96], strides = [1, 1]} : vector<8x128xf32> to vector<8x96xf32>
    %295 = arith.negf %294 : vector<8x96xf32>
    %296 = math.exp %295 : vector<8x96xf32>
    %cst_60 = arith.constant 1.000000e+00 : f32
    %297 = vector.broadcast %cst_60 : f32 to vector<8x96xf32>
    %298 = arith.addf %297, %296 : vector<8x96xf32>
    %299 = arith.divf %297, %298 : vector<8x96xf32>
    %300 = vector.extract_strided_slice %293 {offsets = [0, 96], sizes = [8, 32], strides = [1, 1]} : vector<8x128xf32> to vector<8x32xf32>
    %301 = math.tanh %300 : vector<8x32xf32>
    %302 = vector.extract_strided_slice %299 {offsets = [0, 0], sizes = [8, 32], strides = [1, 1]} : vector<8x96xf32> to vector<8x32xf32>
    %303 = vector.extract_strided_slice %299 {offsets = [0, 32], sizes = [8, 32], strides = [1, 1]} : vector<8x96xf32> to vector<8x32xf32>
    %304 = vector.extract_strided_slice %299 {offsets = [0, 64], sizes = [8, 32], strides = [1, 1]} : vector<8x96xf32> to vector<8x32xf32>
    %305 = arith.mulf %303, %242 : vector<8x32xf32>
    %306 = arith.mulf %302, %301 : vector<8x32xf32>
    %307 = arith.addf %305, %306 : vector<8x32xf32>
    %308 = math.tanh %307 : vector<8x32xf32>
    %309 = arith.mulf %304, %308 : vector<8x32xf32>
    %310 = tpu.concatenate %309, %263 in 1 : vector<8x32xf32>, vector<8x32xf32> -> vector<8x64xf32>
    %cst_61 = arith.constant dense<0.000000e+00> : vector<8x128xf32>
    %311 = tpu.matmul %310, %1, %cst_61 {dimension_numbers = #tpu.dot_dimension_numbers<[1], [0], [0], [1], [0, 0, 1, 1], [], []>} : vector<8x64xf32>, vector<64x128xf32>, vector<8x128xf32> -> vector<8x128xf32>
    %312 = arith.addf %311, %5 : vector<8x128xf32>
    %313 = vector.extract_strided_slice %312 {offsets = [0, 0], sizes = [8, 96], strides = [1, 1]} : vector<8x128xf32> to vector<8x96xf32>
    %314 = arith.negf %313 : vector<8x96xf32>
    %315 = math.exp %314 : vector<8x96xf32>
    %cst_62 = arith.constant 1.000000e+00 : f32
    %316 = vector.broadcast %cst_62 : f32 to vector<8x96xf32>
    %317 = arith.addf %316, %315 : vector<8x96xf32>
    %318 = arith.divf %316, %317 : vector<8x96xf32>
    %319 = vector.extract_strided_slice %312 {offsets = [0, 96], sizes = [8, 32], strides = [1, 1]} : vector<8x128xf32> to vector<8x32xf32>
    %320 = math.tanh %319 : vector<8x32xf32>
    %321 = vector.extract_strided_slice %318 {offsets = [0, 0], sizes = [8, 32], strides = [1, 1]} : vector<8x96xf32> to vector<8x32xf32>
    %322 = vector.extract_strided_slice %318 {offsets = [0, 32], sizes = [8, 32], strides = [1, 1]} : vector<8x96xf32> to vector<8x32xf32>
    %323 = vector.extract_strided_slice %318 {offsets = [0, 64], sizes = [8, 32], strides = [1, 1]} : vector<8x96xf32> to vector<8x32xf32>
    %324 = arith.mulf %322, %261 : vector<8x32xf32>
    %325 = arith.mulf %321, %320 : vector<8x32xf32>
    %326 = arith.addf %324, %325 : vector<8x32xf32>
    %327 = math.tanh %326 : vector<8x32xf32>
    %328 = arith.mulf %323, %327 : vector<8x32xf32>
    %cst_63 = arith.constant dense<0.000000e+00> : vector<8x16xf32>
    %329 = tpu.matmul %328, %2, %cst_63 {dimension_numbers = #tpu.dot_dimension_numbers<[1], [0], [0], [1], [0, 0, 1, 1], [], []>} : vector<8x32xf32>, vector<32x16xf32>, vector<8x16xf32> -> vector<8x16xf32>
    %330 = arith.addf %329, %8 : vector<8x16xf32>
    %331 = math.tanh %330 : vector<8x16xf32>
    %332 = arith.mulf %331, %11 : vector<8x16xf32>
    %cst_64 = arith.constant dense<0.000000e+00> : vector<8xf32>
    %333 = vector.multi_reduction <add>, %332, %cst_64 [1] : vector<8x16xf32> to vector<8xf32>
    %334 = vector.shape_cast %333 : vector<8xf32> to vector<8x1xf32>
    %335 = arith.addf %334, %14 : vector<8x1xf32>
    %336 = vector.broadcast %c4_i32 : i32 to vector<8x8xi32>
    %337 = arith.cmpi eq, %15, %336 : vector<8x8xi32>
    %338 = vector.shape_cast %335 : vector<8x1xf32> to vector<8x1xf32>
    %339 = vector.broadcast %338 : vector<8x1xf32> to vector<8x8xf32>
    %340 = arith.select %337, %339, %275 : vector<8x8xi1>, vector<8x8xf32>
    %341 = arith.maximumf %276, %335 : vector<8x1xf32>
    %342 = arith.subf %276, %341 : vector<8x1xf32>
    %343 = math.exp %342 : vector<8x1xf32>
    %344 = arith.subf %335, %341 : vector<8x1xf32>
    %345 = math.exp %344 : vector<8x1xf32>
    %346 = arith.mulf %343, %282 : vector<8x1xf32>
    %347 = arith.addf %346, %345 : vector<8x1xf32>
    %348 = vector.broadcast %343 : vector<8x1xf32> to vector<8x32xf32>
    %349 = arith.mulf %348, %287 : vector<8x32xf32>
    %350 = vector.broadcast %345 : vector<8x1xf32> to vector<8x32xf32>
    %351 = arith.mulf %350, %328 : vector<8x32xf32>
    %352 = arith.addf %349, %351 : vector<8x32xf32>
    %c5_i32 = arith.constant 5 : i32
    %c8_i32_65 = arith.constant 8 : i32
    %353 = arith.muli %c5_i32, %c8_i32_65 : i32
    %354 = tpu.assume_multiple %353, 8 : i32
    %355 = arith.index_cast %354 : i32 to index
    %c0_66 = arith.constant 0 : index
    %356 = vector.load %arg15[%355, %c0_66] : memref<64x128xf32, #tpu.memory_space<vmem>>, vector<8x128xf32>
    %cst_67 = arith.constant dense<0.000000e+00> : vector<8x128xf32>
    %357 = tpu.matmul %309, %0, %cst_67 {dimension_numbers = #tpu.dot_dimension_numbers<[1], [0], [0], [1], [0, 0, 1, 1], [], []>} : vector<8x32xf32>, vector<32x128xf32>, vector<8x128xf32> -> vector<8x128xf32>
    %358 = arith.addf %356, %357 : vector<8x128xf32>
    %359 = vector.extract_strided_slice %358 {offsets = [0, 0], sizes = [8, 96], strides = [1, 1]} : vector<8x128xf32> to vector<8x96xf32>
    %360 = arith.negf %359 : vector<8x96xf32>
    %361 = math.exp %360 : vector<8x96xf32>
    %cst_68 = arith.constant 1.000000e+00 : f32
    %362 = vector.broadcast %cst_68 : f32 to vector<8x96xf32>
    %363 = arith.addf %362, %361 : vector<8x96xf32>
    %364 = arith.divf %362, %363 : vector<8x96xf32>
    %365 = vector.extract_strided_slice %358 {offsets = [0, 96], sizes = [8, 32], strides = [1, 1]} : vector<8x128xf32> to vector<8x32xf32>
    %366 = math.tanh %365 : vector<8x32xf32>
    %367 = vector.extract_strided_slice %364 {offsets = [0, 0], sizes = [8, 32], strides = [1, 1]} : vector<8x96xf32> to vector<8x32xf32>
    %368 = vector.extract_strided_slice %364 {offsets = [0, 32], sizes = [8, 32], strides = [1, 1]} : vector<8x96xf32> to vector<8x32xf32>
    %369 = vector.extract_strided_slice %364 {offsets = [0, 64], sizes = [8, 32], strides = [1, 1]} : vector<8x96xf32> to vector<8x32xf32>
    %370 = arith.mulf %368, %307 : vector<8x32xf32>
    %371 = arith.mulf %367, %366 : vector<8x32xf32>
    %372 = arith.addf %370, %371 : vector<8x32xf32>
    %373 = math.tanh %372 : vector<8x32xf32>
    %374 = arith.mulf %369, %373 : vector<8x32xf32>
    %375 = tpu.concatenate %374, %328 in 1 : vector<8x32xf32>, vector<8x32xf32> -> vector<8x64xf32>
    %cst_69 = arith.constant dense<0.000000e+00> : vector<8x128xf32>
    %376 = tpu.matmul %375, %1, %cst_69 {dimension_numbers = #tpu.dot_dimension_numbers<[1], [0], [0], [1], [0, 0, 1, 1], [], []>} : vector<8x64xf32>, vector<64x128xf32>, vector<8x128xf32> -> vector<8x128xf32>
    %377 = arith.addf %376, %5 : vector<8x128xf32>
    %378 = vector.extract_strided_slice %377 {offsets = [0, 0], sizes = [8, 96], strides = [1, 1]} : vector<8x128xf32> to vector<8x96xf32>
    %379 = arith.negf %378 : vector<8x96xf32>
    %380 = math.exp %379 : vector<8x96xf32>
    %cst_70 = arith.constant 1.000000e+00 : f32
    %381 = vector.broadcast %cst_70 : f32 to vector<8x96xf32>
    %382 = arith.addf %381, %380 : vector<8x96xf32>
    %383 = arith.divf %381, %382 : vector<8x96xf32>
    %384 = vector.extract_strided_slice %377 {offsets = [0, 96], sizes = [8, 32], strides = [1, 1]} : vector<8x128xf32> to vector<8x32xf32>
    %385 = math.tanh %384 : vector<8x32xf32>
    %386 = vector.extract_strided_slice %383 {offsets = [0, 0], sizes = [8, 32], strides = [1, 1]} : vector<8x96xf32> to vector<8x32xf32>
    %387 = vector.extract_strided_slice %383 {offsets = [0, 32], sizes = [8, 32], strides = [1, 1]} : vector<8x96xf32> to vector<8x32xf32>
    %388 = vector.extract_strided_slice %383 {offsets = [0, 64], sizes = [8, 32], strides = [1, 1]} : vector<8x96xf32> to vector<8x32xf32>
    %389 = arith.mulf %387, %326 : vector<8x32xf32>
    %390 = arith.mulf %386, %385 : vector<8x32xf32>
    %391 = arith.addf %389, %390 : vector<8x32xf32>
    %392 = math.tanh %391 : vector<8x32xf32>
    %393 = arith.mulf %388, %392 : vector<8x32xf32>
    %cst_71 = arith.constant dense<0.000000e+00> : vector<8x16xf32>
    %394 = tpu.matmul %393, %2, %cst_71 {dimension_numbers = #tpu.dot_dimension_numbers<[1], [0], [0], [1], [0, 0, 1, 1], [], []>} : vector<8x32xf32>, vector<32x16xf32>, vector<8x16xf32> -> vector<8x16xf32>
    %395 = arith.addf %394, %8 : vector<8x16xf32>
    %396 = math.tanh %395 : vector<8x16xf32>
    %397 = arith.mulf %396, %11 : vector<8x16xf32>
    %cst_72 = arith.constant dense<0.000000e+00> : vector<8xf32>
    %398 = vector.multi_reduction <add>, %397, %cst_72 [1] : vector<8x16xf32> to vector<8xf32>
    %399 = vector.shape_cast %398 : vector<8xf32> to vector<8x1xf32>
    %400 = arith.addf %399, %14 : vector<8x1xf32>
    %401 = vector.broadcast %c5_i32 : i32 to vector<8x8xi32>
    %402 = arith.cmpi eq, %15, %401 : vector<8x8xi32>
    %403 = vector.shape_cast %400 : vector<8x1xf32> to vector<8x1xf32>
    %404 = vector.broadcast %403 : vector<8x1xf32> to vector<8x8xf32>
    %405 = arith.select %402, %404, %340 : vector<8x8xi1>, vector<8x8xf32>
    %406 = arith.maximumf %341, %400 : vector<8x1xf32>
    %407 = arith.subf %341, %406 : vector<8x1xf32>
    %408 = math.exp %407 : vector<8x1xf32>
    %409 = arith.subf %400, %406 : vector<8x1xf32>
    %410 = math.exp %409 : vector<8x1xf32>
    %411 = arith.mulf %408, %347 : vector<8x1xf32>
    %412 = arith.addf %411, %410 : vector<8x1xf32>
    %413 = vector.broadcast %408 : vector<8x1xf32> to vector<8x32xf32>
    %414 = arith.mulf %413, %352 : vector<8x32xf32>
    %415 = vector.broadcast %410 : vector<8x1xf32> to vector<8x32xf32>
    %416 = arith.mulf %415, %393 : vector<8x32xf32>
    %417 = arith.addf %414, %416 : vector<8x32xf32>
    %c6_i32 = arith.constant 6 : i32
    %c8_i32_73 = arith.constant 8 : i32
    %418 = arith.muli %c6_i32, %c8_i32_73 : i32
    %419 = tpu.assume_multiple %418, 8 : i32
    %420 = arith.index_cast %419 : i32 to index
    %c0_74 = arith.constant 0 : index
    %421 = vector.load %arg15[%420, %c0_74] : memref<64x128xf32, #tpu.memory_space<vmem>>, vector<8x128xf32>
    %cst_75 = arith.constant dense<0.000000e+00> : vector<8x128xf32>
    %422 = tpu.matmul %374, %0, %cst_75 {dimension_numbers = #tpu.dot_dimension_numbers<[1], [0], [0], [1], [0, 0, 1, 1], [], []>} : vector<8x32xf32>, vector<32x128xf32>, vector<8x128xf32> -> vector<8x128xf32>
    %423 = arith.addf %421, %422 : vector<8x128xf32>
    %424 = vector.extract_strided_slice %423 {offsets = [0, 0], sizes = [8, 96], strides = [1, 1]} : vector<8x128xf32> to vector<8x96xf32>
    %425 = arith.negf %424 : vector<8x96xf32>
    %426 = math.exp %425 : vector<8x96xf32>
    %cst_76 = arith.constant 1.000000e+00 : f32
    %427 = vector.broadcast %cst_76 : f32 to vector<8x96xf32>
    %428 = arith.addf %427, %426 : vector<8x96xf32>
    %429 = arith.divf %427, %428 : vector<8x96xf32>
    %430 = vector.extract_strided_slice %423 {offsets = [0, 96], sizes = [8, 32], strides = [1, 1]} : vector<8x128xf32> to vector<8x32xf32>
    %431 = math.tanh %430 : vector<8x32xf32>
    %432 = vector.extract_strided_slice %429 {offsets = [0, 0], sizes = [8, 32], strides = [1, 1]} : vector<8x96xf32> to vector<8x32xf32>
    %433 = vector.extract_strided_slice %429 {offsets = [0, 32], sizes = [8, 32], strides = [1, 1]} : vector<8x96xf32> to vector<8x32xf32>
    %434 = vector.extract_strided_slice %429 {offsets = [0, 64], sizes = [8, 32], strides = [1, 1]} : vector<8x96xf32> to vector<8x32xf32>
    %435 = arith.mulf %433, %372 : vector<8x32xf32>
    %436 = arith.mulf %432, %431 : vector<8x32xf32>
    %437 = arith.addf %435, %436 : vector<8x32xf32>
    %438 = math.tanh %437 : vector<8x32xf32>
    %439 = arith.mulf %434, %438 : vector<8x32xf32>
    %440 = tpu.concatenate %439, %393 in 1 : vector<8x32xf32>, vector<8x32xf32> -> vector<8x64xf32>
    %cst_77 = arith.constant dense<0.000000e+00> : vector<8x128xf32>
    %441 = tpu.matmul %440, %1, %cst_77 {dimension_numbers = #tpu.dot_dimension_numbers<[1], [0], [0], [1], [0, 0, 1, 1], [], []>} : vector<8x64xf32>, vector<64x128xf32>, vector<8x128xf32> -> vector<8x128xf32>
    %442 = arith.addf %441, %5 : vector<8x128xf32>
    %443 = vector.extract_strided_slice %442 {offsets = [0, 0], sizes = [8, 96], strides = [1, 1]} : vector<8x128xf32> to vector<8x96xf32>
    %444 = arith.negf %443 : vector<8x96xf32>
    %445 = math.exp %444 : vector<8x96xf32>
    %cst_78 = arith.constant 1.000000e+00 : f32
    %446 = vector.broadcast %cst_78 : f32 to vector<8x96xf32>
    %447 = arith.addf %446, %445 : vector<8x96xf32>
    %448 = arith.divf %446, %447 : vector<8x96xf32>
    %449 = vector.extract_strided_slice %442 {offsets = [0, 96], sizes = [8, 32], strides = [1, 1]} : vector<8x128xf32> to vector<8x32xf32>
    %450 = math.tanh %449 : vector<8x32xf32>
    %451 = vector.extract_strided_slice %448 {offsets = [0, 0], sizes = [8, 32], strides = [1, 1]} : vector<8x96xf32> to vector<8x32xf32>
    %452 = vector.extract_strided_slice %448 {offsets = [0, 32], sizes = [8, 32], strides = [1, 1]} : vector<8x96xf32> to vector<8x32xf32>
    %453 = vector.extract_strided_slice %448 {offsets = [0, 64], sizes = [8, 32], strides = [1, 1]} : vector<8x96xf32> to vector<8x32xf32>
    %454 = arith.mulf %452, %391 : vector<8x32xf32>
    %455 = arith.mulf %451, %450 : vector<8x32xf32>
    %456 = arith.addf %454, %455 : vector<8x32xf32>
    %457 = math.tanh %456 : vector<8x32xf32>
    %458 = arith.mulf %453, %457 : vector<8x32xf32>
    %cst_79 = arith.constant dense<0.000000e+00> : vector<8x16xf32>
    %459 = tpu.matmul %458, %2, %cst_79 {dimension_numbers = #tpu.dot_dimension_numbers<[1], [0], [0], [1], [0, 0, 1, 1], [], []>} : vector<8x32xf32>, vector<32x16xf32>, vector<8x16xf32> -> vector<8x16xf32>
    %460 = arith.addf %459, %8 : vector<8x16xf32>
    %461 = math.tanh %460 : vector<8x16xf32>
    %462 = arith.mulf %461, %11 : vector<8x16xf32>
    %cst_80 = arith.constant dense<0.000000e+00> : vector<8xf32>
    %463 = vector.multi_reduction <add>, %462, %cst_80 [1] : vector<8x16xf32> to vector<8xf32>
    %464 = vector.shape_cast %463 : vector<8xf32> to vector<8x1xf32>
    %465 = arith.addf %464, %14 : vector<8x1xf32>
    %466 = vector.broadcast %c6_i32 : i32 to vector<8x8xi32>
    %467 = arith.cmpi eq, %15, %466 : vector<8x8xi32>
    %468 = vector.shape_cast %465 : vector<8x1xf32> to vector<8x1xf32>
    %469 = vector.broadcast %468 : vector<8x1xf32> to vector<8x8xf32>
    %470 = arith.select %467, %469, %405 : vector<8x8xi1>, vector<8x8xf32>
    %471 = arith.maximumf %406, %465 : vector<8x1xf32>
    %472 = arith.subf %406, %471 : vector<8x1xf32>
    %473 = math.exp %472 : vector<8x1xf32>
    %474 = arith.subf %465, %471 : vector<8x1xf32>
    %475 = math.exp %474 : vector<8x1xf32>
    %476 = arith.mulf %473, %412 : vector<8x1xf32>
    %477 = arith.addf %476, %475 : vector<8x1xf32>
    %478 = vector.broadcast %473 : vector<8x1xf32> to vector<8x32xf32>
    %479 = arith.mulf %478, %417 : vector<8x32xf32>
    %480 = vector.broadcast %475 : vector<8x1xf32> to vector<8x32xf32>
    %481 = arith.mulf %480, %458 : vector<8x32xf32>
    %482 = arith.addf %479, %481 : vector<8x32xf32>
    %c7_i32 = arith.constant 7 : i32
    %c8_i32_81 = arith.constant 8 : i32
    %483 = arith.muli %c7_i32, %c8_i32_81 : i32
    %484 = tpu.assume_multiple %483, 8 : i32
    %485 = arith.index_cast %484 : i32 to index
    %c0_82 = arith.constant 0 : index
    %486 = vector.load %arg15[%485, %c0_82] : memref<64x128xf32, #tpu.memory_space<vmem>>, vector<8x128xf32>
    %cst_83 = arith.constant dense<0.000000e+00> : vector<8x128xf32>
    %487 = tpu.matmul %439, %0, %cst_83 {dimension_numbers = #tpu.dot_dimension_numbers<[1], [0], [0], [1], [0, 0, 1, 1], [], []>} : vector<8x32xf32>, vector<32x128xf32>, vector<8x128xf32> -> vector<8x128xf32>
    %488 = arith.addf %486, %487 : vector<8x128xf32>
    %489 = vector.extract_strided_slice %488 {offsets = [0, 0], sizes = [8, 96], strides = [1, 1]} : vector<8x128xf32> to vector<8x96xf32>
    %490 = arith.negf %489 : vector<8x96xf32>
    %491 = math.exp %490 : vector<8x96xf32>
    %cst_84 = arith.constant 1.000000e+00 : f32
    %492 = vector.broadcast %cst_84 : f32 to vector<8x96xf32>
    %493 = arith.addf %492, %491 : vector<8x96xf32>
    %494 = arith.divf %492, %493 : vector<8x96xf32>
    %495 = vector.extract_strided_slice %488 {offsets = [0, 96], sizes = [8, 32], strides = [1, 1]} : vector<8x128xf32> to vector<8x32xf32>
    %496 = math.tanh %495 : vector<8x32xf32>
    %497 = vector.extract_strided_slice %494 {offsets = [0, 0], sizes = [8, 32], strides = [1, 1]} : vector<8x96xf32> to vector<8x32xf32>
    %498 = vector.extract_strided_slice %494 {offsets = [0, 32], sizes = [8, 32], strides = [1, 1]} : vector<8x96xf32> to vector<8x32xf32>
    %499 = vector.extract_strided_slice %494 {offsets = [0, 64], sizes = [8, 32], strides = [1, 1]} : vector<8x96xf32> to vector<8x32xf32>
    %500 = arith.mulf %498, %437 : vector<8x32xf32>
    %501 = arith.mulf %497, %496 : vector<8x32xf32>
    %502 = arith.addf %500, %501 : vector<8x32xf32>
    %503 = math.tanh %502 : vector<8x32xf32>
    %504 = arith.mulf %499, %503 : vector<8x32xf32>
    %505 = tpu.concatenate %504, %458 in 1 : vector<8x32xf32>, vector<8x32xf32> -> vector<8x64xf32>
    %cst_85 = arith.constant dense<0.000000e+00> : vector<8x128xf32>
    %506 = tpu.matmul %505, %1, %cst_85 {dimension_numbers = #tpu.dot_dimension_numbers<[1], [0], [0], [1], [0, 0, 1, 1], [], []>} : vector<8x64xf32>, vector<64x128xf32>, vector<8x128xf32> -> vector<8x128xf32>
    %507 = arith.addf %506, %5 : vector<8x128xf32>
    %508 = vector.extract_strided_slice %507 {offsets = [0, 0], sizes = [8, 96], strides = [1, 1]} : vector<8x128xf32> to vector<8x96xf32>
    %509 = arith.negf %508 : vector<8x96xf32>
    %510 = math.exp %509 : vector<8x96xf32>
    %cst_86 = arith.constant 1.000000e+00 : f32
    %511 = vector.broadcast %cst_86 : f32 to vector<8x96xf32>
    %512 = arith.addf %511, %510 : vector<8x96xf32>
    %513 = arith.divf %511, %512 : vector<8x96xf32>
    %514 = vector.extract_strided_slice %507 {offsets = [0, 96], sizes = [8, 32], strides = [1, 1]} : vector<8x128xf32> to vector<8x32xf32>
    %515 = math.tanh %514 : vector<8x32xf32>
    %516 = vector.extract_strided_slice %513 {offsets = [0, 0], sizes = [8, 32], strides = [1, 1]} : vector<8x96xf32> to vector<8x32xf32>
    %517 = vector.extract_strided_slice %513 {offsets = [0, 32], sizes = [8, 32], strides = [1, 1]} : vector<8x96xf32> to vector<8x32xf32>
    %518 = vector.extract_strided_slice %513 {offsets = [0, 64], sizes = [8, 32], strides = [1, 1]} : vector<8x96xf32> to vector<8x32xf32>
    %519 = arith.mulf %517, %456 : vector<8x32xf32>
    %520 = arith.mulf %516, %515 : vector<8x32xf32>
    %521 = arith.addf %519, %520 : vector<8x32xf32>
    %522 = math.tanh %521 : vector<8x32xf32>
    %523 = arith.mulf %518, %522 : vector<8x32xf32>
    %cst_87 = arith.constant dense<0.000000e+00> : vector<8x16xf32>
    %524 = tpu.matmul %523, %2, %cst_87 {dimension_numbers = #tpu.dot_dimension_numbers<[1], [0], [0], [1], [0, 0, 1, 1], [], []>} : vector<8x32xf32>, vector<32x16xf32>, vector<8x16xf32> -> vector<8x16xf32>
    %525 = arith.addf %524, %8 : vector<8x16xf32>
    %526 = math.tanh %525 : vector<8x16xf32>
    %527 = arith.mulf %526, %11 : vector<8x16xf32>
    %cst_88 = arith.constant dense<0.000000e+00> : vector<8xf32>
    %528 = vector.multi_reduction <add>, %527, %cst_88 [1] : vector<8x16xf32> to vector<8xf32>
    %529 = vector.shape_cast %528 : vector<8xf32> to vector<8x1xf32>
    %530 = arith.addf %529, %14 : vector<8x1xf32>
    %531 = vector.broadcast %c7_i32 : i32 to vector<8x8xi32>
    %532 = arith.cmpi eq, %15, %531 : vector<8x8xi32>
    %533 = vector.shape_cast %530 : vector<8x1xf32> to vector<8x1xf32>
    %534 = vector.broadcast %533 : vector<8x1xf32> to vector<8x8xf32>
    %535 = arith.select %532, %534, %470 : vector<8x8xi1>, vector<8x8xf32>
    %536 = arith.maximumf %471, %530 : vector<8x1xf32>
    %537 = arith.subf %471, %536 : vector<8x1xf32>
    %538 = math.exp %537 : vector<8x1xf32>
    %539 = arith.subf %530, %536 : vector<8x1xf32>
    %540 = math.exp %539 : vector<8x1xf32>
    %541 = arith.mulf %538, %477 : vector<8x1xf32>
    %542 = arith.addf %541, %540 : vector<8x1xf32>
    %543 = vector.broadcast %538 : vector<8x1xf32> to vector<8x32xf32>
    %544 = arith.mulf %543, %482 : vector<8x32xf32>
    %545 = vector.broadcast %540 : vector<8x1xf32> to vector<8x32xf32>
    %546 = arith.mulf %545, %523 : vector<8x32xf32>
    %547 = arith.addf %544, %546 : vector<8x32xf32>
    %c8_i32_89 = arith.constant 8 : i32
    %cst_90 = arith.constant dense<0xFF800000> : vector<8xf32>
    %548 = vector.multi_reduction <maximumf>, %535, %cst_90 [1] : vector<8x8xf32> to vector<8xf32>
    %549 = vector.shape_cast %548 : vector<8xf32> to vector<8x1xf32>
    %550 = vector.broadcast %549 : vector<8x1xf32> to vector<8x8xf32>
    %551 = arith.subf %535, %550 : vector<8x8xf32>
    %552 = math.exp %551 : vector<8x8xf32>
    %cst_91 = arith.constant dense<0.000000e+00> : vector<8xf32>
    %553 = vector.multi_reduction <add>, %552, %cst_91 [1] : vector<8x8xf32> to vector<8xf32>
    %554 = vector.shape_cast %553 : vector<8xf32> to vector<8x1xf32>
    %555 = vector.broadcast %554 : vector<8x1xf32> to vector<8x8xf32>
    %556 = arith.divf %552, %555 : vector<8x8xf32>
    %c0_92 = arith.constant 0 : index
    %c0_93 = arith.constant 0 : index
    %557 = vector.load %arg14[%c0_92, %c0_93] : memref<8x8xf32, #tpu.memory_space<vmem>>, vector<8x8xf32>
    tpu.vector_store %arg14[%c0_92, %c0_93], %556 {strides = array<i32>} : memref<8x8xf32, #tpu.memory_space<vmem>>, vector<8x8xf32>,
    %558 = vector.broadcast %542 : vector<8x1xf32> to vector<8x32xf32>
    %559 = arith.divf %547, %558 : vector<8x32xf32>
    %c0_94 = arith.constant 0 : index
    %c0_95 = arith.constant 0 : index
    %560 = vector.load %arg10[%c0_94, %c0_95] : memref<32x2xf32, #tpu.memory_space<vmem>>, vector<32x2xf32>
    %cst_96 = arith.constant dense<0.000000e+00> : vector<8x2xf32>
    %561 = tpu.matmul %559, %560, %cst_96 {dimension_numbers = #tpu.dot_dimension_numbers<[1], [0], [0], [1], [0, 0, 1, 1], [], []>} : vector<8x32xf32>, vector<32x2xf32>, vector<8x2xf32> -> vector<8x2xf32>
    %c0_97 = arith.constant 0 : index
    %c0_98 = arith.constant 0 : index
    %562 = vector.load %arg11[%c0_97, %c0_98] : memref<1x2xf32, #tpu.memory_space<vmem>>, vector<1x2xf32>
    %563 = vector.broadcast %562 : vector<1x2xf32> to vector<8x2xf32>
    %564 = arith.addf %561, %563 : vector<8x2xf32>
    %c0_99 = arith.constant 0 : index
    %565 = memref.load %arg12[%c0_99] : memref<1xf32, #tpu.memory_space<smem>>
    %cst_100 = arith.constant 9.99999997E-7 : f32
    %566 = arith.maximumf %565, %cst_100 : f32
    %cst_101 = arith.constant 1.000000e+00 : f32
    %567 = arith.divf %cst_101, %566 : f32
    %568 = vector.broadcast %567 : f32 to vector<8x2xf32>
    %569 = arith.mulf %564, %568 : vector<8x2xf32>
    %c0_102 = arith.constant 0 : index
    %c0_103 = arith.constant 0 : index
    %570 = vector.load %arg13[%c0_102, %c0_103] : memref<8x2xf32, #tpu.memory_space<vmem>>, vector<8x2xf32>
    tpu.vector_store %arg13[%c0_102, %c0_103], %569 {strides = array<i32>} : memref<8x2xf32, #tpu.memory_space<vmem>>, vector<8x2xf32>,
    return
  }
}

</mosaic_0001>

<llo_original>
// kernel: multilayer_lstm_attention.1
$region0: #{multilayer_lstm_attention.1}
  #allocation0 [shape = 'u32[]', space=smem, size = 0x4, offset = 0x4, fixed_abs, tag = 'smem constant byte address 0x4 - core index']
  #allocation1 [shape = 'u32[144,128]{1,0:T(1,128)}', space=vmem, size = 0x12000, scoped, tag = 'internal scratch']
  #allocation2 [shape = 'f32[64,128]{1,0:T(8,128)}', space=vmem, size = 0x8000, scoped, tag = 'scratch operand']
  #allocation3 [shape = 'f32[1,1]{1,0:T(1,128)S(1)}', space=vmem, size = 0x200, scoped, tag = 'scoped memory for multilayer_lstm_attention.1']
  #allocation4 [shape = 'f32[1]{0:T(128)S(6)}', space=smem, size = 0x200, scoped, tag = 'scoped memory for multilayer_lstm_attention.1']
  %s0 = inlined_call_operand.vmem [shape: f32[64,16], index: 0, kind: input, shape index: {}]
  %s1 = inlined_call_operand.vmem [shape: f32[16,128], index: 1, kind: input, shape index: {}]
  %s2 = inlined_call_operand.vmem [shape: f32[32,128], index: 2, kind: input, shape index: {}]
  %s3 = inlined_call_operand.vmem [shape: f32[1,128], index: 3, kind: input, shape index: {}]
  %s4 = inlined_call_operand.vmem [shape: f32[64,128], index: 4, kind: input, shape index: {}]
  %s5 = inlined_call_operand.vmem [shape: f32[1,128], index: 5, kind: input, shape index: {}]
  %s6 = inlined_call_operand.vmem [shape: f32[32,16], index: 6, kind: input, shape index: {}]
  %s7 = inlined_call_operand.vmem [shape: f32[1,16], index: 7, kind: input, shape index: {}]
  %s8 = inlined_call_operand.vmem [shape: f32[1,16], index: 8, kind: input, shape index: {}]
  %s9 = inlined_call_operand.<no memory space> [shape: f32[1,1], index: 9, kind: input, shape index: {}]
  %s10 = inlined_call_operand.vmem [shape: f32[32,2], index: 10, kind: input, shape index: {}]
  %s11 = inlined_call_operand.vmem [shape: f32[1,2], index: 11, kind: input, shape index: {}]
  %s12 = inlined_call_operand.<no memory space> [shape: f32[1], index: 12, kind: input, shape index: {}]
  %s13 = inlined_call_operand.vmem [shape: f32[8,2], index: 13, kind: output, shape index: {0}]
  %s14 = inlined_call_operand.vmem [shape: f32[8,8], index: 14, kind: output, shape index: {1}]
  %15 = xla_tuple %s13, %s14
  %s16 = sld [smem:[#allocation0]]
  $region70: #{multilayer_lstm_attention.1} parent=0
    _
  %s18 = ssub.s32 1, %s16
  %s19 = scalar_select 0, %s18, %s16
  %v20 = vstv %s9
  %21 = vst [vmem:[#allocation3] sm:$0x1] %v20
  %22 = sst [smem:[#allocation4]] %s12
  // Predicated region
  $region2: #{multilayer_lstm_attention.1} parent=0 // pred_check
    _
  $region3: #{multilayer_lstm_attention.1} parent=0 // pred_check_branch
    %24 = sbr.rel (0) target = $region5
  $region4: #{multilayer_lstm_attention.1} parent=0 // pred_region
    _
  $region5: #{multilayer_lstm_attention.1} parent=0 // pred_fallthru
    _
  // Predicated region
  $region6: #{multilayer_lstm_attention.1} parent=0 // pred_check
    _
  $region7: #{multilayer_lstm_attention.1} parent=0 // pred_check_branch
    %26 = sbr.rel (0) target = $region9
  $region8: #{multilayer_lstm_attention.1} parent=0 // pred_region
    _
  $region9: #{multilayer_lstm_attention.1} parent=0 // pred_fallthru
    _
  // Predicated region
  $region10: #{multilayer_lstm_attention.1} parent=0 // pred_check
    _
  $region11: #{multilayer_lstm_attention.1} parent=0 // pred_check_branch
    %28 = sbr.rel (0) target = $region13
  $region12: #{multilayer_lstm_attention.1} parent=0 // pred_region
    _
  $region13: #{multilayer_lstm_attention.1} parent=0 // pred_fallthru
    _
  // Predicated region
  $region14: #{multilayer_lstm_attention.1} parent=0 // pred_check
    _
  $region15: #{multilayer_lstm_attention.1} parent=0 // pred_check_branch
    %30 = sbr.rel (0) target = $region17
  $region16: #{multilayer_lstm_attention.1} parent=0 // pred_region
    _
  $region17: #{multilayer_lstm_attention.1} parent=0 // pred_fallthru
    _
  // Predicated region
  $region18: #{multilayer_lstm_attention.1} parent=0 // pred_check
    _
  $region19: #{multilayer_lstm_attention.1} parent=0 // pred_check_branch
    %32 = sbr.rel (0) target = $region21
  $region20: #{multilayer_lstm_attention.1} parent=0 // pred_region
    _
  $region21: #{multilayer_lstm_attention.1} parent=0 // pred_fallthru
    _
  // Predicated region
  $region22: #{multilayer_lstm_attention.1} parent=0 // pred_check
    _
  $region23: #{multilayer_lstm_attention.1} parent=0 // pred_check_branch
    %34 = sbr.rel (0) target = $region25
  $region24: #{multilayer_lstm_attention.1} parent=0 // pred_region
    _
  $region25: #{multilayer_lstm_attention.1} parent=0 // pred_fallthru
    _
  // Predicated region
  $region26: #{multilayer_lstm_attention.1} parent=0 // pred_check
    _
  $region27: #{multilayer_lstm_attention.1} parent=0 // pred_check_branch
    %36 = sbr.rel (0) target = $region29
  $region28: #{multilayer_lstm_attention.1} parent=0 // pred_region
    _
  $region29: #{multilayer_lstm_attention.1} parent=0 // pred_fallthru
    _
  // Predicated region
  $region30: #{multilayer_lstm_attention.1} parent=0 // pred_check
    _
  $region31: #{multilayer_lstm_attention.1} parent=0 // pred_check_branch
    %38 = sbr.rel (0) target = $region33
  $region32: #{multilayer_lstm_attention.1} parent=0 // pred_region
    _
  $region33: #{multilayer_lstm_attention.1} parent=0 // pred_fallthru
    _
  // Predicated region
  $region34: #{multilayer_lstm_attention.1} parent=0 // pred_check
    _
  $region35: #{multilayer_lstm_attention.1} parent=0 // pred_check_branch
    %40 = sbr.rel (0) target = $region37
  $region36: #{multilayer_lstm_attention.1} parent=0 // pred_region
    _
  $region37: #{multilayer_lstm_attention.1} parent=0 // pred_fallthru
    _
  // Predicated region
  $region38: #{multilayer_lstm_attention.1} parent=0 // pred_check
    _
  $region39: #{multilayer_lstm_attention.1} parent=0 // pred_check_branch
    %42 = sbr.rel (0) target = $region41
  $region40: #{multilayer_lstm_attention.1} parent=0 // pred_region
    _
  $region41: #{multilayer_lstm_attention.1} parent=0 // pred_fallthru
    _
  // Predicated region
  $region42: #{multilayer_lstm_attention.1} parent=0 // pred_check
    _
  $region43: #{multilayer_lstm_attention.1} parent=0 // pred_check_branch
    %44 = sbr.rel (0) target = $region45
  $region44: #{multilayer_lstm_attention.1} parent=0 // pred_region
    _
  $region45: #{multilayer_lstm_attention.1} parent=0 // pred_fallthru
    _
  // Predicated region
  $region46: #{multilayer_lstm_attention.1} parent=0 // pred_check
    _
  $region47: #{multilayer_lstm_attention.1} parent=0 // pred_check_branch
    %46 = sbr.rel (0) target = $region49
  $region48: #{multilayer_lstm_attention.1} parent=0 // pred_region
    _
  $region49: #{multilayer_lstm_attention.1} parent=0 // pred_fallthru
    _
  // Predicated region
  $region50: #{multilayer_lstm_attention.1} parent=0 // pred_check
    _
  $region51: #{multilayer_lstm_attention.1} parent=0 // pred_check_branch
    %48 = sbr.rel (0) target = $region53
  $region52: #{multilayer_lstm_attention.1} parent=0 // pred_region
    _
  $region53: #{multilayer_lstm_attention.1} parent=0 // pred_fallthru
    _
  %v49 = vld [vmem:[%s2] sm:$0xff]
  %v50 = vld [vmem:[%s2 + $0x8] sm:$0xff]
  %v51 = vld [vmem:[%s2 + $0x10] sm:$0xff]
  %v52 = vld [vmem:[%s2 + $0x18] sm:$0xff]
  %v53 = vld [vmem:[%s4] sm:$0xff]
  %v54 = vld [vmem:[%s4 + $0x8] sm:$0xff]
  %v55 = vld [vmem:[%s4 + $0x10] sm:$0xff]
  %v56 = vld [vmem:[%s4 + $0x18] sm:$0xff]
  %v57 = vld [vmem:[%s4 + $0x20] sm:$0xff]
  %v58 = vld [vmem:[%s4 + $0x28] sm:$0xff]
  %v59 = vld [vmem:[%s4 + $0x30] sm:$0xff]
  %v60 = vld [vmem:[%s4 + $0x38] sm:$0xff]
  %v61 = vld [vmem:[%s6] sm:$0xff]
  %v62 = vld [vmem:[%s6 + $0x8] sm:$0xff]
  %v63 = vld [vmem:[%s6 + $0x10] sm:$0xff]
  %v64 = vld [vmem:[%s6 + $0x18] sm:$0xff]
  %v65 = vld [vmem:[%s5] sm:$0x1]
  %v67 = vlaneseq
  %v68 = vshrl.u32 %v67, 7
  %v69 = vsub.s32 0, %v68
  %v70 = vrot.slane %v65, %v69
  %v72 = vld [vmem:[%s7] sm:$0x1]
  %v74 = vlaneseq
  %v75 = vshrl.u32 %v74, 7
  %v76 = vsub.s32 0, %v75
  %v77 = vrot.slane %v72, %v76
  %v79 = vld [vmem:[%s8] sm:$0x1]
  %v81 = vlaneseq
  %v82 = vshrl.u32 %v81, 7
  %v83 = vsub.s32 0, %v82
  %v84 = vrot.slane %v79, %v83
  %v86 = vld [vmem:[#allocation3] sm:$0x1]
  %v88 = vlaneseq
  %v89 = vshrl.u32 %v88, 7
  %v90 = vsub.s32 0, %v89
  %v91 = vrot.slane %v86, %v90
  %v93 = vlaneseq
  %v94 = vand.u32 %v93, 127
  %v95 = vld [vmem:[%s0] sm:$0xff]
  %v96 = vld [vmem:[%s0 + $0x8] sm:$0xff]
  %v97 = vld [vmem:[%s0 + $0x10] sm:$0xff]
  %v98 = vld [vmem:[%s0 + $0x18] sm:$0xff]
  %v99 = vld [vmem:[%s0 + $0x20] sm:$0xff]
  %v100 = vld [vmem:[%s0 + $0x28] sm:$0xff]
  %v101 = vld [vmem:[%s0 + $0x30] sm:$0xff]
  %v102 = vld [vmem:[%s0 + $0x38] sm:$0xff]
  %v103 = vld [vmem:[%s1] sm:$0xff]
  %v104 = vld [vmem:[%s1 + $0x8] sm:$0xff]
  %v105 = vld [vmem:[%s3] sm:$0x1]
  %v107 = vlaneseq
  %v108 = vshrl.u32 %v107, 7
  %v109 = vsub.s32 0, %v108
  %v110 = vrot.slane %v105, %v109
  %vm112 = vcmask 130048
  %v114 = vsel %vm112, %v95, 0
  %v117 = vsel %vm112, %v96, 0
  %v120 = vsel %vm112, %v97, 0
  %v123 = vsel %vm112, %v98, 0
  %v126 = vsel %vm112, %v99, 0
  %v129 = vsel %vm112, %v100, 0
  %v132 = vsel %vm112, %v101, 0
  %v135 = vsel %vm112, %v102, 0
  %137 = vmatprep.subr.mxu0 0.0
  %138 = vmatpush1.msra.mxu0 %v103
  %139 = vmatprep.subr.mxu0 0.0
  %140 = vmatpush1.msra.mxu0 %v104
  %141 = vmatprep.subr.mxu0 0.0
  %142 = vmatpush1.msra.mxu0 0.0
  %143 = vmatprep.subr.mxu0 0.0
  %144 = vmatpush1.msra.mxu0 0.0
  %145 = vmatprep.subr.mxu0 0.0
  %146 = vmatpush1.msra.mxu0 0.0
  %147 = vmatprep.subr.mxu0 0.0
  %148 = vmatpush1.msra.mxu0 0.0
  %149 = vmatprep.subr.mxu0 0.0
  %150 = vmatpush1.msra.mxu0 0.0
  %151 = vmatprep.subr.mxu0 0.0
  %152 = vmatpush1.msra.mxu0 0.0
  %153 = vmatprep.subr.mxu0 0.0
  %154 = vmatpush1.msra.mxu0 0.0
  %155 = vmatprep.subr.mxu0 0.0
  %156 = vmatpush1.msra.mxu0 0.0
  %157 = vmatprep.subr.mxu0 0.0
  %158 = vmatpush1.msra.mxu0 0.0
  %159 = vmatprep.subr.mxu0 0.0
  %160 = vmatpush1.msra.mxu0 0.0
  %161 = vmatprep.subr.mxu0 0.0
  %162 = vmatpush1.msra.mxu0 0.0
  %163 = vmatprep.subr.mxu0 0.0
  %164 = vmatpush1.msra.mxu0 0.0
  %165 = vmatprep.subr.mxu0 0.0
  %166 = vmatpush1.msra.mxu0 0.0
  %167 = vmatprep.subr.mxu0 0.0
  %168 = vmatpush1.msra.mxu0 0.0
  %169 = vmatprep.subr.mxu0 0.0
  %170 = vmatpush1.msra.mxu0 0.0
  %171 = vmatprep.subr.mxu0 0.0
  %172 = vmatpush1.msra.mxu0 0.0
  %173 = vmatprep.subr.mxu0 0.0
  %174 = vmatpush1.msra.mxu0 0.0
  %175 = vmatprep.subr.mxu0 0.0
  %176 = vmatpush1.msra.mxu0 0.0
  %177 = vmatprep.subr.mxu0 0.0
  %178 = vmatpush1.msra.mxu0 0.0
  %179 = vmatprep.subr.mxu0 0.0
  %180 = vmatpush1.msra.mxu0 0.0
  %181 = vmatprep.subr.mxu0 0.0
  %182 = vmatpush1.msra.mxu0 0.0
  %183 = vmatprep.subr.mxu0 0.0
  %184 = vmatpush1.msra.mxu0 0.0
  %185 = vmatprep.subr.mxu0 0.0
  %186 = vmatpush1.msra.mxu0 0.0
  %187 = vmatprep.subr.mxu0 0.0
  %188 = vmatpush1.msra.mxu0 0.0
  %189 = vmatprep.subr.mxu0 0.0
  %190 = vmatpush1.msra.mxu0 0.0
  %191 = vmatprep.subr.mxu0 0.0
  %192 = vmatpush1.msra.mxu0 0.0
  %193 = vmatprep.subr.mxu0 0.0
  %194 = vmatpush1.msra.mxu0 0.0
  %195 = vmatprep.subr.mxu0 0.0
  %196 = vmatpush1.msra.mxu0 0.0
  %197 = vmatprep.subr.mxu0 0.0
  %198 = vmatpush1.msra.mxu0 0.0
  %199 = vmatprep.subr.mxu0 0.0
  %200 = vmatpush1.msra.mxu0 0.0
  %201 = vmatprep.mubr.f32.mxu0 0.0
  %202 = vmatmul.mubr.f32.gmra.mrb[0].mxu0 %v114
  %v203 = vpop.f32.mrb[0].mxu0
  %v204 = vadd.f32 %v110, %v203
  %v205 = vpop.f32.mrb[0].mxu0
  %206 = vmatprep.mubr.f32.mxu0 0.0
  %207 = vmatmul.mubr.f32.gmra.mrb[0].mxu0 %v117
  %v208 = vpop.f32.mrb[0].mxu0
  %v209 = vadd.f32 %v110, %v208
  %v210 = vpop.f32.mrb[0].mxu0
  %211 = vmatprep.mubr.f32.mxu0 0.0
  %212 = vmatmul.mubr.f32.gmra.mrb[0].mxu0 %v120
  %v213 = vpop.f32.mrb[0].mxu0
  %v214 = vadd.f32 %v110, %v213
  %v215 = vpop.f32.mrb[0].mxu0
  %216 = vmatprep.mubr.f32.mxu0 0.0
  %217 = vmatmul.mubr.f32.gmra.mrb[0].mxu0 %v123
  %v218 = vpop.f32.mrb[0].mxu0
  %v219 = vadd.f32 %v110, %v218
  %v220 = vpop.f32.mrb[0].mxu0
  %221 = vmatprep.mubr.f32.mxu0 0.0
  %222 = vmatmul.mubr.f32.gmra.mrb[0].mxu0 %v126
  %v223 = vpop.f32.mrb[0].mxu0
  %v224 = vadd.f32 %v110, %v223
  %v225 = vpop.f32.mrb[0].mxu0
  %226 = vmatprep.mubr.f32.mxu0 0.0
  %227 = vmatmul.mubr.f32.gmra.mrb[0].mxu0 %v129
  %v228 = vpop.f32.mrb[0].mxu0
  %v229 = vadd.f32 %v110, %v228
  %v230 = vpop.f32.mrb[0].mxu0
  %231 = vmatprep.mubr.f32.mxu0 0.0
  %232 = vmatmul.mubr.f32.gmra.mrb[0].mxu0 %v132
  %v233 = vpop.f32.mrb[0].mxu0
  %v234 = vadd.f32 %v110, %v233
  %v235 = vpop.f32.mrb[0].mxu0
  %236 = vmatprep.mubr.f32.mxu0 0.0
  %237 = vmatmul.mubr.f32.gmra.mrb[0].mxu0 %v135
  %v238 = vpop.f32.mrb[0].mxu0
  %v239 = vadd.f32 %v110, %v238
  %v240 = vpop.f32.mrb[0].mxu0
  %241 = vdwg.mxu0
  %242 = vst [vmem:[#allocation2] sm:$0xff] %v204
  %243 = vst [vmem:[#allocation2 + $0x8] sm:$0xff] %v209
  %244 = vst [vmem:[#allocation2 + $0x10] sm:$0xff] %v214
  %245 = vst [vmem:[#allocation2 + $0x18] sm:$0xff] %v219
  %246 = vst [vmem:[#allocation2 + $0x20] sm:$0xff] %v224
  %247 = vst [vmem:[#allocation2 + $0x28] sm:$0xff] %v229
  %248 = vst [vmem:[#allocation2 + $0x30] sm:$0xff] %v234
  %249 = vst [vmem:[#allocation2 + $0x38] sm:$0xff] %v239
  %v250 = vld [vmem:[#allocation2] sm:$0xff]
  %vm251 = vcmask 261120
  %v253 = vsel %vm251, 0.0, 0
  %255 = vmatprep.subr.mxu0 0.0
  %256 = vmatpush1.msra.mxu0 %v49
  %257 = vmatprep.subr.mxu0 0.0
  %258 = vmatpush1.msra.mxu0 %v50
  %259 = vmatprep.subr.mxu0 0.0
  %260 = vmatpush1.msra.mxu0 %v51
  %261 = vmatprep.subr.mxu0 0.0
  %262 = vmatpush1.msra.mxu0 %v52
  %263 = vmatprep.subr.mxu0 0.0
  %264 = vmatpush1.msra.mxu0 0.0
  %265 = vmatprep.subr.mxu0 0.0
  %266 = vmatpush1.msra.mxu0 0.0
  %267 = vmatprep.subr.mxu0 0.0
  %268 = vmatpush1.msra.mxu0 0.0
  %269 = vmatprep.subr.mxu0 0.0
  %270 = vmatpush1.msra.mxu0 0.0
  %271 = vmatprep.subr.mxu0 0.0
  %272 = vmatpush1.msra.mxu0 0.0
  %273 = vmatprep.subr.mxu0 0.0
  %274 = vmatpush1.msra.mxu0 0.0
  %275 = vmatprep.subr.mxu0 0.0
  %276 = vmatpush1.msra.mxu0 0.0
  %277 = vmatprep.subr.mxu0 0.0
  %278 = vmatpush1.msra.mxu0 0.0
  %279 = vmatprep.subr.mxu0 0.0
  %280 = vmatpush1.msra.mxu0 0.0
  %281 = vmatprep.subr.mxu0 0.0
  %282 = vmatpush1.msra.mxu0 0.0
  %283 = vmatprep.subr.mxu0 0.0
  %284 = vmatpush1.msra.mxu0 0.0
  %285 = vmatprep.subr.mxu0 0.0
  %286 = vmatpush1.msra.mxu0 0.0
  %287 = vmatprep.subr.mxu0 0.0
  %288 = vmatpush1.msra.mxu0 0.0
  %289 = vmatprep.subr.mxu0 0.0
  %290 = vmatpush1.msra.mxu0 0.0
  %291 = vmatprep.subr.mxu0 0.0
  %292 = vmatpush1.msra.mxu0 0.0
  %293 = vmatprep.subr.mxu0 0.0
  %294 = vmatpush1.msra.mxu0 0.0
  %295 = vmatprep.subr.mxu0 0.0
  %296 = vmatpush1.msra.mxu0 0.0
  %297 = vmatprep.subr.mxu0 0.0
  %298 = vmatpush1.msra.mxu0 0.0
  %299 = vmatprep.subr.mxu0 0.0
  %300 = vmatpush1.msra.mxu0 0.0
  %301 = vmatprep.subr.mxu0 0.0
  %302 = vmatpush1.msra.mxu0 0.0
  %303 = vmatprep.subr.mxu0 0.0
  %304 = vmatpush1.msra.mxu0 0.0
  %305 = vmatprep.subr.mxu0 0.0
  %306 = vmatpush1.msra.mxu0 0.0
  %307 = vmatprep.subr.mxu0 0.0
  %308 = vmatpush1.msra.mxu0 0.0
  %309 = vmatprep.subr.mxu0 0.0
  %310 = vmatpush1.msra.mxu0 0.0
  %311 = vmatprep.subr.mxu0 0.0
  %312 = vmatpush1.msra.mxu0 0.0
  %313 = vmatprep.subr.mxu0 0.0
  %314 = vmatpush1.msra.mxu0 0.0
  %315 = vmatprep.subr.mxu0 0.0
  %316 = vmatpush1.msra.mxu0 0.0
  %317 = vmatprep.subr.mxu0 0.0
  %318 = vmatpush1.msra.mxu0 0.0
  %319 = vmatprep.mubr.f32.mxu0 0.0
  %320 = vmatmul.mubr.f32.gmra.mrb[0].mxu0 %v253
  %v321 = vpop.f32.mrb[0].mxu0
  %v322 = vadd.f32 0.0, %v321
  %v323 = vpop.f32.mrb[0].mxu0
  %324 = vdwg.mxu0
  %v325 = vadd.f32 %v250, %v322
  %v326 = vxor.u32 %v325, 2147483648
  %v327 = vmul.f32 %v326, 1.442695
  %v328 = vpow.pop %v327
  %v329 = vadd.f32 %v328, 1.0
  %v330 = vrcp.pop %v329
  %v331 = vmul.f32 1.0, %v330
  %v332 = vtanh.pop %v325
  %v333 = vmul.f32 %v331, 0.0
  %335 = vrot.lane.b32.xlu0 %v332, 32
  %v336 = vpop.permute.xlu0 %335
  %v338 = vmul.f32 %v331, %v336
  %340 = vrot.lane.b32.xlu0 %v338, 32
  %v341 = vpop.permute.xlu0 %340
  %v343 = vadd.f32 %v333, %v341
  %v344 = vtanh.pop %v343
  %346 = vrot.lane.b32.xlu0 %v344, 32
  %v347 = vpop.permute.xlu0 %346
  %v349 = vmul.f32 %v331, %v347
  %351 = vrot.lane.b32.xlu0 %v349, 64
  %v352 = vpop.permute.xlu0 %351
  %v354 = vsel %vm251, %v352, 0.0
  %vm355 = vcmask 523264
  %v357 = vsel %vm355, %v354, 0
  %359 = vmatprep.subr.mxu0 0.0
  %360 = vmatpush1.msra.mxu0 %v53
  %361 = vmatprep.subr.mxu0 0.0
  %362 = vmatpush1.msra.mxu0 %v54
  %363 = vmatprep.subr.mxu0 0.0
  %364 = vmatpush1.msra.mxu0 %v55
  %365 = vmatprep.subr.mxu0 0.0
  %366 = vmatpush1.msra.mxu0 %v56
  %367 = vmatprep.subr.mxu0 0.0
  %368 = vmatpush1.msra.mxu0 %v57
  %369 = vmatprep.subr.mxu0 0.0
  %370 = vmatpush1.msra.mxu0 %v58
  %371 = vmatprep.subr.mxu0 0.0
  %372 = vmatpush1.msra.mxu0 %v59
  %373 = vmatprep.subr.mxu0 0.0
  %374 = vmatpush1.msra.mxu0 %v60
  %375 = vmatprep.subr.mxu0 0.0
  %376 = vmatpush1.msra.mxu0 0.0
  %377 = vmatprep.subr.mxu0 0.0
  %378 = vmatpush1.msra.mxu0 0.0
  %379 = vmatprep.subr.mxu0 0.0
  %380 = vmatpush1.msra.mxu0 0.0
  %381 = vmatprep.subr.mxu0 0.0
  %382 = vmatpush1.msra.mxu0 0.0
  %383 = vmatprep.subr.mxu0 0.0
  %384 = vmatpush1.msra.mxu0 0.0
  %385 = vmatprep.subr.mxu0 0.0
  %386 = vmatpush1.msra.mxu0 0.0
  %387 = vmatprep.subr.mxu0 0.0
  %388 = vmatpush1.msra.mxu0 0.0
  %389 = vmatprep.subr.mxu0 0.0
  %390 = vmatpush1.msra.mxu0 0.0
  %391 = vmatprep.subr.mxu0 0.0
  %392 = vmatpush1.msra.mxu0 0.0
  %393 = vmatprep.subr.mxu0 0.0
  %394 = vmatpush1.msra.mxu0 0.0
  %395 = vmatprep.subr.mxu0 0.0
  %396 = vmatpush1.msra.mxu0 0.0
  %397 = vmatprep.subr.mxu0 0.0
  %398 = vmatpush1.msra.mxu0 0.0
  %399 = vmatprep.subr.mxu0 0.0
  %400 = vmatpush1.msra.mxu0 0.0
  %401 = vmatprep.subr.mxu0 0.0
  %402 = vmatpush1.msra.mxu0 0.0
  %403 = vmatprep.subr.mxu0 0.0
  %404 = vmatpush1.msra.mxu0 0.0
  %405 = vmatprep.subr.mxu0 0.0
  %406 = vmatpush1.msra.mxu0 0.0
  %407 = vmatprep.subr.mxu0 0.0
  %408 = vmatpush1.msra.mxu0 0.0
  %409 = vmatprep.subr.mxu0 0.0
  %410 = vmatpush1.msra.mxu0 0.0
  %411 = vmatprep.subr.mxu0 0.0
  %412 = vmatpush1.msra.mxu0 0.0
  %413 = vmatprep.subr.mxu0 0.0
  %414 = vmatpush1.msra.mxu0 0.0
  %415 = vmatprep.subr.mxu0 0.0
  %416 = vmatpush1.msra.mxu0 0.0
  %417 = vmatprep.subr.mxu0 0.0
  %418 = vmatpush1.msra.mxu0 0.0
  %419 = vmatprep.subr.mxu0 0.0
  %420 = vmatpush1.msra.mxu0 0.0
  %421 = vmatprep.subr.mxu0 0.0
  %422 = vmatpush1.msra.mxu0 0.0
  %423 = vmatprep.mubr.f32.mxu0 0.0
  %424 = vmatmul.mubr.f32.gmra.mrb[0].mxu0 %v357
  %v425 = vpop.f32.mrb[0].mxu0
  %v426 = vadd.f32 %v70, %v425
  %v427 = vpop.f32.mrb[0].mxu0
  %428 = vdwg.mxu0
  %v429 = vxor.u32 %v426, 2147483648
  %v430 = vmul.f32 %v429, 1.442695
  %v431 = vpow.pop %v430
  %v432 = vadd.f32 %v431, 1.0
  %v433 = vrcp.pop %v432
  %v434 = vmul.f32 1.0, %v433
  %v435 = vtanh.pop %v426
  %v436 = vmul.f32 %v434, 0.0
  %438 = vrot.lane.b32.xlu0 %v435, 32
  %v439 = vpop.permute.xlu0 %438
  %v441 = vmul.f32 %v434, %v439
  %443 = vrot.lane.b32.xlu0 %v441, 32
  %v444 = vpop.permute.xlu0 %443
  %v446 = vadd.f32 %v436, %v444
  %v447 = vtanh.pop %v446
  %449 = vrot.lane.b32.xlu0 %v447, 32
  %v450 = vpop.permute.xlu0 %449
  %v452 = vmul.f32 %v434, %v450
  %454 = vrot.lane.b32.xlu0 %v452, 64
  %v455 = vpop.permute.xlu0 %454
  %v456 = vsel %vm251, %v455, 0
  %458 = vmatprep.subr.mxu0 0.0
  %459 = vmatpush1.msra.mxu0 %v61
  %460 = vmatprep.subr.mxu0 0.0
  %461 = vmatpush1.msra.mxu0 %v62
  %462 = vmatprep.subr.mxu0 0.0
  %463 = vmatpush1.msra.mxu0 %v63
  %464 = vmatprep.subr.mxu0 0.0
  %465 = vmatpush1.msra.mxu0 %v64
  %466 = vmatprep.subr.mxu0 0.0
  %467 = vmatpush1.msra.mxu0 0.0
  %468 = vmatprep.subr.mxu0 0.0
  %469 = vmatpush1.msra.mxu0 0.0
  %470 = vmatprep.subr.mxu0 0.0
  %471 = vmatpush1.msra.mxu0 0.0
  %472 = vmatprep.subr.mxu0 0.0
  %473 = vmatpush1.msra.mxu0 0.0
  %474 = vmatprep.subr.mxu0 0.0
  %475 = vmatpush1.msra.mxu0 0.0
  %476 = vmatprep.subr.mxu0 0.0
  %477 = vmatpush1.msra.mxu0 0.0
  %478 = vmatprep.subr.mxu0 0.0
  %479 = vmatpush1.msra.mxu0 0.0
  %480 = vmatprep.subr.mxu0 0.0
  %481 = vmatpush1.msra.mxu0 0.0
  %482 = vmatprep.subr.mxu0 0.0
  %483 = vmatpush1.msra.mxu0 0.0
  %484 = vmatprep.subr.mxu0 0.0
  %485 = vmatpush1.msra.mxu0 0.0
  %486 = vmatprep.subr.mxu0 0.0
  %487 = vmatpush1.msra.mxu0 0.0
  %488 = vmatprep.subr.mxu0 0.0
  %489 = vmatpush1.msra.mxu0 0.0
  %490 = vmatprep.subr.mxu0 0.0
  %491 = vmatpush1.msra.mxu0 0.0
  %492 = vmatprep.subr.mxu0 0.0
  %493 = vmatpush1.msra.mxu0 0.0
  %494 = vmatprep.subr.mxu0 0.0
  %495 = vmatpush1.msra.mxu0 0.0
  %496 = vmatprep.subr.mxu0 0.0
  %497 = vmatpush1.msra.mxu0 0.0
  %498 = vmatprep.subr.mxu0 0.0
  %499 = vmatpush1.msra.mxu0 0.0
  %500 = vmatprep.subr.mxu0 0.0
  %501 = vmatpush1.msra.mxu0 0.0
  %502 = vmatprep.subr.mxu0 0.0
  %503 = vmatpush1.msra.mxu0 0.0
  %504 = vmatprep.subr.mxu0 0.0
  %505 = vmatpush1.msra.mxu0 0.0
  %506 = vmatprep.subr.mxu0 0.0
  %507 = vmatpush1.msra.mxu0 0.0
  %508 = vmatprep.subr.mxu0 0.0
  %509 = vmatpush1.msra.mxu0 0.0
  %510 = vmatprep.subr.mxu0 0.0
  %511 = vmatpush1.msra.mxu0 0.0
  %512 = vmatprep.subr.mxu0 0.0
  %513 = vmatpush1.msra.mxu0 0.0
  %514 = vmatprep.subr.mxu0 0.0
  %515 = vmatpush1.msra.mxu0 0.0
  %516 = vmatprep.subr.mxu0 0.0
  %517 = vmatpush1.msra.mxu0 0.0
  %518 = vmatprep.subr.mxu0 0.0
  %519 = vmatpush1.msra.mxu0 0.0
  %520 = vmatprep.subr.mxu0 0.0
  %521 = vmatpush1.msra.mxu0 0.0
  %522 = vmatprep.mubr.f32.mxu0 0.0
  %523 = vmatmul.mubr.f32.gmra.mrb[0].mxu0 %v456
  %v524 = vpop.f32.mrb[0].mxu0
  %v525 = vadd.f32 %v77, %v524
  %v526 = vpop.f32.mrb[0].mxu0
  %527 = vdwg.mxu0
  %v528 = vtanh.pop %v525
  %v529 = vmul.f32 %v528, %v84
  %v530 = vsel %vm112, %v529, 0.0
  %531 = vadd.xlane.f32.xlu0 %v530
  %v532 = vpop.xlane.xlu0 %531
  %v533 = vadd.f32 %v532, %v91
  %vm534 = vcmp.eq.s32.totalorder %v94, 0
  %536 = vset.pattern.permute.xlu0 0
  %537 = vperm.xlu0 %536, %v533
  %v538 = vpop.permute.xlu0 %537
  %v540 = vsel %vm534, %v538, 0.0
  %v541 = vmax.f32 %v533, -1e+30
  %v542 = vsub.f32 -1e+30, %v541
  %v543 = vmul.f32 %v542, 1.442695
  %v544 = vpow.pop %v543
  %v545 = vsub.f32 %v533, %v541
  %v546 = vmul.f32 %v545, 1.442695
  %v547 = vpow.pop %v546
  %v548 = vmul.f32 %v544, 0.0
  %v549 = vadd.f32 %v548, %v547
  %551 = vset.pattern.permute.xlu0 0
  %552 = vperm.xlu0 %551, %v544
  %v553 = vpop.permute.xlu0 %552
  %v555 = vmul.f32 %v553, 0.0
  %557 = vset.pattern.permute.xlu0 0
  %558 = vperm.xlu0 %557, %v547
  %v559 = vpop.permute.xlu0 %558
  %v561 = vmul.f32 %v559, %v452
  %v562 = vadd.f32 %v555, %v561
  %s563 = scalar_lea.vmem [#allocation2], 8
  %v564 = vld [vmem:[%s563] sm:$0xff]
  %v565 = vsel %vm251, %v352, 0
  %567 = vmatprep.subr.mxu0 0.0
  %568 = vmatpush1.msra.mxu0 %v49
  %569 = vmatprep.subr.mxu0 0.0
  %570 = vmatpush1.msra.mxu0 %v50
  %571 = vmatprep.subr.mxu0 0.0
  %572 = vmatpush1.msra.mxu0 %v51
  %573 = vmatprep.subr.mxu0 0.0
  %574 = vmatpush1.msra.mxu0 %v52
  %575 = vmatprep.subr.mxu0 0.0
  %576 = vmatpush1.msra.mxu0 0.0
  %577 = vmatprep.subr.mxu0 0.0
  %578 = vmatpush1.msra.mxu0 0.0
  %579 = vmatprep.subr.mxu0 0.0
  %580 = vmatpush1.msra.mxu0 0.0
  %581 = vmatprep.subr.mxu0 0.0
  %582 = vmatpush1.msra.mxu0 0.0
  %583 = vmatprep.subr.mxu0 0.0
  %584 = vmatpush1.msra.mxu0 0.0
  %585 = vmatprep.subr.mxu0 0.0
  %586 = vmatpush1.msra.mxu0 0.0
  %587 = vmatprep.subr.mxu0 0.0
  %588 = vmatpush1.msra.mxu0 0.0
  %589 = vmatprep.subr.mxu0 0.0
  %590 = vmatpush1.msra.mxu0 0.0
  %591 = vmatprep.subr.mxu0 0.0
  %592 = vmatpush1.msra.mxu0 0.0
  %593 = vmatprep.subr.mxu0 0.0
  %594 = vmatpush1.msra.mxu0 0.0
  %595 = vmatprep.subr.mxu0 0.0
  %596 = vmatpush1.msra.mxu0 0.0
  %597 = vmatprep.subr.mxu0 0.0
  %598 = vmatpush1.msra.mxu0 0.0
  %599 = vmatprep.subr.mxu0 0.0
  %600 = vmatpush1.msra.mxu0 0.0
  %601 = vmatprep.subr.mxu0 0.0
  %602 = vmatpush1.msra.mxu0 0.0
  %603 = vmatprep.subr.mxu0 0.0
  %604 = vmatpush1.msra.mxu0 0.0
  %605 = vmatprep.subr.mxu0 0.0
  %606 = vmatpush1.msra.mxu0 0.0
  %607 = vmatprep.subr.mxu0 0.0
  %608 = vmatpush1.msra.mxu0 0.0
  %609 = vmatprep.subr.mxu0 0.0
  %610 = vmatpush1.msra.mxu0 0.0
  %611 = vmatprep.subr.mxu0 0.0
  %612 = vmatpush1.msra.mxu0 0.0
  %613 = vmatprep.subr.mxu0 0.0
  %614 = vmatpush1.msra.mxu0 0.0
  %615 = vmatprep.subr.mxu0 0.0
  %616 = vmatpush1.msra.mxu0 0.0
  %617 = vmatprep.subr.mxu0 0.0
  %618 = vmatpush1.msra.mxu0 0.0
  %619 = vmatprep.subr.mxu0 0.0
  %620 = vmatpush1.msra.mxu0 0.0
  %621 = vmatprep.subr.mxu0 0.0
  %622 = vmatpush1.msra.mxu0 0.0
  %623 = vmatprep.subr.mxu0 0.0
  %624 = vmatpush1.msra.mxu0 0.0
  %625 = vmatprep.subr.mxu0 0.0
  %626 = vmatpush1.msra.mxu0 0.0
  %627 = vmatprep.subr.mxu0 0.0
  %628 = vmatpush1.msra.mxu0 0.0
  %629 = vmatprep.subr.mxu0 0.0
  %630 = vmatpush1.msra.mxu0 0.0
  %631 = vmatprep.mubr.f32.mxu0 0.0
  %632 = vmatmul.mubr.f32.gmra.mrb[0].mxu0 %v565
  %v633 = vpop.f32.mrb[0].mxu0
  %v634 = vadd.f32 0.0, %v633
  %v635 = vpop.f32.mrb[0].mxu0
  %636 = vdwg.mxu0
  %v637 = vadd.f32 %v564, %v634
  %v638 = vxor.u32 %v637, 2147483648
  %v639 = vmul.f32 %v638, 1.442695
  %v640 = vpow.pop %v639
  %v641 = vadd.f32 %v640, 1.0
  %v642 = vrcp.pop %v641
  %v643 = vmul.f32 1.0, %v642
  %v644 = vtanh.pop %v637
  %v645 = vmul.f32 %v643, %v343
  %647 = vrot.lane.b32.xlu0 %v644, 32
  %v648 = vpop.permute.xlu0 %647
  %v650 = vmul.f32 %v643, %v648
  %652 = vrot.lane.b32.xlu0 %v650, 32
  %v653 = vpop.permute.xlu0 %652
  %v655 = vadd.f32 %v645, %v653
  %v656 = vtanh.pop %v655
  %658 = vrot.lane.b32.xlu0 %v656, 32
  %v659 = vpop.permute.xlu0 %658
  %v661 = vmul.f32 %v643, %v659
  %663 = vrot.lane.b32.xlu0 %v661, 64
  %v664 = vpop.permute.xlu0 %663
  %666 = vrot.lane.b32.xlu0 %v452, 96
  %v667 = vpop.permute.xlu0 %666
  %v669 = vsel %vm251, %v664, %v667
  %v671 = vsel %vm355, %v669, 0
  %673 = vmatprep.subr.mxu0 0.0
  %674 = vmatpush1.msra.mxu0 %v53
  %675 = vmatprep.subr.mxu0 0.0
  %676 = vmatpush1.msra.mxu0 %v54
  %677 = vmatprep.subr.mxu0 0.0
  %678 = vmatpush1.msra.mxu0 %v55
  %679 = vmatprep.subr.mxu0 0.0
  %680 = vmatpush1.msra.mxu0 %v56
  %681 = vmatprep.subr.mxu0 0.0
  %682 = vmatpush1.msra.mxu0 %v57
  %683 = vmatprep.subr.mxu0 0.0
  %684 = vmatpush1.msra.mxu0 %v58
  %685 = vmatprep.subr.mxu0 0.0
  %686 = vmatpush1.msra.mxu0 %v59
  %687 = vmatprep.subr.mxu0 0.0
  %688 = vmatpush1.msra.mxu0 %v60
  %689 = vmatprep.subr.mxu0 0.0
  %690 = vmatpush1.msra.mxu0 0.0
  %691 = vmatprep.subr.mxu0 0.0
  %692 = vmatpush1.msra.mxu0 0.0
  %693 = vmatprep.subr.mxu0 0.0
  %694 = vmatpush1.msra.mxu0 0.0
  %695 = vmatprep.subr.mxu0 0.0
  %696 = vmatpush1.msra.mxu0 0.0
  %697 = vmatprep.subr.mxu0 0.0
  %698 = vmatpush1.msra.mxu0 0.0
  %699 = vmatprep.subr.mxu0 0.0
  %700 = vmatpush1.msra.mxu0 0.0
  %701 = vmatprep.subr.mxu0 0.0
  %702 = vmatpush1.msra.mxu0 0.0
  %703 = vmatprep.subr.mxu0 0.0
  %704 = vmatpush1.msra.mxu0 0.0
  %705 = vmatprep.subr.mxu0 0.0
  %706 = vmatpush1.msra.mxu0 0.0
  %707 = vmatprep.subr.mxu0 0.0
  %708 = vmatpush1.msra.mxu0 0.0
  %709 = vmatprep.subr.mxu0 0.0
  %710 = vmatpush1.msra.mxu0 0.0
  %711 = vmatprep.subr.mxu0 0.0
  %712 = vmatpush1.msra.mxu0 0.0
  %713 = vmatprep.subr.mxu0 0.0
  %714 = vmatpush1.msra.mxu0 0.0
  %715 = vmatprep.subr.mxu0 0.0
  %716 = vmatpush1.msra.mxu0 0.0
  %717 = vmatprep.subr.mxu0 0.0
  %718 = vmatpush1.msra.mxu0 0.0
  %719 = vmatprep.subr.mxu0 0.0
  %720 = vmatpush1.msra.mxu0 0.0
  %721 = vmatprep.subr.mxu0 0.0
  %722 = vmatpush1.msra.mxu0 0.0
  %723 = vmatprep.subr.mxu0 0.0
  %724 = vmatpush1.msra.mxu0 0.0
  %725 = vmatprep.subr.mxu0 0.0
  %726 = vmatpush1.msra.mxu0 0.0
  %727 = vmatprep.subr.mxu0 0.0
  %728 = vmatpush1.msra.mxu0 0.0
  %729 = vmatprep.subr.mxu0 0.0
  %730 = vmatpush1.msra.mxu0 0.0
  %731 = vmatprep.subr.mxu0 0.0
  %732 = vmatpush1.msra.mxu0 0.0
  %733 = vmatprep.subr.mxu0 0.0
  %734 = vmatpush1.msra.mxu0 0.0
  %735 = vmatprep.subr.mxu0 0.0
  %736 = vmatpush1.msra.mxu0 0.0
  %737 = vmatprep.mubr.f32.mxu0 0.0
  %738 = vmatmul.mubr.f32.gmra.mrb[0].mxu0 %v671
  %v739 = vpop.f32.mrb[0].mxu0
  %v740 = vadd.f32 %v70, %v739
  %v741 = vpop.f32.mrb[0].mxu0
  %742 = vdwg.mxu0
  %v743 = vxor.u32 %v740, 2147483648
  %v744 = vmul.f32 %v743, 1.442695
  %v745 = vpow.pop %v744
  %v746 = vadd.f32 %v745, 1.0
  %v747 = vrcp.pop %v746
  %v748 = vmul.f32 1.0, %v747
  %v749 = vtanh.pop %v740
  %v750 = vmul.f32 %v748, %v446
  %752 = vrot.lane.b32.xlu0 %v749, 32
  %v753 = vpop.permute.xlu0 %752
  %v755 = vmul.f32 %v748, %v753
  %757 = vrot.lane.b32.xlu0 %v755, 32
  %v758 = vpop.permute.xlu0 %757
  %v760 = vadd.f32 %v750, %v758
  %v761 = vtanh.pop %v760
  %763 = vrot.lane.b32.xlu0 %v761, 32
  %v764 = vpop.permute.xlu0 %763
  %v766 = vmul.f32 %v748, %v764
  %768 = vrot.lane.b32.xlu0 %v766, 64
  %v769 = vpop.permute.xlu0 %768
  %v770 = vsel %vm251, %v769, 0
  %772 = vmatprep.subr.mxu0 0.0
  %773 = vmatpush1.msra.mxu0 %v61
  %774 = vmatprep.subr.mxu0 0.0
  %775 = vmatpush1.msra.mxu0 %v62
  %776 = vmatprep.subr.mxu0 0.0
  %777 = vmatpush1.msra.mxu0 %v63
  %778 = vmatprep.subr.mxu0 0.0
  %779 = vmatpush1.msra.mxu0 %v64
  %780 = vmatprep.subr.mxu0 0.0
  %781 = vmatpush1.msra.mxu0 0.0
  %782 = vmatprep.subr.mxu0 0.0
  %783 = vmatpush1.msra.mxu0 0.0
  %784 = vmatprep.subr.mxu0 0.0
  %785 = vmatpush1.msra.mxu0 0.0
  %786 = vmatprep.subr.mxu0 0.0
  %787 = vmatpush1.msra.mxu0 0.0
  %788 = vmatprep.subr.mxu0 0.0
  %789 = vmatpush1.msra.mxu0 0.0
  %790 = vmatprep.subr.mxu0 0.0
  %791 = vmatpush1.msra.mxu0 0.0
  %792 = vmatprep.subr.mxu0 0.0
  %793 = vmatpush1.msra.mxu0 0.0
  %794 = vmatprep.subr.mxu0 0.0
  %795 = vmatpush1.msra.mxu0 0.0
  %796 = vmatprep.subr.mxu0 0.0
  %797 = vmatpush1.msra.mxu0 0.0
  %798 = vmatprep.subr.mxu0 0.0
  %799 = vmatpush1.msra.mxu0 0.0
  %800 = vmatprep.subr.mxu0 0.0
  %801 = vmatpush1.msra.mxu0 0.0
  %802 = vmatprep.subr.mxu0 0.0
  %803 = vmatpush1.msra.mxu0 0.0
  %804 = vmatprep.subr.mxu0 0.0
  %805 = vmatpush1.msra.mxu0 0.0
  %806 = vmatprep.subr.mxu0 0.0
  %807 = vmatpush1.msra.mxu0 0.0
  %808 = vmatprep.subr.mxu0 0.0
  %809 = vmatpush1.msra.mxu0 0.0
  %810 = vmatprep.subr.mxu0 0.0
  %811 = vmatpush1.msra.mxu0 0.0
  %812 = vmatprep.subr.mxu0 0.0
  %813 = vmatpush1.msra.mxu0 0.0
  %814 = vmatprep.subr.mxu0 0.0
  %815 = vmatpush1.msra.mxu0 0.0
  %816 = vmatprep.subr.mxu0 0.0
  %817 = vmatpush1.msra.mxu0 0.0
  %818 = vmatprep.subr.mxu0 0.0
  %819 = vmatpush1.msra.mxu0 0.0
  %820 = vmatprep.subr.mxu0 0.0
  %821 = vmatpush1.msra.mxu0 0.0
  %822 = vmatprep.subr.mxu0 0.0
  %823 = vmatpush1.msra.mxu0 0.0
  %824 = vmatprep.subr.mxu0 0.0
  %825 = vmatpush1.msra.mxu0 0.0
  %826 = vmatprep.subr.mxu0 0.0
  %827 = vmatpush1.msra.mxu0 0.0
  %828 = vmatprep.subr.mxu0 0.0
  %829 = vmatpush1.msra.mxu0 0.0
  %830 = vmatprep.subr.mxu0 0.0
  %831 = vmatpush1.msra.mxu0 0.0
  %832 = vmatprep.subr.mxu0 0.0
  %833 = vmatpush1.msra.mxu0 0.0
  %834 = vmatprep.subr.mxu0 0.0
  %835 = vmatpush1.msra.mxu0 0.0
  %836 = vmatprep.mubr.f32.mxu0 0.0
  %837 = vmatmul.mubr.f32.gmra.mrb[0].mxu0 %v770
  %v838 = vpop.f32.mrb[0].mxu0
  %v839 = vadd.f32 %v77, %v838
  %v840 = vpop.f32.mrb[0].mxu0
  %841 = vdwg.mxu0
  %v842 = vtanh.pop %v839
  %v843 = vmul.f32 %v842, %v84
  %v844 = vsel %vm112, %v843, 0.0
  %845 = vadd.xlane.f32.xlu0 %v844
  %v846 = vpop.xlane.xlu0 %845
  %v847 = vadd.f32 %v846, %v91
  %vm848 = vcmp.eq.s32.totalorder %v94, 1
  %850 = vset.pattern.permute.xlu0 0
  %851 = vperm.xlu0 %850, %v847
  %v852 = vpop.permute.xlu0 %851
  %v854 = vsel %vm848, %v852, %v540
  %v855 = vmax.f32 %v541, %v847
  %v856 = vsub.f32 %v541, %v855
  %v857 = vmul.f32 %v856, 1.442695
  %v858 = vpow.pop %v857
  %v859 = vsub.f32 %v847, %v855
  %v860 = vmul.f32 %v859, 1.442695
  %v861 = vpow.pop %v860
  %v862 = vmul.f32 %v858, %v549
  %v863 = vadd.f32 %v862, %v861
  %865 = vset.pattern.permute.xlu0 0
  %866 = vperm.xlu0 %865, %v858
  %v867 = vpop.permute.xlu0 %866
  %v869 = vmul.f32 %v867, %v562
  %871 = vset.pattern.permute.xlu0 0
  %872 = vperm.xlu0 %871, %v861
  %v873 = vpop.permute.xlu0 %872
  %v875 = vmul.f32 %v873, %v766
  %v876 = vadd.f32 %v869, %v875
  %s877 = scalar_lea.vmem [#allocation2], 16
  %v878 = vld [vmem:[%s877] sm:$0xff]
  %v879 = vsel %vm251, %v664, 0
  %881 = vmatprep.subr.mxu0 0.0
  %882 = vmatpush1.msra.mxu0 %v49
  %883 = vmatprep.subr.mxu0 0.0
  %884 = vmatpush1.msra.mxu0 %v50
  %885 = vmatprep.subr.mxu0 0.0
  %886 = vmatpush1.msra.mxu0 %v51
  %887 = vmatprep.subr.mxu0 0.0
  %888 = vmatpush1.msra.mxu0 %v52
  %889 = vmatprep.subr.mxu0 0.0
  %890 = vmatpush1.msra.mxu0 0.0
  %891 = vmatprep.subr.mxu0 0.0
  %892 = vmatpush1.msra.mxu0 0.0
  %893 = vmatprep.subr.mxu0 0.0
  %894 = vmatpush1.msra.mxu0 0.0
  %895 = vmatprep.subr.mxu0 0.0
  %896 = vmatpush1.msra.mxu0 0.0
  %897 = vmatprep.subr.mxu0 0.0
  %898 = vmatpush1.msra.mxu0 0.0
  %899 = vmatprep.subr.mxu0 0.0
  %900 = vmatpush1.msra.mxu0 0.0
  %901 = vmatprep.subr.mxu0 0.0
  %902 = vmatpush1.msra.mxu0 0.0
  %903 = vmatprep.subr.mxu0 0.0
  %904 = vmatpush1.msra.mxu0 0.0
  %905 = vmatprep.subr.mxu0 0.0
  %906 = vmatpush1.msra.mxu0 0.0
  %907 = vmatprep.subr.mxu0 0.0
  %908 = vmatpush1.msra.mxu0 0.0
  %909 = vmatprep.subr.mxu0 0.0
  %910 = vmatpush1.msra.mxu0 0.0
  %911 = vmatprep.subr.mxu0 0.0
  %912 = vmatpush1.msra.mxu0 0.0
  %913 = vmatprep.subr.mxu0 0.0
  %914 = vmatpush1.msra.mxu0 0.0
  %915 = vmatprep.subr.mxu0 0.0
  %916 = vmatpush1.msra.mxu0 0.0
  %917 = vmatprep.subr.mxu0 0.0
  %918 = vmatpush1.msra.mxu0 0.0
  %919 = vmatprep.subr.mxu0 0.0
  %920 = vmatpush1.msra.mxu0 0.0
  %921 = vmatprep.subr.mxu0 0.0
  %922 = vmatpush1.msra.mxu0 0.0
  %923 = vmatprep.subr.mxu0 0.0
  %924 = vmatpush1.msra.mxu0 0.0
  %925 = vmatprep.subr.mxu0 0.0
  %926 = vmatpush1.msra.mxu0 0.0
  %927 = vmatprep.subr.mxu0 0.0
  %928 = vmatpush1.msra.mxu0 0.0
  %929 = vmatprep.subr.mxu0 0.0
  %930 = vmatpush1.msra.mxu0 0.0
  %931 = vmatprep.subr.mxu0 0.0
  %932 = vmatpush1.msra.mxu0 0.0
  %933 = vmatprep.subr.mxu0 0.0
  %934 = vmatpush1.msra.mxu0 0.0
  %935 = vmatprep.subr.mxu0 0.0
  %936 = vmatpush1.msra.mxu0 0.0
  %937 = vmatprep.subr.mxu0 0.0
  %938 = vmatpush1.msra.mxu0 0.0
  %939 = vmatprep.subr.mxu0 0.0
  %940 = vmatpush1.msra.mxu0 0.0
  %941 = vmatprep.subr.mxu0 0.0
  %942 = vmatpush1.msra.mxu0 0.0
  %943 = vmatprep.subr.mxu0 0.0
  %944 = vmatpush1.msra.mxu0 0.0
  %945 = vmatprep.mubr.f32.mxu0 0.0
  %946 = vmatmul.mubr.f32.gmra.mrb[0].mxu0 %v879
  %v947 = vpop.f32.mrb[0].mxu0
  %v948 = vadd.f32 0.0, %v947
  %v949 = vpop.f32.mrb[0].mxu0
  %950 = vdwg.mxu0
  %v951 = vadd.f32 %v878, %v948
  %v952 = vxor.u32 %v951, 2147483648
  %v953 = vmul.f32 %v952, 1.442695
  %v954 = vpow.pop %v953
  %v955 = vadd.f32 %v954, 1.0
  %v956 = vrcp.pop %v955
  %v957 = vmul.f32 1.0, %v956
  %v958 = vtanh.pop %v951
  %v959 = vmul.f32 %v957, %v655
  %961 = vrot.lane.b32.xlu0 %v958, 32
  %v962 = vpop.permute.xlu0 %961
  %v964 = vmul.f32 %v957, %v962
  %966 = vrot.lane.b32.xlu0 %v964, 32
  %v967 = vpop.permute.xlu0 %966
  %v969 = vadd.f32 %v959, %v967
  %v970 = vtanh.pop %v969
  %972 = vrot.lane.b32.xlu0 %v970, 32
  %v973 = vpop.permute.xlu0 %972
  %v975 = vmul.f32 %v957, %v973
  %977 = vrot.lane.b32.xlu0 %v975, 64
  %v978 = vpop.permute.xlu0 %977
  %980 = vrot.lane.b32.xlu0 %v766, 96
  %v981 = vpop.permute.xlu0 %980
  %v983 = vsel %vm251, %v978, %v981
  %v985 = vsel %vm355, %v983, 0
  %987 = vmatprep.subr.mxu0 0.0
  %988 = vmatpush1.msra.mxu0 %v53
  %989 = vmatprep.subr.mxu0 0.0
  %990 = vmatpush1.msra.mxu0 %v54
  %991 = vmatprep.subr.mxu0 0.0
  %992 = vmatpush1.msra.mxu0 %v55
  %993 = vmatprep.subr.mxu0 0.0
  %994 = vmatpush1.msra.mxu0 %v56
  %995 = vmatprep.subr.mxu0 0.0
  %996 = vmatpush1.msra.mxu0 %v57
  %997 = vmatprep.subr.mxu0 0.0
  %998 = vmatpush1.msra.mxu0 %v58
  %999 = vmatprep.subr.mxu0 0.0
  %1000 = vmatpush1.msra.mxu0 %v59
  %1001 = vmatprep.subr.mxu0 0.0
  %1002 = vmatpush1.msra.mxu0 %v60
  %1003 = vmatprep.subr.mxu0 0.0
  %1004 = vmatpush1.msra.mxu0 0.0
  %1005 = vmatprep.subr.mxu0 0.0
  %1006 = vmatpush1.msra.mxu0 0.0
  %1007 = vmatprep.subr.mxu0 0.0
  %1008 = vmatpush1.msra.mxu0 0.0
  %1009 = vmatprep.subr.mxu0 0.0
  %1010 = vmatpush1.msra.mxu0 0.0
  %1011 = vmatprep.subr.mxu0 0.0
  %1012 = vmatpush1.msra.mxu0 0.0
  %1013 = vmatprep.subr.mxu0 0.0
  %1014 = vmatpush1.msra.mxu0 0.0
  %1015 = vmatprep.subr.mxu0 0.0
  %1016 = vmatpush1.msra.mxu0 0.0
  %1017 = vmatprep.subr.mxu0 0.0
  %1018 = vmatpush1.msra.mxu0 0.0
  %1019 = vmatprep.subr.mxu0 0.0
  %1020 = vmatpush1.msra.mxu0 0.0
  %1021 = vmatprep.subr.mxu0 0.0
  %1022 = vmatpush1.msra.mxu0 0.0
  %1023 = vmatprep.subr.mxu0 0.0
  %1024 = vmatpush1.msra.mxu0 0.0
  %1025 = vmatprep.subr.mxu0 0.0
  %1026 = vmatpush1.msra.mxu0 0.0
  %1027 = vmatprep.subr.mxu0 0.0
  %1028 = vmatpush1.msra.mxu0 0.0
  %1029 = vmatprep.subr.mxu0 0.0
  %1030 = vmatpush1.msra.mxu0 0.0
  %1031 = vmatprep.subr.mxu0 0.0
  %1032 = vmatpush1.msra.mxu0 0.0
  %1033 = vmatprep.subr.mxu0 0.0
  %1034 = vmatpush1.msra.mxu0 0.0
  %1035 = vmatprep.subr.mxu0 0.0
  %1036 = vmatpush1.msra.mxu0 0.0
  %1037 = vmatprep.subr.mxu0 0.0
  %1038 = vmatpush1.msra.mxu0 0.0
  %1039 = vmatprep.subr.mxu0 0.0
  %1040 = vmatpush1.msra.mxu0 0.0
  %1041 = vmatprep.subr.mxu0 0.0
  %1042 = vmatpush1.msra.mxu0 0.0
  %1043 = vmatprep.subr.mxu0 0.0
  %1044 = vmatpush1.msra.mxu0 0.0
  %1045 = vmatprep.subr.mxu0 0.0
  %1046 = vmatpush1.msra.mxu0 0.0
  %1047 = vmatprep.subr.mxu0 0.0
  %1048 = vmatpush1.msra.mxu0 0.0
  %1049 = vmatprep.subr.mxu0 0.0
  %1050 = vmatpush1.msra.mxu0 0.0
  %1051 = vmatprep.mubr.f32.mxu0 0.0
  %1052 = vmatmul.mubr.f32.gmra.mrb[0].mxu0 %v985
  %v1053 = vpop.f32.mrb[0].mxu0
  %v1054 = vadd.f32 %v70, %v1053
  %v1055 = vpop.f32.mrb[0].mxu0
  %1056 = vdwg.mxu0
  %v1057 = vxor.u32 %v1054, 2147483648
  %v1058 = vmul.f32 %v1057, 1.442695
  %v1059 = vpow.pop %v1058
  %v1060 = vadd.f32 %v1059, 1.0
  %v1061 = vrcp.pop %v1060
  %v1062 = vmul.f32 1.0, %v1061
  %v1063 = vtanh.pop %v1054
  %v1064 = vmul.f32 %v1062, %v760
  %1066 = vrot.lane.b32.xlu0 %v1063, 32
  %v1067 = vpop.permute.xlu0 %1066
  %v1069 = vmul.f32 %v1062, %v1067
  %1071 = vrot.lane.b32.xlu0 %v1069, 32
  %v1072 = vpop.permute.xlu0 %1071
  %v1074 = vadd.f32 %v1064, %v1072
  %v1075 = vtanh.pop %v1074
  %1077 = vrot.lane.b32.xlu0 %v1075, 32
  %v1078 = vpop.permute.xlu0 %1077
  %v1080 = vmul.f32 %v1062, %v1078
  %1082 = vrot.lane.b32.xlu0 %v1080, 64
  %v1083 = vpop.permute.xlu0 %1082
  %v1084 = vsel %vm251, %v1083, 0
  %1086 = vmatprep.subr.mxu0 0.0
  %1087 = vmatpush1.msra.mxu0 %v61
  %1088 = vmatprep.subr.mxu0 0.0
  %1089 = vmatpush1.msra.mxu0 %v62
  %1090 = vmatprep.subr.mxu0 0.0
  %1091 = vmatpush1.msra.mxu0 %v63
  %1092 = vmatprep.subr.mxu0 0.0
  %1093 = vmatpush1.msra.mxu0 %v64
  %1094 = vmatprep.subr.mxu0 0.0
  %1095 = vmatpush1.msra.mxu0 0.0
  %1096 = vmatprep.subr.mxu0 0.0
  %1097 = vmatpush1.msra.mxu0 0.0
  %1098 = vmatprep.subr.mxu0 0.0
  %1099 = vmatpush1.msra.mxu0 0.0
  %1100 = vmatprep.subr.mxu0 0.0
  %1101 = vmatpush1.msra.mxu0 0.0
  %1102 = vmatprep.subr.mxu0 0.0
  %1103 = vmatpush1.msra.mxu0 0.0
  %1104 = vmatprep.subr.mxu0 0.0
  %1105 = vmatpush1.msra.mxu0 0.0
  %1106 = vmatprep.subr.mxu0 0.0
  %1107 = vmatpush1.msra.mxu0 0.0
  %1108 = vmatprep.subr.mxu0 0.0
  %1109 = vmatpush1.msra.mxu0 0.0
  %1110 = vmatprep.subr.mxu0 0.0
  %1111 = vmatpush1.msra.mxu0 0.0
  %1112 = vmatprep.subr.mxu0 0.0
  %1113 = vmatpush1.msra.mxu0 0.0
  %1114 = vmatprep.subr.mxu0 0.0
  %1115 = vmatpush1.msra.mxu0 0.0
  %1116 = vmatprep.subr.mxu0 0.0
  %1117 = vmatpush1.msra.mxu0 0.0
  %1118 = vmatprep.subr.mxu0 0.0
  %1119 = vmatpush1.msra.mxu0 0.0
  %1120 = vmatprep.subr.mxu0 0.0
  %1121 = vmatpush1.msra.mxu0 0.0
  %1122 = vmatprep.subr.mxu0 0.0
  %1123 = vmatpush1.msra.mxu0 0.0
  %1124 = vmatprep.subr.mxu0 0.0
  %1125 = vmatpush1.msra.mxu0 0.0
  %1126 = vmatprep.subr.mxu0 0.0
  %1127 = vmatpush1.msra.mxu0 0.0
  %1128 = vmatprep.subr.mxu0 0.0
  %1129 = vmatpush1.msra.mxu0 0.0
  %1130 = vmatprep.subr.mxu0 0.0
  %1131 = vmatpush1.msra.mxu0 0.0
  %1132 = vmatprep.subr.mxu0 0.0
  %1133 = vmatpush1.msra.mxu0 0.0
  %1134 = vmatprep.subr.mxu0 0.0
  %1135 = vmatpush1.msra.mxu0 0.0
  %1136 = vmatprep.subr.mxu0 0.0
  %1137 = vmatpush1.msra.mxu0 0.0
  %1138 = vmatprep.subr.mxu0 0.0
  %1139 = vmatpush1.msra.mxu0 0.0
  %1140 = vmatprep.subr.mxu0 0.0
  %1141 = vmatpush1.msra.mxu0 0.0
  %1142 = vmatprep.subr.mxu0 0.0
  %1143 = vmatpush1.msra.mxu0 0.0
  %1144 = vmatprep.subr.mxu0 0.0
  %1145 = vmatpush1.msra.mxu0 0.0
  %1146 = vmatprep.subr.mxu0 0.0
  %1147 = vmatpush1.msra.mxu0 0.0
  %1148 = vmatprep.subr.mxu0 0.0
  %1149 = vmatpush1.msra.mxu0 0.0
  %1150 = vmatprep.mubr.f32.mxu0 0.0
  %1151 = vmatmul.mubr.f32.gmra.mrb[0].mxu0 %v1084
  %v1152 = vpop.f32.mrb[0].mxu0
  %v1153 = vadd.f32 %v77, %v1152
  %v1154 = vpop.f32.mrb[0].mxu0
  %1155 = vdwg.mxu0
  %v1156 = vtanh.pop %v1153
  %v1157 = vmul.f32 %v1156, %v84
  %v1158 = vsel %vm112, %v1157, 0.0
  %1159 = vadd.xlane.f32.xlu0 %v1158
  %v1160 = vpop.xlane.xlu0 %1159
  %v1161 = vadd.f32 %v1160, %v91
  %vm1162 = vcmp.eq.s32.totalorder %v94, 2
  %1164 = vset.pattern.permute.xlu0 0
  %1165 = vperm.xlu0 %1164, %v1161
  %v1166 = vpop.permute.xlu0 %1165
  %v1168 = vsel %vm1162, %v1166, %v854
  %v1169 = vmax.f32 %v855, %v1161
  %v1170 = vsub.f32 %v855, %v1169
  %v1171 = vmul.f32 %v1170, 1.442695
  %v1172 = vpow.pop %v1171
  %v1173 = vsub.f32 %v1161, %v1169
  %v1174 = vmul.f32 %v1173, 1.442695
  %v1175 = vpow.pop %v1174
  %v1176 = vmul.f32 %v1172, %v863
  %v1177 = vadd.f32 %v1176, %v1175
  %1179 = vset.pattern.permute.xlu0 0
  %1180 = vperm.xlu0 %1179, %v1172
  %v1181 = vpop.permute.xlu0 %1180
  %v1183 = vmul.f32 %v1181, %v876
  %1185 = vset.pattern.permute.xlu0 0
  %1186 = vperm.xlu0 %1185, %v1175
  %v1187 = vpop.permute.xlu0 %1186
  %v1189 = vmul.f32 %v1187, %v1080
  %v1190 = vadd.f32 %v1183, %v1189
  %s1191 = scalar_lea.vmem [#allocation2], 24
  %v1192 = vld [vmem:[%s1191] sm:$0xff]
  %v1193 = vsel %vm251, %v978, 0
  %1195 = vmatprep.subr.mxu0 0.0
  %1196 = vmatpush1.msra.mxu0 %v49
  %1197 = vmatprep.subr.mxu0 0.0
  %1198 = vmatpush1.msra.mxu0 %v50
  %1199 = vmatprep.subr.mxu0 0.0
  %1200 = vmatpush1.msra.mxu0 %v51
  %1201 = vmatprep.subr.mxu0 0.0
  %1202 = vmatpush1.msra.mxu0 %v52
  %1203 = vmatprep.subr.mxu0 0.0
  %1204 = vmatpush1.msra.mxu0 0.0
  %1205 = vmatprep.subr.mxu0 0.0
  %1206 = vmatpush1.msra.mxu0 0.0
  %1207 = vmatprep.subr.mxu0 0.0
  %1208 = vmatpush1.msra.mxu0 0.0
  %1209 = vmatprep.subr.mxu0 0.0
  %1210 = vmatpush1.msra.mxu0 0.0
  %1211 = vmatprep.subr.mxu0 0.0
  %1212 = vmatpush1.msra.mxu0 0.0
  %1213 = vmatprep.subr.mxu0 0.0
  %1214 = vmatpush1.msra.mxu0 0.0
  %1215 = vmatprep.subr.mxu0 0.0
  %1216 = vmatpush1.msra.mxu0 0.0
  %1217 = vmatprep.subr.mxu0 0.0
  %1218 = vmatpush1.msra.mxu0 0.0
  %1219 = vmatprep.subr.mxu0 0.0
  %1220 = vmatpush1.msra.mxu0 0.0
  %1221 = vmatprep.subr.mxu0 0.0
  %1222 = vmatpush1.msra.mxu0 0.0
  %1223 = vmatprep.subr.mxu0 0.0
  %1224 = vmatpush1.msra.mxu0 0.0
  %1225 = vmatprep.subr.mxu0 0.0
  %1226 = vmatpush1.msra.mxu0 0.0
  %1227 = vmatprep.subr.mxu0 0.0
  %1228 = vmatpush1.msra.mxu0 0.0
  %1229 = vmatprep.subr.mxu0 0.0
  %1230 = vmatpush1.msra.mxu0 0.0
  %1231 = vmatprep.subr.mxu0 0.0
  %1232 = vmatpush1.msra.mxu0 0.0
  %1233 = vmatprep.subr.mxu0 0.0
  %1234 = vmatpush1.msra.mxu0 0.0
  %1235 = vmatprep.subr.mxu0 0.0
  %1236 = vmatpush1.msra.mxu0 0.0
  %1237 = vmatprep.subr.mxu0 0.0
  %1238 = vmatpush1.msra.mxu0 0.0
  %1239 = vmatprep.subr.mxu0 0.0
  %1240 = vmatpush1.msra.mxu0 0.0
  %1241 = vmatprep.subr.mxu0 0.0
  %1242 = vmatpush1.msra.mxu0 0.0
  %1243 = vmatprep.subr.mxu0 0.0
  %1244 = vmatpush1.msra.mxu0 0.0
  %1245 = vmatprep.subr.mxu0 0.0
  %1246 = vmatpush1.msra.mxu0 0.0
  %1247 = vmatprep.subr.mxu0 0.0
  %1248 = vmatpush1.msra.mxu0 0.0
  %1249 = vmatprep.subr.mxu0 0.0
  %1250 = vmatpush1.msra.mxu0 0.0
  %1251 = vmatprep.subr.mxu0 0.0
  %1252 = vmatpush1.msra.mxu0 0.0
  %1253 = vmatprep.subr.mxu0 0.0
  %1254 = vmatpush1.msra.mxu0 0.0
  %1255 = vmatprep.subr.mxu0 0.0
  %1256 = vmatpush1.msra.mxu0 0.0
  %1257 = vmatprep.subr.mxu0 0.0
  %1258 = vmatpush1.msra.mxu0 0.0
  %1259 = vmatprep.mubr.f32.mxu0 0.0
  %1260 = vmatmul.mubr.f32.gmra.mrb[0].mxu0 %v1193
  %v1261 = vpop.f32.mrb[0].mxu0
  %v1262 = vadd.f32 0.0, %v1261
  %v1263 = vpop.f32.mrb[0].mxu0
  %1264 = vdwg.mxu0
  %v1265 = vadd.f32 %v1192, %v1262
  %v1266 = vxor.u32 %v1265, 2147483648
  %v1267 = vmul.f32 %v1266, 1.442695
  %v1268 = vpow.pop %v1267
  %v1269 = vadd.f32 %v1268, 1.0
  %v1270 = vrcp.pop %v1269
  %v1271 = vmul.f32 1.0, %v1270
  %v1272 = vtanh.pop %v1265
  %v1273 = vmul.f32 %v1271, %v969
  %1275 = vrot.lane.b32.xlu0 %v1272, 32
  %v1276 = vpop.permute.xlu0 %1275
  %v1278 = vmul.f32 %v1271, %v1276
  %1280 = vrot.lane.b32.xlu0 %v1278, 32
  %v1281 = vpop.permute.xlu0 %1280
  %v1283 = vadd.f32 %v1273, %v1281
  %v1284 = vtanh.pop %v1283
  %1286 = vrot.lane.b32.xlu0 %v1284, 32
  %v1287 = vpop.permute.xlu0 %1286
  %v1289 = vmul.f32 %v1271, %v1287
  %1291 = vrot.lane.b32.xlu0 %v1289, 64
  %v1292 = vpop.permute.xlu0 %1291
  %1294 = vrot.lane.b32.xlu0 %v1080, 96
  %v1295 = vpop.permute.xlu0 %1294
  %v1297 = vsel %vm251, %v1292, %v1295
  %v1299 = vsel %vm355, %v1297, 0
  %1301 = vmatprep.subr.mxu0 0.0
  %1302 = vmatpush1.msra.mxu0 %v53
  %1303 = vmatprep.subr.mxu0 0.0
  %1304 = vmatpush1.msra.mxu0 %v54
  %1305 = vmatprep.subr.mxu0 0.0
  %1306 = vmatpush1.msra.mxu0 %v55
  %1307 = vmatprep.subr.mxu0 0.0
  %1308 = vmatpush1.msra.mxu0 %v56
  %1309 = vmatprep.subr.mxu0 0.0
  %1310 = vmatpush1.msra.mxu0 %v57
  %1311 = vmatprep.subr.mxu0 0.0
  %1312 = vmatpush1.msra.mxu0 %v58
  %1313 = vmatprep.subr.mxu0 0.0
  %1314 = vmatpush1.msra.mxu0 %v59
  %1315 = vmatprep.subr.mxu0 0.0
  %1316 = vmatpush1.msra.mxu0 %v60
  %1317 = vmatprep.subr.mxu0 0.0
  %1318 = vmatpush1.msra.mxu0 0.0
  %1319 = vmatprep.subr.mxu0 0.0
  %1320 = vmatpush1.msra.mxu0 0.0
  %1321 = vmatprep.subr.mxu0 0.0
  %1322 = vmatpush1.msra.mxu0 0.0
  %1323 = vmatprep.subr.mxu0 0.0
  %1324 = vmatpush1.msra.mxu0 0.0
  %1325 = vmatprep.subr.mxu0 0.0
  %1326 = vmatpush1.msra.mxu0 0.0
  %1327 = vmatprep.subr.mxu0 0.0
  %1328 = vmatpush1.msra.mxu0 0.0
  %1329 = vmatprep.subr.mxu0 0.0
  %1330 = vmatpush1.msra.mxu0 0.0
  %1331 = vmatprep.subr.mxu0 0.0
  %1332 = vmatpush1.msra.mxu0 0.0
  %1333 = vmatprep.subr.mxu0 0.0
  %1334 = vmatpush1.msra.mxu0 0.0
  %1335 = vmatprep.subr.mxu0 0.0
  %1336 = vmatpush1.msra.mxu0 0.0
  %1337 = vmatprep.subr.mxu0 0.0
  %1338 = vmatpush1.msra.mxu0 0.0
  %1339 = vmatprep.subr.mxu0 0.0
  %1340 = vmatpush1.msra.mxu0 0.0
  %1341 = vmatprep.subr.mxu0 0.0
  %1342 = vmatpush1.msra.mxu0 0.0
  %1343 = vmatprep.subr.mxu0 0.0
  %1344 = vmatpush1.msra.mxu0 0.0
  %1345 = vmatprep.subr.mxu0 0.0
  %1346 = vmatpush1.msra.mxu0 0.0
  %1347 = vmatprep.subr.mxu0 0.0
  %1348 = vmatpush1.msra.mxu0 0.0
  %1349 = vmatprep.subr.mxu0 0.0
  %1350 = vmatpush1.msra.mxu0 0.0
  %1351 = vmatprep.subr.mxu0 0.0
  %1352 = vmatpush1.msra.mxu0 0.0
  %1353 = vmatprep.subr.mxu0 0.0
  %1354 = vmatpush1.msra.mxu0 0.0
  %1355 = vmatprep.subr.mxu0 0.0
  %1356 = vmatpush1.msra.mxu0 0.0
  %1357 = vmatprep.subr.mxu0 0.0
  %1358 = vmatpush1.msra.mxu0 0.0
  %1359 = vmatprep.subr.mxu0 0.0
  %1360 = vmatpush1.msra.mxu0 0.0
  %1361 = vmatprep.subr.mxu0 0.0
  %1362 = vmatpush1.msra.mxu0 0.0
  %1363 = vmatprep.subr.mxu0 0.0
  %1364 = vmatpush1.msra.mxu0 0.0
  %1365 = vmatprep.mubr.f32.mxu0 0.0
  %1366 = vmatmul.mubr.f32.gmra.mrb[0].mxu0 %v1299
  %v1367 = vpop.f32.mrb[0].mxu0
  %v1368 = vadd.f32 %v70, %v1367
  %v1369 = vpop.f32.mrb[0].mxu0
  %1370 = vdwg.mxu0
  %v1371 = vxor.u32 %v1368, 2147483648
  %v1372 = vmul.f32 %v1371, 1.442695
  %v1373 = vpow.pop %v1372
  %v1374 = vadd.f32 %v1373, 1.0
  %v1375 = vrcp.pop %v1374
  %v1376 = vmul.f32 1.0, %v1375
  %v1377 = vtanh.pop %v1368
  %v1378 = vmul.f32 %v1376, %v1074
  %1380 = vrot.lane.b32.xlu0 %v1377, 32
  %v1381 = vpop.permute.xlu0 %1380
  %v1383 = vmul.f32 %v1376, %v1381
  %1385 = vrot.lane.b32.xlu0 %v1383, 32
  %v1386 = vpop.permute.xlu0 %1385
  %v1388 = vadd.f32 %v1378, %v1386
  %v1389 = vtanh.pop %v1388
  %1391 = vrot.lane.b32.xlu0 %v1389, 32
  %v1392 = vpop.permute.xlu0 %1391
  %v1394 = vmul.f32 %v1376, %v1392
  %1396 = vrot.lane.b32.xlu0 %v1394, 64
  %v1397 = vpop.permute.xlu0 %1396
  %v1398 = vsel %vm251, %v1397, 0
  %1400 = vmatprep.subr.mxu0 0.0
  %1401 = vmatpush1.msra.mxu0 %v61
  %1402 = vmatprep.subr.mxu0 0.0
  %1403 = vmatpush1.msra.mxu0 %v62
  %1404 = vmatprep.subr.mxu0 0.0
  %1405 = vmatpush1.msra.mxu0 %v63
  %1406 = vmatprep.subr.mxu0 0.0
  %1407 = vmatpush1.msra.mxu0 %v64
  %1408 = vmatprep.subr.mxu0 0.0
  %1409 = vmatpush1.msra.mxu0 0.0
  %1410 = vmatprep.subr.mxu0 0.0
  %1411 = vmatpush1.msra.mxu0 0.0
  %1412 = vmatprep.subr.mxu0 0.0
  %1413 = vmatpush1.msra.mxu0 0.0
  %1414 = vmatprep.subr.mxu0 0.0
  %1415 = vmatpush1.msra.mxu0 0.0
  %1416 = vmatprep.subr.mxu0 0.0
  %1417 = vmatpush1.msra.mxu0 0.0
  %1418 = vmatprep.subr.mxu0 0.0
  %1419 = vmatpush1.msra.mxu0 0.0
  %1420 = vmatprep.subr.mxu0 0.0
  %1421 = vmatpush1.msra.mxu0 0.0
  %1422 = vmatprep.subr.mxu0 0.0
  %1423 = vmatpush1.msra.mxu0 0.0
  %1424 = vmatprep.subr.mxu0 0.0
  %1425 = vmatpush1.msra.mxu0 0.0
  %1426 = vmatprep.subr.mxu0 0.0
  %1427 = vmatpush1.msra.mxu0 0.0
  %1428 = vmatprep.subr.mxu0 0.0
  %1429 = vmatpush1.msra.mxu0 0.0
  %1430 = vmatprep.subr.mxu0 0.0
  %1431 = vmatpush1.msra.mxu0 0.0
  %1432 = vmatprep.subr.mxu0 0.0
  %1433 = vmatpush1.msra.mxu0 0.0
  %1434 = vmatprep.subr.mxu0 0.0
  %1435 = vmatpush1.msra.mxu0 0.0
  %1436 = vmatprep.subr.mxu0 0.0
  %1437 = vmatpush1.msra.mxu0 0.0
  %1438 = vmatprep.subr.mxu0 0.0
  %1439 = vmatpush1.msra.mxu0 0.0
  %1440 = vmatprep.subr.mxu0 0.0
  %1441 = vmatpush1.msra.mxu0 0.0
  %1442 = vmatprep.subr.mxu0 0.0
  %1443 = vmatpush1.msra.mxu0 0.0
  %1444 = vmatprep.subr.mxu0 0.0
  %1445 = vmatpush1.msra.mxu0 0.0
  %1446 = vmatprep.subr.mxu0 0.0
  %1447 = vmatpush1.msra.mxu0 0.0
  %1448 = vmatprep.subr.mxu0 0.0
  %1449 = vmatpush1.msra.mxu0 0.0
  %1450 = vmatprep.subr.mxu0 0.0
  %1451 = vmatpush1.msra.mxu0 0.0
  %1452 = vmatprep.subr.mxu0 0.0
  %1453 = vmatpush1.msra.mxu0 0.0
  %1454 = vmatprep.subr.mxu0 0.0
  %1455 = vmatpush1.msra.mxu0 0.0
  %1456 = vmatprep.subr.mxu0 0.0
  %1457 = vmatpush1.msra.mxu0 0.0
  %1458 = vmatprep.subr.mxu0 0.0
  %1459 = vmatpush1.msra.mxu0 0.0
  %1460 = vmatprep.subr.mxu0 0.0
  %1461 = vmatpush1.msra.mxu0 0.0
  %1462 = vmatprep.subr.mxu0 0.0
  %1463 = vmatpush1.msra.mxu0 0.0
  %1464 = vmatprep.mubr.f32.mxu0 0.0
  %1465 = vmatmul.mubr.f32.gmra.mrb[0].mxu0 %v1398
  %v1466 = vpop.f32.mrb[0].mxu0
  %v1467 = vadd.f32 %v77, %v1466
  %v1468 = vpop.f32.mrb[0].mxu0
  %1469 = vdwg.mxu0
  %v1470 = vtanh.pop %v1467
  %v1471 = vmul.f32 %v1470, %v84
  %v1472 = vsel %vm112, %v1471, 0.0
  %1473 = vadd.xlane.f32.xlu0 %v1472
  %v1474 = vpop.xlane.xlu0 %1473
  %v1475 = vadd.f32 %v1474, %v91
  %vm1476 = vcmp.eq.s32.totalorder %v94, 3
  %1478 = vset.pattern.permute.xlu0 0
  %1479 = vperm.xlu0 %1478, %v1475
  %v1480 = vpop.permute.xlu0 %1479
  %v1482 = vsel %vm1476, %v1480, %v1168
  %v1483 = vmax.f32 %v1169, %v1475
  %v1484 = vsub.f32 %v1169, %v1483
  %v1485 = vmul.f32 %v1484, 1.442695
  %v1486 = vpow.pop %v1485
  %v1487 = vsub.f32 %v1475, %v1483
  %v1488 = vmul.f32 %v1487, 1.442695
  %v1489 = vpow.pop %v1488
  %v1490 = vmul.f32 %v1486, %v1177
  %v1491 = vadd.f32 %v1490, %v1489
  %1493 = vset.pattern.permute.xlu0 0
  %1494 = vperm.xlu0 %1493, %v1486
  %v1495 = vpop.permute.xlu0 %1494
  %v1497 = vmul.f32 %v1495, %v1190
  %1499 = vset.pattern.permute.xlu0 0
  %1500 = vperm.xlu0 %1499, %v1489
  %v1501 = vpop.permute.xlu0 %1500
  %v1503 = vmul.f32 %v1501, %v1394
  %v1504 = vadd.f32 %v1497, %v1503
  %s1505 = scalar_lea.vmem [#allocation2], 32
  %v1506 = vld [vmem:[%s1505] sm:$0xff]
  %v1507 = vsel %vm251, %v1292, 0
  %1509 = vmatprep.subr.mxu0 0.0
  %1510 = vmatpush1.msra.mxu0 %v49
  %1511 = vmatprep.subr.mxu0 0.0
  %1512 = vmatpush1.msra.mxu0 %v50
  %1513 = vmatprep.subr.mxu0 0.0
  %1514 = vmatpush1.msra.mxu0 %v51
  %1515 = vmatprep.subr.mxu0 0.0
  %1516 = vmatpush1.msra.mxu0 %v52
  %1517 = vmatprep.subr.mxu0 0.0
  %1518 = vmatpush1.msra.mxu0 0.0
  %1519 = vmatprep.subr.mxu0 0.0
  %1520 = vmatpush1.msra.mxu0 0.0
  %1521 = vmatprep.subr.mxu0 0.0
  %1522 = vmatpush1.msra.mxu0 0.0
  %1523 = vmatprep.subr.mxu0 0.0
  %1524 = vmatpush1.msra.mxu0 0.0
  %1525 = vmatprep.subr.mxu0 0.0
  %1526 = vmatpush1.msra.mxu0 0.0
  %1527 = vmatprep.subr.mxu0 0.0
  %1528 = vmatpush1.msra.mxu0 0.0
  %1529 = vmatprep.subr.mxu0 0.0
  %1530 = vmatpush1.msra.mxu0 0.0
  %1531 = vmatprep.subr.mxu0 0.0
  %1532 = vmatpush1.msra.mxu0 0.0
  %1533 = vmatprep.subr.mxu0 0.0
  %1534 = vmatpush1.msra.mxu0 0.0
  %1535 = vmatprep.subr.mxu0 0.0
  %1536 = vmatpush1.msra.mxu0 0.0
  %1537 = vmatprep.subr.mxu0 0.0
  %1538 = vmatpush1.msra.mxu0 0.0
  %1539 = vmatprep.subr.mxu0 0.0
  %1540 = vmatpush1.msra.mxu0 0.0
  %1541 = vmatprep.subr.mxu0 0.0
  %1542 = vmatpush1.msra.mxu0 0.0
  %1543 = vmatprep.subr.mxu0 0.0
  %1544 = vmatpush1.msra.mxu0 0.0
  %1545 = vmatprep.subr.mxu0 0.0
  %1546 = vmatpush1.msra.mxu0 0.0
  %1547 = vmatprep.subr.mxu0 0.0
  %1548 = vmatpush1.msra.mxu0 0.0
  %1549 = vmatprep.subr.mxu0 0.0
  %1550 = vmatpush1.msra.mxu0 0.0
  %1551 = vmatprep.subr.mxu0 0.0
  %1552 = vmatpush1.msra.mxu0 0.0
  %1553 = vmatprep.subr.mxu0 0.0
  %1554 = vmatpush1.msra.mxu0 0.0
  %1555 = vmatprep.subr.mxu0 0.0
  %1556 = vmatpush1.msra.mxu0 0.0
  %1557 = vmatprep.subr.mxu0 0.0
  %1558 = vmatpush1.msra.mxu0 0.0
  %1559 = vmatprep.subr.mxu0 0.0
  %1560 = vmatpush1.msra.mxu0 0.0
  %1561 = vmatprep.subr.mxu0 0.0
  %1562 = vmatpush1.msra.mxu0 0.0
  %1563 = vmatprep.subr.mxu0 0.0
  %1564 = vmatpush1.msra.mxu0 0.0
  %1565 = vmatprep.subr.mxu0 0.0
  %1566 = vmatpush1.msra.mxu0 0.0
  %1567 = vmatprep.subr.mxu0 0.0
  %1568 = vmatpush1.msra.mxu0 0.0
  %1569 = vmatprep.subr.mxu0 0.0
  %1570 = vmatpush1.msra.mxu0 0.0
  %1571 = vmatprep.subr.mxu0 0.0
  %1572 = vmatpush1.msra.mxu0 0.0
  %1573 = vmatprep.mubr.f32.mxu0 0.0
  %1574 = vmatmul.mubr.f32.gmra.mrb[0].mxu0 %v1507
  %v1575 = vpop.f32.mrb[0].mxu0
  %v1576 = vadd.f32 0.0, %v1575
  %v1577 = vpop.f32.mrb[0].mxu0
  %1578 = vdwg.mxu0
  %v1579 = vadd.f32 %v1506, %v1576
  %v1580 = vxor.u32 %v1579, 2147483648
  %v1581 = vmul.f32 %v1580, 1.442695
  %v1582 = vpow.pop %v1581
  %v1583 = vadd.f32 %v1582, 1.0
  %v1584 = vrcp.pop %v1583
  %v1585 = vmul.f32 1.0, %v1584
  %v1586 = vtanh.pop %v1579
  %v1587 = vmul.f32 %v1585, %v1283
  %1589 = vrot.lane.b32.xlu0 %v1586, 32
  %v1590 = vpop.permute.xlu0 %1589
  %v1592 = vmul.f32 %v1585, %v1590
  %1594 = vrot.lane.b32.xlu0 %v1592, 32
  %v1595 = vpop.permute.xlu0 %1594
  %v1597 = vadd.f32 %v1587, %v1595
  %v1598 = vtanh.pop %v1597
  %1600 = vrot.lane.b32.xlu0 %v1598, 32
  %v1601 = vpop.permute.xlu0 %1600
  %v1603 = vmul.f32 %v1585, %v1601
  %1605 = vrot.lane.b32.xlu0 %v1603, 64
  %v1606 = vpop.permute.xlu0 %1605
  %1608 = vrot.lane.b32.xlu0 %v1394, 96
  %v1609 = vpop.permute.xlu0 %1608
  %v1611 = vsel %vm251, %v1606, %v1609
  %v1613 = vsel %vm355, %v1611, 0
  %1615 = vmatprep.subr.mxu0 0.0
  %1616 = vmatpush1.msra.mxu0 %v53
  %1617 = vmatprep.subr.mxu0 0.0
  %1618 = vmatpush1.msra.mxu0 %v54
  %1619 = vmatprep.subr.mxu0 0.0
  %1620 = vmatpush1.msra.mxu0 %v55
  %1621 = vmatprep.subr.mxu0 0.0
  %1622 = vmatpush1.msra.mxu0 %v56
  %1623 = vmatprep.subr.mxu0 0.0
  %1624 = vmatpush1.msra.mxu0 %v57
  %1625 = vmatprep.subr.mxu0 0.0
  %1626 = vmatpush1.msra.mxu0 %v58
  %1627 = vmatprep.subr.mxu0 0.0
  %1628 = vmatpush1.msra.mxu0 %v59
  %1629 = vmatprep.subr.mxu0 0.0
  %1630 = vmatpush1.msra.mxu0 %v60
  %1631 = vmatprep.subr.mxu0 0.0
  %1632 = vmatpush1.msra.mxu0 0.0
  %1633 = vmatprep.subr.mxu0 0.0
  %1634 = vmatpush1.msra.mxu0 0.0
  %1635 = vmatprep.subr.mxu0 0.0
  %1636 = vmatpush1.msra.mxu0 0.0
  %1637 = vmatprep.subr.mxu0 0.0
  %1638 = vmatpush1.msra.mxu0 0.0
  %1639 = vmatprep.subr.mxu0 0.0
  %1640 = vmatpush1.msra.mxu0 0.0
  %1641 = vmatprep.subr.mxu0 0.0
  %1642 = vmatpush1.msra.mxu0 0.0
  %1643 = vmatprep.subr.mxu0 0.0
  %1644 = vmatpush1.msra.mxu0 0.0
  %1645 = vmatprep.subr.mxu0 0.0
  %1646 = vmatpush1.msra.mxu0 0.0
  %1647 = vmatprep.subr.mxu0 0.0
  %1648 = vmatpush1.msra.mxu0 0.0
  %1649 = vmatprep.subr.mxu0 0.0
  %1650 = vmatpush1.msra.mxu0 0.0
  %1651 = vmatprep.subr.mxu0 0.0
  %1652 = vmatpush1.msra.mxu0 0.0
  %1653 = vmatprep.subr.mxu0 0.0
  %1654 = vmatpush1.msra.mxu0 0.0
  %1655 = vmatprep.subr.mxu0 0.0
  %1656 = vmatpush1.msra.mxu0 0.0
  %1657 = vmatprep.subr.mxu0 0.0
  %1658 = vmatpush1.msra.mxu0 0.0
  %1659 = vmatprep.subr.mxu0 0.0
  %1660 = vmatpush1.msra.mxu0 0.0
  %1661 = vmatprep.subr.mxu0 0.0
  %1662 = vmatpush1.msra.mxu0 0.0
  %1663 = vmatprep.subr.mxu0 0.0
  %1664 = vmatpush1.msra.mxu0 0.0
  %1665 = vmatprep.subr.mxu0 0.0
  %1666 = vmatpush1.msra.mxu0 0.0
  %1667 = vmatprep.subr.mxu0 0.0
  %1668 = vmatpush1.msra.mxu0 0.0
  %1669 = vmatprep.subr.mxu0 0.0
  %1670 = vmatpush1.msra.mxu0 0.0
  %1671 = vmatprep.subr.mxu0 0.0
  %1672 = vmatpush1.msra.mxu0 0.0
  %1673 = vmatprep.subr.mxu0 0.0
  %1674 = vmatpush1.msra.mxu0 0.0
  %1675 = vmatprep.subr.mxu0 0.0
  %1676 = vmatpush1.msra.mxu0 0.0
  %1677 = vmatprep.subr.mxu0 0.0
  %1678 = vmatpush1.msra.mxu0 0.0
  %1679 = vmatprep.mubr.f32.mxu0 0.0
  %1680 = vmatmul.mubr.f32.gmra.mrb[0].mxu0 %v1613
  %v1681 = vpop.f32.mrb[0].mxu0
  %v1682 = vadd.f32 %v70, %v1681
  %v1683 = vpop.f32.mrb[0].mxu0
  %1684 = vdwg.mxu0
  %v1685 = vxor.u32 %v1682, 2147483648
  %v1686 = vmul.f32 %v1685, 1.442695
  %v1687 = vpow.pop %v1686
  %v1688 = vadd.f32 %v1687, 1.0
  %v1689 = vrcp.pop %v1688
  %v1690 = vmul.f32 1.0, %v1689
  %v1691 = vtanh.pop %v1682
  %v1692 = vmul.f32 %v1690, %v1388
  %1694 = vrot.lane.b32.xlu0 %v1691, 32
  %v1695 = vpop.permute.xlu0 %1694
  %v1697 = vmul.f32 %v1690, %v1695
  %1699 = vrot.lane.b32.xlu0 %v1697, 32
  %v1700 = vpop.permute.xlu0 %1699
  %v1702 = vadd.f32 %v1692, %v1700
  %v1703 = vtanh.pop %v1702
  %1705 = vrot.lane.b32.xlu0 %v1703, 32
  %v1706 = vpop.permute.xlu0 %1705
  %v1708 = vmul.f32 %v1690, %v1706
  %1710 = vrot.lane.b32.xlu0 %v1708, 64
  %v1711 = vpop.permute.xlu0 %1710
  %v1712 = vsel %vm251, %v1711, 0
  %1714 = vmatprep.subr.mxu0 0.0
  %1715 = vmatpush1.msra.mxu0 %v61
  %1716 = vmatprep.subr.mxu0 0.0
  %1717 = vmatpush1.msra.mxu0 %v62
  %1718 = vmatprep.subr.mxu0 0.0
  %1719 = vmatpush1.msra.mxu0 %v63
  %1720 = vmatprep.subr.mxu0 0.0
  %1721 = vmatpush1.msra.mxu0 %v64
  %1722 = vmatprep.subr.mxu0 0.0
  %1723 = vmatpush1.msra.mxu0 0.0
  %1724 = vmatprep.subr.mxu0 0.0
  %1725 = vmatpush1.msra.mxu0 0.0
  %1726 = vmatprep.subr.mxu0 0.0
  %1727 = vmatpush1.msra.mxu0 0.0
  %1728 = vmatprep.subr.mxu0 0.0
  %1729 = vmatpush1.msra.mxu0 0.0
  %1730 = vmatprep.subr.mxu0 0.0
  %1731 = vmatpush1.msra.mxu0 0.0
  %1732 = vmatprep.subr.mxu0 0.0
  %1733 = vmatpush1.msra.mxu0 0.0
  %1734 = vmatprep.subr.mxu0 0.0
  %1735 = vmatpush1.msra.mxu0 0.0
  %1736 = vmatprep.subr.mxu0 0.0
  %1737 = vmatpush1.msra.mxu0 0.0
  %1738 = vmatprep.subr.mxu0 0.0
  %1739 = vmatpush1.msra.mxu0 0.0
  %1740 = vmatprep.subr.mxu0 0.0
  %1741 = vmatpush1.msra.mxu0 0.0
  %1742 = vmatprep.subr.mxu0 0.0
  %1743 = vmatpush1.msra.mxu0 0.0
  %1744 = vmatprep.subr.mxu0 0.0
  %1745 = vmatpush1.msra.mxu0 0.0
  %1746 = vmatprep.subr.mxu0 0.0
  %1747 = vmatpush1.msra.mxu0 0.0
  %1748 = vmatprep.subr.mxu0 0.0
  %1749 = vmatpush1.msra.mxu0 0.0
  %1750 = vmatprep.subr.mxu0 0.0
  %1751 = vmatpush1.msra.mxu0 0.0
  %1752 = vmatprep.subr.mxu0 0.0
  %1753 = vmatpush1.msra.mxu0 0.0
  %1754 = vmatprep.subr.mxu0 0.0
  %1755 = vmatpush1.msra.mxu0 0.0
  %1756 = vmatprep.subr.mxu0 0.0
  %1757 = vmatpush1.msra.mxu0 0.0
  %1758 = vmatprep.subr.mxu0 0.0
  %1759 = vmatpush1.msra.mxu0 0.0
  %1760 = vmatprep.subr.mxu0 0.0
  %1761 = vmatpush1.msra.mxu0 0.0
  %1762 = vmatprep.subr.mxu0 0.0
  %1763 = vmatpush1.msra.mxu0 0.0
  %1764 = vmatprep.subr.mxu0 0.0
  %1765 = vmatpush1.msra.mxu0 0.0
  %1766 = vmatprep.subr.mxu0 0.0
  %1767 = vmatpush1.msra.mxu0 0.0
  %1768 = vmatprep.subr.mxu0 0.0
  %1769 = vmatpush1.msra.mxu0 0.0
  %1770 = vmatprep.subr.mxu0 0.0
  %1771 = vmatpush1.msra.mxu0 0.0
  %1772 = vmatprep.subr.mxu0 0.0
  %1773 = vmatpush1.msra.mxu0 0.0
  %1774 = vmatprep.subr.mxu0 0.0
  %1775 = vmatpush1.msra.mxu0 0.0
  %1776 = vmatprep.subr.mxu0 0.0
  %1777 = vmatpush1.msra.mxu0 0.0
  %1778 = vmatprep.mubr.f32.mxu0 0.0
  %1779 = vmatmul.mubr.f32.gmra.mrb[0].mxu0 %v1712
  %v1780 = vpop.f32.mrb[0].mxu0
  %v1781 = vadd.f32 %v77, %v1780
  %v1782 = vpop.f32.mrb[0].mxu0
  %1783 = vdwg.mxu0
  %v1784 = vtanh.pop %v1781
  %v1785 = vmul.f32 %v1784, %v84
  %v1786 = vsel %vm112, %v1785, 0.0
  %1787 = vadd.xlane.f32.xlu0 %v1786
  %v1788 = vpop.xlane.xlu0 %1787
  %v1789 = vadd.f32 %v1788, %v91
  %vm1790 = vcmp.eq.s32.totalorder %v94, 4
  %1792 = vset.pattern.permute.xlu0 0
  %1793 = vperm.xlu0 %1792, %v1789
  %v1794 = vpop.permute.xlu0 %1793
  %v1796 = vsel %vm1790, %v1794, %v1482
  %v1797 = vmax.f32 %v1483, %v1789
  %v1798 = vsub.f32 %v1483, %v1797
  %v1799 = vmul.f32 %v1798, 1.442695
  %v1800 = vpow.pop %v1799
  %v1801 = vsub.f32 %v1789, %v1797
  %v1802 = vmul.f32 %v1801, 1.442695
  %v1803 = vpow.pop %v1802
  %v1804 = vmul.f32 %v1800, %v1491
  %v1805 = vadd.f32 %v1804, %v1803
  %1807 = vset.pattern.permute.xlu0 0
  %1808 = vperm.xlu0 %1807, %v1800
  %v1809 = vpop.permute.xlu0 %1808
  %v1811 = vmul.f32 %v1809, %v1504
  %1813 = vset.pattern.permute.xlu0 0
  %1814 = vperm.xlu0 %1813, %v1803
  %v1815 = vpop.permute.xlu0 %1814
  %v1817 = vmul.f32 %v1815, %v1708
  %v1818 = vadd.f32 %v1811, %v1817
  %s1819 = scalar_lea.vmem [#allocation2], 40
  %v1820 = vld [vmem:[%s1819] sm:$0xff]
  %v1821 = vsel %vm251, %v1606, 0
  %1823 = vmatprep.subr.mxu0 0.0
  %1824 = vmatpush1.msra.mxu0 %v49
  %1825 = vmatprep.subr.mxu0 0.0
  %1826 = vmatpush1.msra.mxu0 %v50
  %1827 = vmatprep.subr.mxu0 0.0
  %1828 = vmatpush1.msra.mxu0 %v51
  %1829 = vmatprep.subr.mxu0 0.0
  %1830 = vmatpush1.msra.mxu0 %v52
  %1831 = vmatprep.subr.mxu0 0.0
  %1832 = vmatpush1.msra.mxu0 0.0
  %1833 = vmatprep.subr.mxu0 0.0
  %1834 = vmatpush1.msra.mxu0 0.0
  %1835 = vmatprep.subr.mxu0 0.0
  %1836 = vmatpush1.msra.mxu0 0.0
  %1837 = vmatprep.subr.mxu0 0.0
  %1838 = vmatpush1.msra.mxu0 0.0
  %1839 = vmatprep.subr.mxu0 0.0
  %1840 = vmatpush1.msra.mxu0 0.0
  %1841 = vmatprep.subr.mxu0 0.0
  %1842 = vmatpush1.msra.mxu0 0.0
  %1843 = vmatprep.subr.mxu0 0.0
  %1844 = vmatpush1.msra.mxu0 0.0
  %1845 = vmatprep.subr.mxu0 0.0
  %1846 = vmatpush1.msra.mxu0 0.0
  %1847 = vmatprep.subr.mxu0 0.0
  %1848 = vmatpush1.msra.mxu0 0.0
  %1849 = vmatprep.subr.mxu0 0.0
  %1850 = vmatpush1.msra.mxu0 0.0
  %1851 = vmatprep.subr.mxu0 0.0
  %1852 = vmatpush1.msra.mxu0 0.0
  %1853 = vmatprep.subr.mxu0 0.0
  %1854 = vmatpush1.msra.mxu0 0.0
  %1855 = vmatprep.subr.mxu0 0.0
  %1856 = vmatpush1.msra.mxu0 0.0
  %1857 = vmatprep.subr.mxu0 0.0
  %1858 = vmatpush1.msra.mxu0 0.0
  %1859 = vmatprep.subr.mxu0 0.0
  %1860 = vmatpush1.msra.mxu0 0.0
  %1861 = vmatprep.subr.mxu0 0.0
  %1862 = vmatpush1.msra.mxu0 0.0
  %1863 = vmatprep.subr.mxu0 0.0
  %1864 = vmatpush1.msra.mxu0 0.0
  %1865 = vmatprep.subr.mxu0 0.0
  %1866 = vmatpush1.msra.mxu0 0.0
  %1867 = vmatprep.subr.mxu0 0.0
  %1868 = vmatpush1.msra.mxu0 0.0
  %1869 = vmatprep.subr.mxu0 0.0
  %1870 = vmatpush1.msra.mxu0 0.0
  %1871 = vmatprep.subr.mxu0 0.0
  %1872 = vmatpush1.msra.mxu0 0.0
  %1873 = vmatprep.subr.mxu0 0.0
  %1874 = vmatpush1.msra.mxu0 0.0
  %1875 = vmatprep.subr.mxu0 0.0
  %1876 = vmatpush1.msra.mxu0 0.0
  %1877 = vmatprep.subr.mxu0 0.0
  %1878 = vmatpush1.msra.mxu0 0.0
  %1879 = vmatprep.subr.mxu0 0.0
  %1880 = vmatpush1.msra.mxu0 0.0
  %1881 = vmatprep.subr.mxu0 0.0
  %1882 = vmatpush1.msra.mxu0 0.0
  %1883 = vmatprep.subr.mxu0 0.0
  %1884 = vmatpush1.msra.mxu0 0.0
  %1885 = vmatprep.subr.mxu0 0.0
  %1886 = vmatpush1.msra.mxu0 0.0
  %1887 = vmatprep.mubr.f32.mxu0 0.0
  %1888 = vmatmul.mubr.f32.gmra.mrb[0].mxu0 %v1821
  %v1889 = vpop.f32.mrb[0].mxu0
  %v1890 = vadd.f32 0.0, %v1889
  %v1891 = vpop.f32.mrb[0].mxu0
  %1892 = vdwg.mxu0
  %v1893 = vadd.f32 %v1820, %v1890
  %v1894 = vxor.u32 %v1893, 2147483648
  %v1895 = vmul.f32 %v1894, 1.442695
  %v1896 = vpow.pop %v1895
  %v1897 = vadd.f32 %v1896, 1.0
  %v1898 = vrcp.pop %v1897
  %v1899 = vmul.f32 1.0, %v1898
  %v1900 = vtanh.pop %v1893
  %v1901 = vmul.f32 %v1899, %v1597
  %1903 = vrot.lane.b32.xlu0 %v1900, 32
  %v1904 = vpop.permute.xlu0 %1903
  %v1906 = vmul.f32 %v1899, %v1904
  %1908 = vrot.lane.b32.xlu0 %v1906, 32
  %v1909 = vpop.permute.xlu0 %1908
  %v1911 = vadd.f32 %v1901, %v1909
  %v1912 = vtanh.pop %v1911
  %1914 = vrot.lane.b32.xlu0 %v1912, 32
  %v1915 = vpop.permute.xlu0 %1914
  %v1917 = vmul.f32 %v1899, %v1915
  %1919 = vrot.lane.b32.xlu0 %v1917, 64
  %v1920 = vpop.permute.xlu0 %1919
  %1922 = vrot.lane.b32.xlu0 %v1708, 96
  %v1923 = vpop.permute.xlu0 %1922
  %v1925 = vsel %vm251, %v1920, %v1923
  %v1927 = vsel %vm355, %v1925, 0
  %1929 = vmatprep.subr.mxu0 0.0
  %1930 = vmatpush1.msra.mxu0 %v53
  %1931 = vmatprep.subr.mxu0 0.0
  %1932 = vmatpush1.msra.mxu0 %v54
  %1933 = vmatprep.subr.mxu0 0.0
  %1934 = vmatpush1.msra.mxu0 %v55
  %1935 = vmatprep.subr.mxu0 0.0
  %1936 = vmatpush1.msra.mxu0 %v56
  %1937 = vmatprep.subr.mxu0 0.0
  %1938 = vmatpush1.msra.mxu0 %v57
  %1939 = vmatprep.subr.mxu0 0.0
  %1940 = vmatpush1.msra.mxu0 %v58
  %1941 = vmatprep.subr.mxu0 0.0
  %1942 = vmatpush1.msra.mxu0 %v59
  %1943 = vmatprep.subr.mxu0 0.0
  %1944 = vmatpush1.msra.mxu0 %v60
  %1945 = vmatprep.subr.mxu0 0.0
  %1946 = vmatpush1.msra.mxu0 0.0
  %1947 = vmatprep.subr.mxu0 0.0
  %1948 = vmatpush1.msra.mxu0 0.0
  %1949 = vmatprep.subr.mxu0 0.0
  %1950 = vmatpush1.msra.mxu0 0.0
  %1951 = vmatprep.subr.mxu0 0.0
  %1952 = vmatpush1.msra.mxu0 0.0
  %1953 = vmatprep.subr.mxu0 0.0
  %1954 = vmatpush1.msra.mxu0 0.0
  %1955 = vmatprep.subr.mxu0 0.0
  %1956 = vmatpush1.msra.mxu0 0.0
  %1957 = vmatprep.subr.mxu0 0.0
  %1958 = vmatpush1.msra.mxu0 0.0
  %1959 = vmatprep.subr.mxu0 0.0
  %1960 = vmatpush1.msra.mxu0 0.0
  %1961 = vmatprep.subr.mxu0 0.0
  %1962 = vmatpush1.msra.mxu0 0.0
  %1963 = vmatprep.subr.mxu0 0.0
  %1964 = vmatpush1.msra.mxu0 0.0
  %1965 = vmatprep.subr.mxu0 0.0
  %1966 = vmatpush1.msra.mxu0 0.0
  %1967 = vmatprep.subr.mxu0 0.0
  %1968 = vmatpush1.msra.mxu0 0.0
  %1969 = vmatprep.subr.mxu0 0.0
  %1970 = vmatpush1.msra.mxu0 0.0
  %1971 = vmatprep.subr.mxu0 0.0
  %1972 = vmatpush1.msra.mxu0 0.0
  %1973 = vmatprep.subr.mxu0 0.0
  %1974 = vmatpush1.msra.mxu0 0.0
  %1975 = vmatprep.subr.mxu0 0.0
  %1976 = vmatpush1.msra.mxu0 0.0
  %1977 = vmatprep.subr.mxu0 0.0
  %1978 = vmatpush1.msra.mxu0 0.0
  %1979 = vmatprep.subr.mxu0 0.0
  %1980 = vmatpush1.msra.mxu0 0.0
  %1981 = vmatprep.subr.mxu0 0.0
  %1982 = vmatpush1.msra.mxu0 0.0
  %1983 = vmatprep.subr.mxu0 0.0
  %1984 = vmatpush1.msra.mxu0 0.0
  %1985 = vmatprep.subr.mxu0 0.0
  %1986 = vmatpush1.msra.mxu0 0.0
  %1987 = vmatprep.subr.mxu0 0.0
  %1988 = vmatpush1.msra.mxu0 0.0
  %1989 = vmatprep.subr.mxu0 0.0
  %1990 = vmatpush1.msra.mxu0 0.0
  %1991 = vmatprep.subr.mxu0 0.0
  %1992 = vmatpush1.msra.mxu0 0.0
  %1993 = vmatprep.mubr.f32.mxu0 0.0
  %1994 = vmatmul.mubr.f32.gmra.mrb[0].mxu0 %v1927
  %v1995 = vpop.f32.mrb[0].mxu0
  %v1996 = vadd.f32 %v70, %v1995
  %v1997 = vpop.f32.mrb[0].mxu0
  %1998 = vdwg.mxu0
  %v1999 = vxor.u32 %v1996, 2147483648
  %v2000 = vmul.f32 %v1999, 1.442695
  %v2001 = vpow.pop %v2000
  %v2002 = vadd.f32 %v2001, 1.0
  %v2003 = vrcp.pop %v2002
  %v2004 = vmul.f32 1.0, %v2003
  %v2005 = vtanh.pop %v1996
  %v2006 = vmul.f32 %v2004, %v1702
  %2008 = vrot.lane.b32.xlu0 %v2005, 32
  %v2009 = vpop.permute.xlu0 %2008
  %v2011 = vmul.f32 %v2004, %v2009
  %2013 = vrot.lane.b32.xlu0 %v2011, 32
  %v2014 = vpop.permute.xlu0 %2013
  %v2016 = vadd.f32 %v2006, %v2014
  %v2017 = vtanh.pop %v2016
  %2019 = vrot.lane.b32.xlu0 %v2017, 32
  %v2020 = vpop.permute.xlu0 %2019
  %v2022 = vmul.f32 %v2004, %v2020
  %2024 = vrot.lane.b32.xlu0 %v2022, 64
  %v2025 = vpop.permute.xlu0 %2024
  %v2026 = vsel %vm251, %v2025, 0
  %2028 = vmatprep.subr.mxu0 0.0
  %2029 = vmatpush1.msra.mxu0 %v61
  %2030 = vmatprep.subr.mxu0 0.0
  %2031 = vmatpush1.msra.mxu0 %v62
  %2032 = vmatprep.subr.mxu0 0.0
  %2033 = vmatpush1.msra.mxu0 %v63
  %2034 = vmatprep.subr.mxu0 0.0
  %2035 = vmatpush1.msra.mxu0 %v64
  %2036 = vmatprep.subr.mxu0 0.0
  %2037 = vmatpush1.msra.mxu0 0.0
  %2038 = vmatprep.subr.mxu0 0.0
  %2039 = vmatpush1.msra.mxu0 0.0
  %2040 = vmatprep.subr.mxu0 0.0
  %2041 = vmatpush1.msra.mxu0 0.0
  %2042 = vmatprep.subr.mxu0 0.0
  %2043 = vmatpush1.msra.mxu0 0.0
  %2044 = vmatprep.subr.mxu0 0.0
  %2045 = vmatpush1.msra.mxu0 0.0
  %2046 = vmatprep.subr.mxu0 0.0
  %2047 = vmatpush1.msra.mxu0 0.0
  %2048 = vmatprep.subr.mxu0 0.0
  %2049 = vmatpush1.msra.mxu0 0.0
  %2050 = vmatprep.subr.mxu0 0.0
  %2051 = vmatpush1.msra.mxu0 0.0
  %2052 = vmatprep.subr.mxu0 0.0
  %2053 = vmatpush1.msra.mxu0 0.0
  %2054 = vmatprep.subr.mxu0 0.0
  %2055 = vmatpush1.msra.mxu0 0.0
  %2056 = vmatprep.subr.mxu0 0.0
  %2057 = vmatpush1.msra.mxu0 0.0
  %2058 = vmatprep.subr.mxu0 0.0
  %2059 = vmatpush1.msra.mxu0 0.0
  %2060 = vmatprep.subr.mxu0 0.0
  %2061 = vmatpush1.msra.mxu0 0.0
  %2062 = vmatprep.subr.mxu0 0.0
  %2063 = vmatpush1.msra.mxu0 0.0
  %2064 = vmatprep.subr.mxu0 0.0
  %2065 = vmatpush1.msra.mxu0 0.0
  %2066 = vmatprep.subr.mxu0 0.0
  %2067 = vmatpush1.msra.mxu0 0.0
  %2068 = vmatprep.subr.mxu0 0.0
  %2069 = vmatpush1.msra.mxu0 0.0
  %2070 = vmatprep.subr.mxu0 0.0
  %2071 = vmatpush1.msra.mxu0 0.0
  %2072 = vmatprep.subr.mxu0 0.0
  %2073 = vmatpush1.msra.mxu0 0.0
  %2074 = vmatprep.subr.mxu0 0.0
  %2075 = vmatpush1.msra.mxu0 0.0
  %2076 = vmatprep.subr.mxu0 0.0
  %2077 = vmatpush1.msra.mxu0 0.0
  %2078 = vmatprep.subr.mxu0 0.0
  %2079 = vmatpush1.msra.mxu0 0.0
  %2080 = vmatprep.subr.mxu0 0.0
  %2081 = vmatpush1.msra.mxu0 0.0
  %2082 = vmatprep.subr.mxu0 0.0
  %2083 = vmatpush1.msra.mxu0 0.0
  %2084 = vmatprep.subr.mxu0 0.0
  %2085 = vmatpush1.msra.mxu0 0.0
  %2086 = vmatprep.subr.mxu0 0.0
  %2087 = vmatpush1.msra.mxu0 0.0
  %2088 = vmatprep.subr.mxu0 0.0
  %2089 = vmatpush1.msra.mxu0 0.0
  %2090 = vmatprep.subr.mxu0 0.0
  %2091 = vmatpush1.msra.mxu0 0.0
  %2092 = vmatprep.mubr.f32.mxu0 0.0
  %2093 = vmatmul.mubr.f32.gmra.mrb[0].mxu0 %v2026
  %v2094 = vpop.f32.mrb[0].mxu0
  %v2095 = vadd.f32 %v77, %v2094
  %v2096 = vpop.f32.mrb[0].mxu0
  %2097 = vdwg.mxu0
  %v2098 = vtanh.pop %v2095
  %v2099 = vmul.f32 %v2098, %v84
  %v2100 = vsel %vm112, %v2099, 0.0
  %2101 = vadd.xlane.f32.xlu0 %v2100
  %v2102 = vpop.xlane.xlu0 %2101
  %v2103 = vadd.f32 %v2102, %v91
  %vm2104 = vcmp.eq.s32.totalorder %v94, 5
  %2106 = vset.pattern.permute.xlu0 0
  %2107 = vperm.xlu0 %2106, %v2103
  %v2108 = vpop.permute.xlu0 %2107
  %v2110 = vsel %vm2104, %v2108, %v1796
  %v2111 = vmax.f32 %v1797, %v2103
  %v2112 = vsub.f32 %v1797, %v2111
  %v2113 = vmul.f32 %v2112, 1.442695
  %v2114 = vpow.pop %v2113
  %v2115 = vsub.f32 %v2103, %v2111
  %v2116 = vmul.f32 %v2115, 1.442695
  %v2117 = vpow.pop %v2116
  %v2118 = vmul.f32 %v2114, %v1805
  %v2119 = vadd.f32 %v2118, %v2117
  %2121 = vset.pattern.permute.xlu0 0
  %2122 = vperm.xlu0 %2121, %v2114
  %v2123 = vpop.permute.xlu0 %2122
  %v2125 = vmul.f32 %v2123, %v1818
  %2127 = vset.pattern.permute.xlu0 0
  %2128 = vperm.xlu0 %2127, %v2117
  %v2129 = vpop.permute.xlu0 %2128
  %v2131 = vmul.f32 %v2129, %v2022
  %v2132 = vadd.f32 %v2125, %v2131
  %s2133 = scalar_lea.vmem [#allocation2], 48
  %v2134 = vld [vmem:[%s2133] sm:$0xff]
  %v2135 = vsel %vm251, %v1920, 0
  %2137 = vmatprep.subr.mxu0 0.0
  %2138 = vmatpush1.msra.mxu0 %v49
  %2139 = vmatprep.subr.mxu0 0.0
  %2140 = vmatpush1.msra.mxu0 %v50
  %2141 = vmatprep.subr.mxu0 0.0
  %2142 = vmatpush1.msra.mxu0 %v51
  %2143 = vmatprep.subr.mxu0 0.0
  %2144 = vmatpush1.msra.mxu0 %v52
  %2145 = vmatprep.subr.mxu0 0.0
  %2146 = vmatpush1.msra.mxu0 0.0
  %2147 = vmatprep.subr.mxu0 0.0
  %2148 = vmatpush1.msra.mxu0 0.0
  %2149 = vmatprep.subr.mxu0 0.0
  %2150 = vmatpush1.msra.mxu0 0.0
  %2151 = vmatprep.subr.mxu0 0.0
  %2152 = vmatpush1.msra.mxu0 0.0
  %2153 = vmatprep.subr.mxu0 0.0
  %2154 = vmatpush1.msra.mxu0 0.0
  %2155 = vmatprep.subr.mxu0 0.0
  %2156 = vmatpush1.msra.mxu0 0.0
  %2157 = vmatprep.subr.mxu0 0.0
  %2158 = vmatpush1.msra.mxu0 0.0
  %2159 = vmatprep.subr.mxu0 0.0
  %2160 = vmatpush1.msra.mxu0 0.0
  %2161 = vmatprep.subr.mxu0 0.0
  %2162 = vmatpush1.msra.mxu0 0.0
  %2163 = vmatprep.subr.mxu0 0.0
  %2164 = vmatpush1.msra.mxu0 0.0
  %2165 = vmatprep.subr.mxu0 0.0
  %2166 = vmatpush1.msra.mxu0 0.0
  %2167 = vmatprep.subr.mxu0 0.0
  %2168 = vmatpush1.msra.mxu0 0.0
  %2169 = vmatprep.subr.mxu0 0.0
  %2170 = vmatpush1.msra.mxu0 0.0
  %2171 = vmatprep.subr.mxu0 0.0
  %2172 = vmatpush1.msra.mxu0 0.0
  %2173 = vmatprep.subr.mxu0 0.0
  %2174 = vmatpush1.msra.mxu0 0.0
  %2175 = vmatprep.subr.mxu0 0.0
  %2176 = vmatpush1.msra.mxu0 0.0
  %2177 = vmatprep.subr.mxu0 0.0
  %2178 = vmatpush1.msra.mxu0 0.0
  %2179 = vmatprep.subr.mxu0 0.0
  %2180 = vmatpush1.msra.mxu0 0.0
  %2181 = vmatprep.subr.mxu0 0.0
  %2182 = vmatpush1.msra.mxu0 0.0
  %2183 = vmatprep.subr.mxu0 0.0
  %2184 = vmatpush1.msra.mxu0 0.0
  %2185 = vmatprep.subr.mxu0 0.0
  %2186 = vmatpush1.msra.mxu0 0.0
  %2187 = vmatprep.subr.mxu0 0.0
  %2188 = vmatpush1.msra.mxu0 0.0
  %2189 = vmatprep.subr.mxu0 0.0
  %2190 = vmatpush1.msra.mxu0 0.0
  %2191 = vmatprep.subr.mxu0 0.0
  %2192 = vmatpush1.msra.mxu0 0.0
  %2193 = vmatprep.subr.mxu0 0.0
  %2194 = vmatpush1.msra.mxu0 0.0
  %2195 = vmatprep.subr.mxu0 0.0
  %2196 = vmatpush1.msra.mxu0 0.0
  %2197 = vmatprep.subr.mxu0 0.0
  %2198 = vmatpush1.msra.mxu0 0.0
  %2199 = vmatprep.subr.mxu0 0.0
  %2200 = vmatpush1.msra.mxu0 0.0
  %2201 = vmatprep.mubr.f32.mxu0 0.0
  %2202 = vmatmul.mubr.f32.gmra.mrb[0].mxu0 %v2135
  %v2203 = vpop.f32.mrb[0].mxu0
  %v2204 = vadd.f32 0.0, %v2203
  %v2205 = vpop.f32.mrb[0].mxu0
  %2206 = vdwg.mxu0
  %v2207 = vadd.f32 %v2134, %v2204
  %v2208 = vxor.u32 %v2207, 2147483648
  %v2209 = vmul.f32 %v2208, 1.442695
  %v2210 = vpow.pop %v2209
  %v2211 = vadd.f32 %v2210, 1.0
  %v2212 = vrcp.pop %v2211
  %v2213 = vmul.f32 1.0, %v2212
  %v2214 = vtanh.pop %v2207
  %v2215 = vmul.f32 %v2213, %v1911
  %2217 = vrot.lane.b32.xlu0 %v2214, 32
  %v2218 = vpop.permute.xlu0 %2217
  %v2220 = vmul.f32 %v2213, %v2218
  %2222 = vrot.lane.b32.xlu0 %v2220, 32
  %v2223 = vpop.permute.xlu0 %2222
  %v2225 = vadd.f32 %v2215, %v2223
  %v2226 = vtanh.pop %v2225
  %2228 = vrot.lane.b32.xlu0 %v2226, 32
  %v2229 = vpop.permute.xlu0 %2228
  %v2231 = vmul.f32 %v2213, %v2229
  %2233 = vrot.lane.b32.xlu0 %v2231, 64
  %v2234 = vpop.permute.xlu0 %2233
  %2236 = vrot.lane.b32.xlu0 %v2022, 96
  %v2237 = vpop.permute.xlu0 %2236
  %v2239 = vsel %vm251, %v2234, %v2237
  %v2241 = vsel %vm355, %v2239, 0
  %2243 = vmatprep.subr.mxu0 0.0
  %2244 = vmatpush1.msra.mxu0 %v53
  %2245 = vmatprep.subr.mxu0 0.0
  %2246 = vmatpush1.msra.mxu0 %v54
  %2247 = vmatprep.subr.mxu0 0.0
  %2248 = vmatpush1.msra.mxu0 %v55
  %2249 = vmatprep.subr.mxu0 0.0
  %2250 = vmatpush1.msra.mxu0 %v56
  %2251 = vmatprep.subr.mxu0 0.0
  %2252 = vmatpush1.msra.mxu0 %v57
  %2253 = vmatprep.subr.mxu0 0.0
  %2254 = vmatpush1.msra.mxu0 %v58
  %2255 = vmatprep.subr.mxu0 0.0
  %2256 = vmatpush1.msra.mxu0 %v59
  %2257 = vmatprep.subr.mxu0 0.0
  %2258 = vmatpush1.msra.mxu0 %v60
  %2259 = vmatprep.subr.mxu0 0.0
  %2260 = vmatpush1.msra.mxu0 0.0
  %2261 = vmatprep.subr.mxu0 0.0
  %2262 = vmatpush1.msra.mxu0 0.0
  %2263 = vmatprep.subr.mxu0 0.0
  %2264 = vmatpush1.msra.mxu0 0.0
  %2265 = vmatprep.subr.mxu0 0.0
  %2266 = vmatpush1.msra.mxu0 0.0
  %2267 = vmatprep.subr.mxu0 0.0
  %2268 = vmatpush1.msra.mxu0 0.0
  %2269 = vmatprep.subr.mxu0 0.0
  %2270 = vmatpush1.msra.mxu0 0.0
  %2271 = vmatprep.subr.mxu0 0.0
  %2272 = vmatpush1.msra.mxu0 0.0
  %2273 = vmatprep.subr.mxu0 0.0
  %2274 = vmatpush1.msra.mxu0 0.0
  %2275 = vmatprep.subr.mxu0 0.0
  %2276 = vmatpush1.msra.mxu0 0.0
  %2277 = vmatprep.subr.mxu0 0.0
  %2278 = vmatpush1.msra.mxu0 0.0
  %2279 = vmatprep.subr.mxu0 0.0
  %2280 = vmatpush1.msra.mxu0 0.0
  %2281 = vmatprep.subr.mxu0 0.0
  %2282 = vmatpush1.msra.mxu0 0.0
  %2283 = vmatprep.subr.mxu0 0.0
  %2284 = vmatpush1.msra.mxu0 0.0
  %2285 = vmatprep.subr.mxu0 0.0
  %2286 = vmatpush1.msra.mxu0 0.0
  %2287 = vmatprep.subr.mxu0 0.0
  %2288 = vmatpush1.msra.mxu0 0.0
  %2289 = vmatprep.subr.mxu0 0.0
  %2290 = vmatpush1.msra.mxu0 0.0
  %2291 = vmatprep.subr.mxu0 0.0
  %2292 = vmatpush1.msra.mxu0 0.0
  %2293 = vmatprep.subr.mxu0 0.0
  %2294 = vmatpush1.msra.mxu0 0.0
  %2295 = vmatprep.subr.mxu0 0.0
  %2296 = vmatpush1.msra.mxu0 0.0
  %2297 = vmatprep.subr.mxu0 0.0
  %2298 = vmatpush1.msra.mxu0 0.0
  %2299 = vmatprep.subr.mxu0 0.0
  %2300 = vmatpush1.msra.mxu0 0.0
  %2301 = vmatprep.subr.mxu0 0.0
  %2302 = vmatpush1.msra.mxu0 0.0
  %2303 = vmatprep.subr.mxu0 0.0
  %2304 = vmatpush1.msra.mxu0 0.0
  %2305 = vmatprep.subr.mxu0 0.0
  %2306 = vmatpush1.msra.mxu0 0.0
  %2307 = vmatprep.mubr.f32.mxu0 0.0
  %2308 = vmatmul.mubr.f32.gmra.mrb[0].mxu0 %v2241
  %v2309 = vpop.f32.mrb[0].mxu0
  %v2310 = vadd.f32 %v70, %v2309
  %v2311 = vpop.f32.mrb[0].mxu0
  %2312 = vdwg.mxu0
  %v2313 = vxor.u32 %v2310, 2147483648
  %v2314 = vmul.f32 %v2313, 1.442695
  %v2315 = vpow.pop %v2314
  %v2316 = vadd.f32 %v2315, 1.0
  %v2317 = vrcp.pop %v2316
  %v2318 = vmul.f32 1.0, %v2317
  %v2319 = vtanh.pop %v2310
  %v2320 = vmul.f32 %v2318, %v2016
  %2322 = vrot.lane.b32.xlu0 %v2319, 32
  %v2323 = vpop.permute.xlu0 %2322
  %v2325 = vmul.f32 %v2318, %v2323
  %2327 = vrot.lane.b32.xlu0 %v2325, 32
  %v2328 = vpop.permute.xlu0 %2327
  %v2330 = vadd.f32 %v2320, %v2328
  %v2331 = vtanh.pop %v2330
  %2333 = vrot.lane.b32.xlu0 %v2331, 32
  %v2334 = vpop.permute.xlu0 %2333
  %v2336 = vmul.f32 %v2318, %v2334
  %2338 = vrot.lane.b32.xlu0 %v2336, 64
  %v2339 = vpop.permute.xlu0 %2338
  %v2340 = vsel %vm251, %v2339, 0
  %2342 = vmatprep.subr.mxu0 0.0
  %2343 = vmatpush1.msra.mxu0 %v61
  %2344 = vmatprep.subr.mxu0 0.0
  %2345 = vmatpush1.msra.mxu0 %v62
  %2346 = vmatprep.subr.mxu0 0.0
  %2347 = vmatpush1.msra.mxu0 %v63
  %2348 = vmatprep.subr.mxu0 0.0
  %2349 = vmatpush1.msra.mxu0 %v64
  %2350 = vmatprep.subr.mxu0 0.0
  %2351 = vmatpush1.msra.mxu0 0.0
  %2352 = vmatprep.subr.mxu0 0.0
  %2353 = vmatpush1.msra.mxu0 0.0
  %2354 = vmatprep.subr.mxu0 0.0
  %2355 = vmatpush1.msra.mxu0 0.0
  %2356 = vmatprep.subr.mxu0 0.0
  %2357 = vmatpush1.msra.mxu0 0.0
  %2358 = vmatprep.subr.mxu0 0.0
  %2359 = vmatpush1.msra.mxu0 0.0
  %2360 = vmatprep.subr.mxu0 0.0
  %2361 = vmatpush1.msra.mxu0 0.0
  %2362 = vmatprep.subr.mxu0 0.0
  %2363 = vmatpush1.msra.mxu0 0.0
  %2364 = vmatprep.subr.mxu0 0.0
  %2365 = vmatpush1.msra.mxu0 0.0
  %2366 = vmatprep.subr.mxu0 0.0
  %2367 = vmatpush1.msra.mxu0 0.0
  %2368 = vmatprep.subr.mxu0 0.0
  %2369 = vmatpush1.msra.mxu0 0.0
  %2370 = vmatprep.subr.mxu0 0.0
  %2371 = vmatpush1.msra.mxu0 0.0
  %2372 = vmatprep.subr.mxu0 0.0
  %2373 = vmatpush1.msra.mxu0 0.0
  %2374 = vmatprep.subr.mxu0 0.0
  %2375 = vmatpush1.msra.mxu0 0.0
  %2376 = vmatprep.subr.mxu0 0.0
  %2377 = vmatpush1.msra.mxu0 0.0
  %2378 = vmatprep.subr.mxu0 0.0
  %2379 = vmatpush1.msra.mxu0 0.0
  %2380 = vmatprep.subr.mxu0 0.0
  %2381 = vmatpush1.msra.mxu0 0.0
  %2382 = vmatprep.subr.mxu0 0.0
  %2383 = vmatpush1.msra.mxu0 0.0
  %2384 = vmatprep.subr.mxu0 0.0
  %2385 = vmatpush1.msra.mxu0 0.0
  %2386 = vmatprep.subr.mxu0 0.0
  %2387 = vmatpush1.msra.mxu0 0.0
  %2388 = vmatprep.subr.mxu0 0.0
  %2389 = vmatpush1.msra.mxu0 0.0
  %2390 = vmatprep.subr.mxu0 0.0
  %2391 = vmatpush1.msra.mxu0 0.0
  %2392 = vmatprep.subr.mxu0 0.0
  %2393 = vmatpush1.msra.mxu0 0.0
  %2394 = vmatprep.subr.mxu0 0.0
  %2395 = vmatpush1.msra.mxu0 0.0
  %2396 = vmatprep.subr.mxu0 0.0
  %2397 = vmatpush1.msra.mxu0 0.0
  %2398 = vmatprep.subr.mxu0 0.0
  %2399 = vmatpush1.msra.mxu0 0.0
  %2400 = vmatprep.subr.mxu0 0.0
  %2401 = vmatpush1.msra.mxu0 0.0
  %2402 = vmatprep.subr.mxu0 0.0
  %2403 = vmatpush1.msra.mxu0 0.0
  %2404 = vmatprep.subr.mxu0 0.0
  %2405 = vmatpush1.msra.mxu0 0.0
  %2406 = vmatprep.mubr.f32.mxu0 0.0
  %2407 = vmatmul.mubr.f32.gmra.mrb[0].mxu0 %v2340
  %v2408 = vpop.f32.mrb[0].mxu0
  %v2409 = vadd.f32 %v77, %v2408
  %v2410 = vpop.f32.mrb[0].mxu0
  %2411 = vdwg.mxu0
  %v2412 = vtanh.pop %v2409
  %v2413 = vmul.f32 %v2412, %v84
  %v2414 = vsel %vm112, %v2413, 0.0
  %2415 = vadd.xlane.f32.xlu0 %v2414
  %v2416 = vpop.xlane.xlu0 %2415
  %v2417 = vadd.f32 %v2416, %v91
  %vm2418 = vcmp.eq.s32.totalorder %v94, 6
  %2420 = vset.pattern.permute.xlu0 0
  %2421 = vperm.xlu0 %2420, %v2417
  %v2422 = vpop.permute.xlu0 %2421
  %v2424 = vsel %vm2418, %v2422, %v2110
  %v2425 = vmax.f32 %v2111, %v2417
  %v2426 = vsub.f32 %v2111, %v2425
  %v2427 = vmul.f32 %v2426, 1.442695
  %v2428 = vpow.pop %v2427
  %v2429 = vsub.f32 %v2417, %v2425
  %v2430 = vmul.f32 %v2429, 1.442695
  %v2431 = vpow.pop %v2430
  %v2432 = vmul.f32 %v2428, %v2119
  %v2433 = vadd.f32 %v2432, %v2431
  %2435 = vset.pattern.permute.xlu0 0
  %2436 = vperm.xlu0 %2435, %v2428
  %v2437 = vpop.permute.xlu0 %2436
  %v2439 = vmul.f32 %v2437, %v2132
  %2441 = vset.pattern.permute.xlu0 0
  %2442 = vperm.xlu0 %2441, %v2431
  %v2443 = vpop.permute.xlu0 %2442
  %v2445 = vmul.f32 %v2443, %v2336
  %v2446 = vadd.f32 %v2439, %v2445
  %s2447 = scalar_lea.vmem [#allocation2], 56
  %v2448 = vld [vmem:[%s2447] sm:$0xff]
  %v2449 = vsel %vm251, %v2234, 0
  %2451 = vmatprep.subr.mxu0 0.0
  %2452 = vmatpush1.msra.mxu0 %v49
  %2453 = vmatprep.subr.mxu0 0.0
  %2454 = vmatpush1.msra.mxu0 %v50
  %2455 = vmatprep.subr.mxu0 0.0
  %2456 = vmatpush1.msra.mxu0 %v51
  %2457 = vmatprep.subr.mxu0 0.0
  %2458 = vmatpush1.msra.mxu0 %v52
  %2459 = vmatprep.subr.mxu0 0.0
  %2460 = vmatpush1.msra.mxu0 0.0
  %2461 = vmatprep.subr.mxu0 0.0
  %2462 = vmatpush1.msra.mxu0 0.0
  %2463 = vmatprep.subr.mxu0 0.0
  %2464 = vmatpush1.msra.mxu0 0.0
  %2465 = vmatprep.subr.mxu0 0.0
  %2466 = vmatpush1.msra.mxu0 0.0
  %2467 = vmatprep.subr.mxu0 0.0
  %2468 = vmatpush1.msra.mxu0 0.0
  %2469 = vmatprep.subr.mxu0 0.0
  %2470 = vmatpush1.msra.mxu0 0.0
  %2471 = vmatprep.subr.mxu0 0.0
  %2472 = vmatpush1.msra.mxu0 0.0
  %2473 = vmatprep.subr.mxu0 0.0
  %2474 = vmatpush1.msra.mxu0 0.0
  %2475 = vmatprep.subr.mxu0 0.0
  %2476 = vmatpush1.msra.mxu0 0.0
  %2477 = vmatprep.subr.mxu0 0.0
  %2478 = vmatpush1.msra.mxu0 0.0
  %2479 = vmatprep.subr.mxu0 0.0
  %2480 = vmatpush1.msra.mxu0 0.0
  %2481 = vmatprep.subr.mxu0 0.0
  %2482 = vmatpush1.msra.mxu0 0.0
  %2483 = vmatprep.subr.mxu0 0.0
  %2484 = vmatpush1.msra.mxu0 0.0
  %2485 = vmatprep.subr.mxu0 0.0
  %2486 = vmatpush1.msra.mxu0 0.0
  %2487 = vmatprep.subr.mxu0 0.0
  %2488 = vmatpush1.msra.mxu0 0.0
  %2489 = vmatprep.subr.mxu0 0.0
  %2490 = vmatpush1.msra.mxu0 0.0
  %2491 = vmatprep.subr.mxu0 0.0
  %2492 = vmatpush1.msra.mxu0 0.0
  %2493 = vmatprep.subr.mxu0 0.0
  %2494 = vmatpush1.msra.mxu0 0.0
  %2495 = vmatprep.subr.mxu0 0.0
  %2496 = vmatpush1.msra.mxu0 0.0
  %2497 = vmatprep.subr.mxu0 0.0
  %2498 = vmatpush1.msra.mxu0 0.0
  %2499 = vmatprep.subr.mxu0 0.0
  %2500 = vmatpush1.msra.mxu0 0.0
  %2501 = vmatprep.subr.mxu0 0.0
  %2502 = vmatpush1.msra.mxu0 0.0
  %2503 = vmatprep.subr.mxu0 0.0
  %2504 = vmatpush1.msra.mxu0 0.0
  %2505 = vmatprep.subr.mxu0 0.0
  %2506 = vmatpush1.msra.mxu0 0.0
  %2507 = vmatprep.subr.mxu0 0.0
  %2508 = vmatpush1.msra.mxu0 0.0
  %2509 = vmatprep.subr.mxu0 0.0
  %2510 = vmatpush1.msra.mxu0 0.0
  %2511 = vmatprep.subr.mxu0 0.0
  %2512 = vmatpush1.msra.mxu0 0.0
  %2513 = vmatprep.subr.mxu0 0.0
  %2514 = vmatpush1.msra.mxu0 0.0
  %2515 = vmatprep.mubr.f32.mxu0 0.0
  %2516 = vmatmul.mubr.f32.gmra.mrb[0].mxu0 %v2449
  %v2517 = vpop.f32.mrb[0].mxu0
  %v2518 = vadd.f32 0.0, %v2517
  %v2519 = vpop.f32.mrb[0].mxu0
  %2520 = vdwg.mxu0
  %v2521 = vadd.f32 %v2448, %v2518
  %v2522 = vxor.u32 %v2521, 2147483648
  %v2523 = vmul.f32 %v2522, 1.442695
  %v2524 = vpow.pop %v2523
  %v2525 = vadd.f32 %v2524, 1.0
  %v2526 = vrcp.pop %v2525
  %v2527 = vmul.f32 1.0, %v2526
  %v2528 = vtanh.pop %v2521
  %v2529 = vmul.f32 %v2527, %v2225
  %2531 = vrot.lane.b32.xlu0 %v2528, 32
  %v2532 = vpop.permute.xlu0 %2531
  %v2534 = vmul.f32 %v2527, %v2532
  %2536 = vrot.lane.b32.xlu0 %v2534, 32
  %v2537 = vpop.permute.xlu0 %2536
  %v2539 = vadd.f32 %v2529, %v2537
  %v2540 = vtanh.pop %v2539
  %2542 = vrot.lane.b32.xlu0 %v2540, 32
  %v2543 = vpop.permute.xlu0 %2542
  %v2545 = vmul.f32 %v2527, %v2543
  %2547 = vrot.lane.b32.xlu0 %v2545, 64
  %v2548 = vpop.permute.xlu0 %2547
  %2550 = vrot.lane.b32.xlu0 %v2336, 96
  %v2551 = vpop.permute.xlu0 %2550
  %v2553 = vsel %vm251, %v2548, %v2551
  %v2555 = vsel %vm355, %v2553, 0
  %2557 = vmatprep.subr.mxu0 0.0
  %2558 = vmatpush1.msra.mxu0 %v53
  %2559 = vmatprep.subr.mxu0 0.0
  %2560 = vmatpush1.msra.mxu0 %v54
  %2561 = vmatprep.subr.mxu0 0.0
  %2562 = vmatpush1.msra.mxu0 %v55
  %2563 = vmatprep.subr.mxu0 0.0
  %2564 = vmatpush1.msra.mxu0 %v56
  %2565 = vmatprep.subr.mxu0 0.0
  %2566 = vmatpush1.msra.mxu0 %v57
  %2567 = vmatprep.subr.mxu0 0.0
  %2568 = vmatpush1.msra.mxu0 %v58
  %2569 = vmatprep.subr.mxu0 0.0
  %2570 = vmatpush1.msra.mxu0 %v59
  %2571 = vmatprep.subr.mxu0 0.0
  %2572 = vmatpush1.msra.mxu0 %v60
  %2573 = vmatprep.subr.mxu0 0.0
  %2574 = vmatpush1.msra.mxu0 0.0
  %2575 = vmatprep.subr.mxu0 0.0
  %2576 = vmatpush1.msra.mxu0 0.0
  %2577 = vmatprep.subr.mxu0 0.0
  %2578 = vmatpush1.msra.mxu0 0.0
  %2579 = vmatprep.subr.mxu0 0.0
  %2580 = vmatpush1.msra.mxu0 0.0
  %2581 = vmatprep.subr.mxu0 0.0
  %2582 = vmatpush1.msra.mxu0 0.0
  %2583 = vmatprep.subr.mxu0 0.0
  %2584 = vmatpush1.msra.mxu0 0.0
  %2585 = vmatprep.subr.mxu0 0.0
  %2586 = vmatpush1.msra.mxu0 0.0
  %2587 = vmatprep.subr.mxu0 0.0
  %2588 = vmatpush1.msra.mxu0 0.0
  %2589 = vmatprep.subr.mxu0 0.0
  %2590 = vmatpush1.msra.mxu0 0.0
  %2591 = vmatprep.subr.mxu0 0.0
  %2592 = vmatpush1.msra.mxu0 0.0
  %2593 = vmatprep.subr.mxu0 0.0
  %2594 = vmatpush1.msra.mxu0 0.0
  %2595 = vmatprep.subr.mxu0 0.0
  %2596 = vmatpush1.msra.mxu0 0.0
  %2597 = vmatprep.subr.mxu0 0.0
  %2598 = vmatpush1.msra.mxu0 0.0
  %2599 = vmatprep.subr.mxu0 0.0
  %2600 = vmatpush1.msra.mxu0 0.0
  %2601 = vmatprep.subr.mxu0 0.0
  %2602 = vmatpush1.msra.mxu0 0.0
  %2603 = vmatprep.subr.mxu0 0.0
  %2604 = vmatpush1.msra.mxu0 0.0
  %2605 = vmatprep.subr.mxu0 0.0
  %2606 = vmatpush1.msra.mxu0 0.0
  %2607 = vmatprep.subr.mxu0 0.0
  %2608 = vmatpush1.msra.mxu0 0.0
  %2609 = vmatprep.subr.mxu0 0.0
  %2610 = vmatpush1.msra.mxu0 0.0
  %2611 = vmatprep.subr.mxu0 0.0
  %2612 = vmatpush1.msra.mxu0 0.0
  %2613 = vmatprep.subr.mxu0 0.0
  %2614 = vmatpush1.msra.mxu0 0.0
  %2615 = vmatprep.subr.mxu0 0.0
  %2616 = vmatpush1.msra.mxu0 0.0
  %2617 = vmatprep.subr.mxu0 0.0
  %2618 = vmatpush1.msra.mxu0 0.0
  %2619 = vmatprep.subr.mxu0 0.0
  %2620 = vmatpush1.msra.mxu0 0.0
  %2621 = vmatprep.mubr.f32.mxu0 0.0
  %2622 = vmatmul.mubr.f32.gmra.mrb[0].mxu0 %v2555
  %v2623 = vpop.f32.mrb[0].mxu0
  %v2624 = vadd.f32 %v70, %v2623
  %v2625 = vpop.f32.mrb[0].mxu0
  %2626 = vdwg.mxu0
  %v2627 = vxor.u32 %v2624, 2147483648
  %v2628 = vmul.f32 %v2627, 1.442695
  %v2629 = vpow.pop %v2628
  %v2630 = vadd.f32 %v2629, 1.0
  %v2631 = vrcp.pop %v2630
  %v2632 = vmul.f32 1.0, %v2631
  %v2633 = vtanh.pop %v2624
  %v2634 = vmul.f32 %v2632, %v2330
  %2636 = vrot.lane.b32.xlu0 %v2633, 32
  %v2637 = vpop.permute.xlu0 %2636
  %v2639 = vmul.f32 %v2632, %v2637
  %2641 = vrot.lane.b32.xlu0 %v2639, 32
  %v2642 = vpop.permute.xlu0 %2641
  %v2644 = vadd.f32 %v2634, %v2642
  %v2645 = vtanh.pop %v2644
  %2647 = vrot.lane.b32.xlu0 %v2645, 32
  %v2648 = vpop.permute.xlu0 %2647
  %v2650 = vmul.f32 %v2632, %v2648
  %2652 = vrot.lane.b32.xlu0 %v2650, 64
  %v2653 = vpop.permute.xlu0 %2652
  %v2654 = vsel %vm251, %v2653, 0
  %2656 = vmatprep.subr.mxu0 0.0
  %2657 = vmatpush1.msra.mxu0 %v61
  %2658 = vmatprep.subr.mxu0 0.0
  %2659 = vmatpush1.msra.mxu0 %v62
  %2660 = vmatprep.subr.mxu0 0.0
  %2661 = vmatpush1.msra.mxu0 %v63
  %2662 = vmatprep.subr.mxu0 0.0
  %2663 = vmatpush1.msra.mxu0 %v64
  %2664 = vmatprep.subr.mxu0 0.0
  %2665 = vmatpush1.msra.mxu0 0.0
  %2666 = vmatprep.subr.mxu0 0.0
  %2667 = vmatpush1.msra.mxu0 0.0
  %2668 = vmatprep.subr.mxu0 0.0
  %2669 = vmatpush1.msra.mxu0 0.0
  %2670 = vmatprep.subr.mxu0 0.0
  %2671 = vmatpush1.msra.mxu0 0.0
  %2672 = vmatprep.subr.mxu0 0.0
  %2673 = vmatpush1.msra.mxu0 0.0
  %2674 = vmatprep.subr.mxu0 0.0
  %2675 = vmatpush1.msra.mxu0 0.0
  %2676 = vmatprep.subr.mxu0 0.0
  %2677 = vmatpush1.msra.mxu0 0.0
  %2678 = vmatprep.subr.mxu0 0.0
  %2679 = vmatpush1.msra.mxu0 0.0
  %2680 = vmatprep.subr.mxu0 0.0
  %2681 = vmatpush1.msra.mxu0 0.0
  %2682 = vmatprep.subr.mxu0 0.0
  %2683 = vmatpush1.msra.mxu0 0.0
  %2684 = vmatprep.subr.mxu0 0.0
  %2685 = vmatpush1.msra.mxu0 0.0
  %2686 = vmatprep.subr.mxu0 0.0
  %2687 = vmatpush1.msra.mxu0 0.0
  %2688 = vmatprep.subr.mxu0 0.0
  %2689 = vmatpush1.msra.mxu0 0.0
  %2690 = vmatprep.subr.mxu0 0.0
  %2691 = vmatpush1.msra.mxu0 0.0
  %2692 = vmatprep.subr.mxu0 0.0
  %2693 = vmatpush1.msra.mxu0 0.0
  %2694 = vmatprep.subr.mxu0 0.0
  %2695 = vmatpush1.msra.mxu0 0.0
  %2696 = vmatprep.subr.mxu0 0.0
  %2697 = vmatpush1.msra.mxu0 0.0
  %2698 = vmatprep.subr.mxu0 0.0
  %2699 = vmatpush1.msra.mxu0 0.0
  %2700 = vmatprep.subr.mxu0 0.0
  %2701 = vmatpush1.msra.mxu0 0.0
  %2702 = vmatprep.subr.mxu0 0.0
  %2703 = vmatpush1.msra.mxu0 0.0
  %2704 = vmatprep.subr.mxu0 0.0
  %2705 = vmatpush1.msra.mxu0 0.0
  %2706 = vmatprep.subr.mxu0 0.0
  %2707 = vmatpush1.msra.mxu0 0.0
  %2708 = vmatprep.subr.mxu0 0.0
  %2709 = vmatpush1.msra.mxu0 0.0
  %2710 = vmatprep.subr.mxu0 0.0
  %2711 = vmatpush1.msra.mxu0 0.0
  %2712 = vmatprep.subr.mxu0 0.0
  %2713 = vmatpush1.msra.mxu0 0.0
  %2714 = vmatprep.subr.mxu0 0.0
  %2715 = vmatpush1.msra.mxu0 0.0
  %2716 = vmatprep.subr.mxu0 0.0
  %2717 = vmatpush1.msra.mxu0 0.0
  %2718 = vmatprep.subr.mxu0 0.0
  %2719 = vmatpush1.msra.mxu0 0.0
  %2720 = vmatprep.mubr.f32.mxu0 0.0
  %2721 = vmatmul.mubr.f32.gmra.mrb[0].mxu0 %v2654
  %v2722 = vpop.f32.mrb[0].mxu0
  %v2723 = vadd.f32 %v77, %v2722
  %v2724 = vpop.f32.mrb[0].mxu0
  %2725 = vdwg.mxu0
  %v2726 = vtanh.pop %v2723
  %v2727 = vmul.f32 %v2726, %v84
  %v2728 = vsel %vm112, %v2727, 0.0
  %2729 = vadd.xlane.f32.xlu0 %v2728
  %v2730 = vpop.xlane.xlu0 %2729
  %v2731 = vadd.f32 %v2730, %v91
  %vm2732 = vcmp.eq.s32.totalorder %v94, 7
  %2734 = vset.pattern.permute.xlu0 0
  %2735 = vperm.xlu0 %2734, %v2731
  %v2736 = vpop.permute.xlu0 %2735
  %v2738 = vsel %vm2732, %v2736, %v2424
  %v2739 = vmax.f32 %v2425, %v2731
  %v2740 = vsub.f32 %v2425, %v2739
  %v2741 = vmul.f32 %v2740, 1.442695
  %v2742 = vpow.pop %v2741
  %v2743 = vsub.f32 %v2731, %v2739
  %v2744 = vmul.f32 %v2743, 1.442695
  %v2745 = vpow.pop %v2744
  %v2746 = vmul.f32 %v2742, %v2433
  %v2747 = vadd.f32 %v2746, %v2745
  %2749 = vset.pattern.permute.xlu0 0
  %2750 = vperm.xlu0 %2749, %v2742
  %v2751 = vpop.permute.xlu0 %2750
  %v2753 = vmul.f32 %v2751, %v2446
  %2755 = vset.pattern.permute.xlu0 0
  %2756 = vperm.xlu0 %2755, %v2745
  %v2757 = vpop.permute.xlu0 %2756
  %v2759 = vmul.f32 %v2757, %v2650
  %v2760 = vadd.f32 %v2753, %v2759
  %vm2761 = vcmask 64512
  %v2762 = vsel %vm2761, %v2738, -inf
  %2763 = vmax.xlane.f32.xlu0 %v2762
  %v2764 = vpop.xlane.xlu0 %2763
  %v2765 = vsub.f32 %v2738, %v2764
  %v2766 = vmul.f32 %v2765, 1.442695
  %v2767 = vpow.pop %v2766
  %v2768 = vsel %vm2761, %v2767, 0.0
  %2769 = vadd.xlane.f32.xlu0 %v2768
  %v2770 = vpop.xlane.xlu0 %2769
  %v2771 = vrcp.pop %v2770
  %v2772 = vmul.f32 %v2767, %v2771
  %2773 = vst.msk [vmem:[%s14] sm:$0xff] %vm2761, %v2772
  %2775 = vset.pattern.permute.xlu0 0
  %2776 = vperm.xlu0 %2775, %v2747
  %v2777 = vpop.permute.xlu0 %2776
  %v2779 = vrcp.pop %v2777
  %v2780 = vmul.f32 %v2760, %v2779
  %v2781 = vld [vmem:[%s10] sm:$0xff]
  %v2782 = vld [vmem:[%s10 + $0x8] sm:$0xff]
  %v2783 = vld [vmem:[%s10 + $0x10] sm:$0xff]
  %v2784 = vld [vmem:[%s10 + $0x18] sm:$0xff]
  %v2785 = vld [vmem:[%s11] sm:$0x1]
  %v2787 = vlaneseq
  %v2788 = vshrl.u32 %v2787, 7
  %v2789 = vsub.s32 0, %v2788
  %v2790 = vrot.slane %v2785, %v2789
  %2793 = vrot.lane.b32.xlu0 %v2780, 64
  %v2794 = vpop.permute.xlu0 %2793
  %v2795 = vsel %vm251, %v2794, 0
  %2797 = vmatprep.subr.mxu0 0.0
  %2798 = vmatpush1.msra.mxu0 %v2781
  %2799 = vmatprep.subr.mxu0 0.0
  %2800 = vmatpush1.msra.mxu0 %v2782
  %2801 = vmatprep.subr.mxu0 0.0
  %2802 = vmatpush1.msra.mxu0 %v2783
  %2803 = vmatprep.subr.mxu0 0.0
  %2804 = vmatpush1.msra.mxu0 %v2784
  %2805 = vmatprep.subr.mxu0 0.0
  %2806 = vmatpush1.msra.mxu0 0.0
  %2807 = vmatprep.subr.mxu0 0.0
  %2808 = vmatpush1.msra.mxu0 0.0
  %2809 = vmatprep.subr.mxu0 0.0
  %2810 = vmatpush1.msra.mxu0 0.0
  %2811 = vmatprep.subr.mxu0 0.0
  %2812 = vmatpush1.msra.mxu0 0.0
  %2813 = vmatprep.subr.mxu0 0.0
  %2814 = vmatpush1.msra.mxu0 0.0
  %2815 = vmatprep.subr.mxu0 0.0
  %2816 = vmatpush1.msra.mxu0 0.0
  %2817 = vmatprep.subr.mxu0 0.0
  %2818 = vmatpush1.msra.mxu0 0.0
  %2819 = vmatprep.subr.mxu0 0.0
  %2820 = vmatpush1.msra.mxu0 0.0
  %2821 = vmatprep.subr.mxu0 0.0
  %2822 = vmatpush1.msra.mxu0 0.0
  %2823 = vmatprep.subr.mxu0 0.0
  %2824 = vmatpush1.msra.mxu0 0.0
  %2825 = vmatprep.subr.mxu0 0.0
  %2826 = vmatpush1.msra.mxu0 0.0
  %2827 = vmatprep.subr.mxu0 0.0
  %2828 = vmatpush1.msra.mxu0 0.0
  %2829 = vmatprep.subr.mxu0 0.0
  %2830 = vmatpush1.msra.mxu0 0.0
  %2831 = vmatprep.subr.mxu0 0.0
  %2832 = vmatpush1.msra.mxu0 0.0
  %2833 = vmatprep.subr.mxu0 0.0
  %2834 = vmatpush1.msra.mxu0 0.0
  %2835 = vmatprep.subr.mxu0 0.0
  %2836 = vmatpush1.msra.mxu0 0.0
  %2837 = vmatprep.subr.mxu0 0.0
  %2838 = vmatpush1.msra.mxu0 0.0
  %2839 = vmatprep.subr.mxu0 0.0
  %2840 = vmatpush1.msra.mxu0 0.0
  %2841 = vmatprep.subr.mxu0 0.0
  %2842 = vmatpush1.msra.mxu0 0.0
  %2843 = vmatprep.subr.mxu0 0.0
  %2844 = vmatpush1.msra.mxu0 0.0
  %2845 = vmatprep.subr.mxu0 0.0
  %2846 = vmatpush1.msra.mxu0 0.0
  %2847 = vmatprep.subr.mxu0 0.0
  %2848 = vmatpush1.msra.mxu0 0.0
  %2849 = vmatprep.subr.mxu0 0.0
  %2850 = vmatpush1.msra.mxu0 0.0
  %2851 = vmatprep.subr.mxu0 0.0
  %2852 = vmatpush1.msra.mxu0 0.0
  %2853 = vmatprep.subr.mxu0 0.0
  %2854 = vmatpush1.msra.mxu0 0.0
  %2855 = vmatprep.subr.mxu0 0.0
  %2856 = vmatpush1.msra.mxu0 0.0
  %2857 = vmatprep.subr.mxu0 0.0
  %2858 = vmatpush1.msra.mxu0 0.0
  %2859 = vmatprep.subr.mxu0 0.0
  %2860 = vmatpush1.msra.mxu0 0.0
  %2861 = vmatprep.mubr.f32.mxu0 0.0
  %2862 = vmatmul.mubr.f32.gmra.mrb[0].mxu0 %v2795
  %v2863 = vpop.f32.mrb[0].mxu0
  %v2864 = vadd.f32 %v2790, %v2863
  %v2865 = vpop.f32.mrb[0].mxu0
  %2866 = vdwg.mxu0
  %s2867 = sld [smem:[#allocation4]]
  %s2868 = smax.f32 %s2867, 1e-06
  %v2869 = vstv %s2868
  %v2870 = vrcp.pop %v2869
  %s2871 = vtos %v2870
  %v2872 = vstv %s2871
  %v2873 = vmul.f32 %v2864, %v2872
  %vm2874 = vcmask 15360
  %2875 = vst.msk [vmem:[%s13] sm:$0xff] %vm2874, %v2873
  // Predicated region
  $region54: #{multilayer_lstm_attention.1} parent=0 // pred_check
    _
  $region55: #{multilayer_lstm_attention.1} parent=0 // pred_check_branch
    %2877 = sbr.rel (0) target = $region57
  $region56: #{multilayer_lstm_attention.1} parent=0 // pred_region
    _
  $region57: #{multilayer_lstm_attention.1} parent=0 // pred_fallthru
    _
  // Predicated region
  $region58: #{multilayer_lstm_attention.1} parent=0 // pred_check
    _
  $region59: #{multilayer_lstm_attention.1} parent=0 // pred_check_branch
    %2879 = sbr.rel (0) target = $region61
  $region60: #{multilayer_lstm_attention.1} parent=0 // pred_region
    _
  $region61: #{multilayer_lstm_attention.1} parent=0 // pred_fallthru
    _
  // Predicated region
  $region62: #{multilayer_lstm_attention.1} parent=0 // pred_check
    _
  $region63: #{multilayer_lstm_attention.1} parent=0 // pred_check_branch
    %2881 = sbr.rel (0) target = $region65
  $region64: #{multilayer_lstm_attention.1} parent=0 // pred_region
    _
  $region65: #{multilayer_lstm_attention.1} parent=0 // pred_fallthru
    _
  // Predicated region
  $region66: #{multilayer_lstm_attention.1} parent=0 // pred_check
    _
  $region67: #{multilayer_lstm_attention.1} parent=0 // pred_check_branch
    %2883 = sbr.rel (0) target = $region69
  $region68: #{multilayer_lstm_attention.1} parent=0 // pred_region
    _
  $region69: #{multilayer_lstm_attention.1} parent=0 // pred_fallthru
    _

</llo_original>
